<compile_context>
chip_gen: v5e
topology: v5e:2x2
jax: 0.10.0
libtpu: 0.0.40
codegen_flags: <defaults>
</compile_context>

<pallas_src>
import jax
import jax.numpy as jnp
from jax.experimental import pallas as pl
from jax.experimental.pallas import tpu as pltpu


LAYER_DIMS = [100, 1024, 1024, 512, 256, 128, 64, 1]   # 7 Linear layers
PADDED_IN = 128     # first layer contraction dim padded 100 -> 128
PADDED_OUT = 128    # last layer output dim padded 1 -> 128 (lane-dense store)
BIAS_COLS = 1024    # every bias row zero-padded to 1024 lanes


def _mlp_kernel(x_ref,
                w1, w2, w3, w4, w5, w6, w7,
                b_ref,
                out_ref):
    """One batch tile of the whole forward pass.

    Weights (bf16) + packed biases (f32) are VMEM-resident across grid steps
    (constant index maps); only the x / out tiles move per step.
    """
    w_refs = (w1, w2, w3, w4, w5, w6, w7)
    n = len(w_refs)

    h = x_ref[...]                      # (TB, 128) bf16
    for i, w_ref in enumerate(w_refs):
        out_dim = w_ref.shape[1]
        # bf16 x bf16 -> f32 accumulate on the MXU.
        y = jnp.dot(h.astype(jnp.bfloat16), w_ref[...],
                    preferred_element_type=jnp.float32)
        y = y + b_ref[i, :out_dim]      # bias + ReLU stay in f32 (VPU-friendly)
        h = jnp.maximum(y, 0.0) if i < n - 1 else y

    out_ref[...] = h.astype(out_ref.dtype)


def init_params(key):
    """PyTorch-Linear-style init: U(-1/sqrt(fan_in), 1/sqrt(fan_in)),
    stored as (in, out) so the kernel computes x @ W + b directly."""
    params = []
    for i in range(len(LAYER_DIMS) - 1):
        fan_in, fan_out = LAYER_DIMS[i], LAYER_DIMS[i + 1]
        key, kw, kb = jax.random.split(key, 3)
        bound = 1.0 / float(fan_in) ** 0.5
        w = jax.random.uniform(kw, (fan_in, fan_out), jnp.float32, -bound, bound)
        b = jax.random.uniform(kb, (fan_out,), jnp.float32, -bound, bound)
        params.append((w, b))
    return params


def pack_params(params):
    """Pad + quantize once, outside the hot path.

    Returns (list_of_bf16_weights, packed_f32_biases[7, 1024]).
      * w1 rows padded 100 -> 128 (matches the padded input features).
      * w7 cols / b7 padded 1 -> 128 (lane-dense final store).
    """
    n = len(params)
    ws = []
    b_all = jnp.zeros((n, BIAS_COLS), jnp.float32)
    for i, (w, b) in enumerate(params):
        w = w.astype(jnp.float32)
        b = jnp.reshape(b, (-1,)).astype(jnp.float32)
        if i == 0:
            w = jnp.pad(w, ((0, PADDED_IN - w.shape[0]), (0, 0)))
        if i == n - 1:
            w = jnp.pad(w, ((0, 0), (0, PADDED_OUT - w.shape[1])))
            b = jnp.pad(b, (0, PADDED_OUT - b.shape[0]))
        ws.append(w.astype(jnp.bfloat16))
        b_all = b_all.at[i, : b.shape[0]].set(b)
    return ws, b_all


def complex_medium_nn(x, packed_params, *, tb=256):
    """Forward pass. `tb` = batch tile; 256 keeps weights + double-buffered
    tiles + activations well under v7x's 64 MiB VMEM while feeding the MXU
    with M >= 256 on large batches (v5e/v6e's 128 MiB allow larger tb too)."""
    ws, b_all = packed_params
    batch, feat = x.shape

    # Shrink the tile if the batch is tiny (keep sublane-aligned, i.e. mult of 8).
    tb = min(tb, max(8, -(-batch // 8) * 8))
    padded_batch = -(-batch // tb) * tb

    # Pad features 100 -> 128, batch -> multiple of tb, cast to bf16 (halves
    # the x DMA and matches the MXU input dtype).
    x_pad = jnp.zeros((padded_batch, PADDED_IN), jnp.bfloat16)
    x_pad = x_pad.at[:batch, :feat].set(x.astype(jnp.bfloat16))

    grid = (padded_batch // tb,)

    # Weights/biases: full-array blocks with constant index maps -> single DMA,
    # resident in VMEM for the whole grid.
    w_specs = [pl.BlockSpec(w.shape, lambda i: (0, 0)) for w in ws]
    in_specs = ([pl.BlockSpec((tb, PADDED_IN), lambda i: (i, 0))]
                + w_specs
                + [pl.BlockSpec(b_all.shape, lambda i: (0, 0))])
    out_spec = pl.BlockSpec((tb, PADDED_OUT), lambda i: (i, 0))

    out = pl.pallas_call(
        _mlp_kernel,
        out_shape=jax.ShapeDtypeStruct((padded_batch, PADDED_OUT), jnp.float32),
        grid=grid,
        in_specs=in_specs,
        out_specs=out_spec,
        compiler_params=pltpu.CompilerParams(
            dimension_semantics=("parallel",),   # shard batch tiles across TCs (v7x)
            vmem_limit_bytes=32 << 20,
        ),
    )(x_pad, *ws, b_all)

    return out[:batch, :1]


def reference(x, packed_params):
    """Pure-JAX reference that mimics the kernel's bf16-input / f32-accumulate
    math exactly (so the tolerance can stay tight)."""
    ws, b_all = packed_params
    n = len(ws)
    h = jnp.pad(x, ((0, 0), (0, PADDED_IN - x.shape[1]))).astype(jnp.bfloat16)
    for i, w in enumerate(ws):
        out_dim = w.shape[1]
        y = jnp.dot(h.astype(jnp.bfloat16), w,
                    preferred_element_type=jnp.float32) + b_all[i, :out_dim]
        h = jnp.maximum(y, 0.0) if i < n - 1 else y
    return h[:, :1]


if __name__ == "__main__":
    key = jax.random.PRNGKey(0)
    key_x, key_p = jax.random.split(key)

    batch = 8
    x = jax.random.normal(key_x, (batch, 100), jnp.float32)
    params = init_params(key_p)
    packed = pack_params(params)

    out = complex_medium_nn(x, packed)
    out = jax.block_until_ready(out)

    ref = reference(x, packed)
    assert out.shape == (batch, 1), out.shape
    assert jnp.allclose(out, ref, atol=1e-3, rtol=1e-3), "mismatch vs reference"

    print("KERNEL_OK")
</pallas_src>

<mosaic_0001>
module attributes {stable_mosaic.version = 11 : i64} {
  func.func @_mlp_kernel(%arg0: i32, %arg1: memref<8x128xbf16, #tpu.memory_space<vmem>>, %arg2: memref<128x1024xbf16, #tpu.memory_space<vmem>>, %arg3: memref<1024x1024xbf16, #tpu.memory_space<vmem>>, %arg4: memref<1024x512xbf16, #tpu.memory_space<vmem>>, %arg5: memref<512x256xbf16, #tpu.memory_space<vmem>>, %arg6: memref<256x128xbf16, #tpu.memory_space<vmem>>, %arg7: memref<128x64xbf16, #tpu.memory_space<vmem>>, %arg8: memref<64x128xbf16, #tpu.memory_space<vmem>>, %arg9: memref<7x1024xf32, #tpu.memory_space<vmem>>, %arg10: memref<8x128xf32, #tpu.memory_space<vmem>>) attributes {dimension_semantics = [#tpu.dimension_semantics<parallel>], iteration_bounds = array<i64: 1>, scalar_prefetch = 0 : i64, scratch_operands = 0 : i64, tpu.core_type = #tpu.core_type<tc>, window_params = [{transform_indices = @transform_0, window_bounds = array<i64: 8, 128>}, {pipeline_mode = #tpu.pipeline_mode<synchronous>, transform_indices = @transform_1, window_bounds = array<i64: 128, 1024>}, {pipeline_mode = #tpu.pipeline_mode<synchronous>, transform_indices = @transform_2, window_bounds = array<i64: 1024, 1024>}, {pipeline_mode = #tpu.pipeline_mode<synchronous>, transform_indices = @transform_3, window_bounds = array<i64: 1024, 512>}, {pipeline_mode = #tpu.pipeline_mode<synchronous>, transform_indices = @transform_4, window_bounds = array<i64: 512, 256>}, {pipeline_mode = #tpu.pipeline_mode<synchronous>, transform_indices = @transform_5, window_bounds = array<i64: 256, 128>}, {pipeline_mode = #tpu.pipeline_mode<synchronous>, transform_indices = @transform_6, window_bounds = array<i64: 128, 64>}, {pipeline_mode = #tpu.pipeline_mode<synchronous>, transform_indices = @transform_7, window_bounds = array<i64: 64, 128>}, {pipeline_mode = #tpu.pipeline_mode<synchronous>, transform_indices = @transform_8, window_bounds = array<i64: 7, 1024>}, {transform_indices = @transform_9, window_bounds = array<i64: 8, 128>}]} {
    %c0 = arith.constant 0 : index
    %c0_0 = arith.constant 0 : index
    %0 = vector.load %arg1[%c0, %c0_0] : memref<8x128xbf16, #tpu.memory_space<vmem>>, vector<8x128xbf16>
    %c0_1 = arith.constant 0 : index
    %c0_2 = arith.constant 0 : index
    %1 = vector.load %arg2[%c0_1, %c0_2] : memref<128x1024xbf16, #tpu.memory_space<vmem>>, vector<128x1024xbf16>
    %cst = arith.constant dense<0.000000e+00> : vector<8x1024xf32>
    %2 = tpu.matmul %0, %1, %cst {dimension_numbers = #tpu.dot_dimension_numbers<[1], [0], [0], [1], [0, 0, 1, 1], [], []>} : vector<8x128xbf16>, vector<128x1024xbf16>, vector<8x1024xf32> -> vector<8x1024xf32>
    %c0_3 = arith.constant 0 : index
    %c0_4 = arith.constant 0 : index
    %3 = vector.load %arg9[%c0_3, %c0_4] : memref<7x1024xf32, #tpu.memory_space<vmem>>, vector<1x1024xf32>
    %4 = vector.shape_cast %3 : vector<1x1024xf32> to vector<1024xf32>
    %5 = vector.shape_cast %4 : vector<1024xf32> to vector<1x1024xf32>
    %6 = vector.broadcast %5 : vector<1x1024xf32> to vector<8x1024xf32>
    %7 = arith.addf %2, %6 : vector<8x1024xf32>
    %cst_5 = arith.constant 0.000000e+00 : f32
    %8 = vector.broadcast %cst_5 : f32 to vector<8x1024xf32>
    %9 = arith.maximumf %7, %8 : vector<8x1024xf32>
    %10 = arith.truncf %9 : vector<8x1024xf32> to vector<8x1024xbf16>
    %c0_6 = arith.constant 0 : index
    %c0_7 = arith.constant 0 : index
    %11 = vector.load %arg3[%c0_6, %c0_7] : memref<1024x1024xbf16, #tpu.memory_space<vmem>>, vector<1024x1024xbf16>
    %cst_8 = arith.constant dense<0.000000e+00> : vector<8x1024xf32>
    %12 = tpu.matmul %10, %11, %cst_8 {dimension_numbers = #tpu.dot_dimension_numbers<[1], [0], [0], [1], [0, 0, 1, 1], [], []>} : vector<8x1024xbf16>, vector<1024x1024xbf16>, vector<8x1024xf32> -> vector<8x1024xf32>
    %c1 = arith.constant 1 : index
    %c0_9 = arith.constant 0 : index
    %13 = vector.load %arg9[%c1, %c0_9] : memref<7x1024xf32, #tpu.memory_space<vmem>>, vector<1x1024xf32>
    %14 = vector.shape_cast %13 : vector<1x1024xf32> to vector<1024xf32>
    %15 = vector.shape_cast %14 : vector<1024xf32> to vector<1x1024xf32>
    %16 = vector.broadcast %15 : vector<1x1024xf32> to vector<8x1024xf32>
    %17 = arith.addf %12, %16 : vector<8x1024xf32>
    %cst_10 = arith.constant 0.000000e+00 : f32
    %18 = vector.broadcast %cst_10 : f32 to vector<8x1024xf32>
    %19 = arith.maximumf %17, %18 : vector<8x1024xf32>
    %20 = arith.truncf %19 : vector<8x1024xf32> to vector<8x1024xbf16>
    %c0_11 = arith.constant 0 : index
    %c0_12 = arith.constant 0 : index
    %21 = vector.load %arg4[%c0_11, %c0_12] : memref<1024x512xbf16, #tpu.memory_space<vmem>>, vector<1024x512xbf16>
    %cst_13 = arith.constant dense<0.000000e+00> : vector<8x512xf32>
    %22 = tpu.matmul %20, %21, %cst_13 {dimension_numbers = #tpu.dot_dimension_numbers<[1], [0], [0], [1], [0, 0, 1, 1], [], []>} : vector<8x1024xbf16>, vector<1024x512xbf16>, vector<8x512xf32> -> vector<8x512xf32>
    %c2 = arith.constant 2 : index
    %c0_14 = arith.constant 0 : index
    %23 = vector.load %arg9[%c2, %c0_14] : memref<7x1024xf32, #tpu.memory_space<vmem>>, vector<1x512xf32>
    %24 = vector.shape_cast %23 : vector<1x512xf32> to vector<512xf32>
    %25 = vector.shape_cast %24 : vector<512xf32> to vector<1x512xf32>
    %26 = vector.broadcast %25 : vector<1x512xf32> to vector<8x512xf32>
    %27 = arith.addf %22, %26 : vector<8x512xf32>
    %cst_15 = arith.constant 0.000000e+00 : f32
    %28 = vector.broadcast %cst_15 : f32 to vector<8x512xf32>
    %29 = arith.maximumf %27, %28 : vector<8x512xf32>
    %30 = arith.truncf %29 : vector<8x512xf32> to vector<8x512xbf16>
    %c0_16 = arith.constant 0 : index
    %c0_17 = arith.constant 0 : index
    %31 = vector.load %arg5[%c0_16, %c0_17] : memref<512x256xbf16, #tpu.memory_space<vmem>>, vector<512x256xbf16>
    %cst_18 = arith.constant dense<0.000000e+00> : vector<8x256xf32>
    %32 = tpu.matmul %30, %31, %cst_18 {dimension_numbers = #tpu.dot_dimension_numbers<[1], [0], [0], [1], [0, 0, 1, 1], [], []>} : vector<8x512xbf16>, vector<512x256xbf16>, vector<8x256xf32> -> vector<8x256xf32>
    %c3 = arith.constant 3 : index
    %c0_19 = arith.constant 0 : index
    %33 = vector.load %arg9[%c3, %c0_19] : memref<7x1024xf32, #tpu.memory_space<vmem>>, vector<1x256xf32>
    %34 = vector.shape_cast %33 : vector<1x256xf32> to vector<256xf32>
    %35 = vector.shape_cast %34 : vector<256xf32> to vector<1x256xf32>
    %36 = vector.broadcast %35 : vector<1x256xf32> to vector<8x256xf32>
    %37 = arith.addf %32, %36 : vector<8x256xf32>
    %cst_20 = arith.constant 0.000000e+00 : f32
    %38 = vector.broadcast %cst_20 : f32 to vector<8x256xf32>
    %39 = arith.maximumf %37, %38 : vector<8x256xf32>
    %40 = arith.truncf %39 : vector<8x256xf32> to vector<8x256xbf16>
    %c0_21 = arith.constant 0 : index
    %c0_22 = arith.constant 0 : index
    %41 = vector.load %arg6[%c0_21, %c0_22] : memref<256x128xbf16, #tpu.memory_space<vmem>>, vector<256x128xbf16>
    %cst_23 = arith.constant dense<0.000000e+00> : vector<8x128xf32>
    %42 = tpu.matmul %40, %41, %cst_23 {dimension_numbers = #tpu.dot_dimension_numbers<[1], [0], [0], [1], [0, 0, 1, 1], [], []>} : vector<8x256xbf16>, vector<256x128xbf16>, vector<8x128xf32> -> vector<8x128xf32>
    %c4 = arith.constant 4 : index
    %c0_24 = arith.constant 0 : index
    %43 = vector.load %arg9[%c4, %c0_24] : memref<7x1024xf32, #tpu.memory_space<vmem>>, vector<1x128xf32>
    %44 = vector.shape_cast %43 : vector<1x128xf32> to vector<128xf32>
    %45 = vector.shape_cast %44 : vector<128xf32> to vector<1x128xf32>
    %46 = vector.broadcast %45 : vector<1x128xf32> to vector<8x128xf32>
    %47 = arith.addf %42, %46 : vector<8x128xf32>
    %cst_25 = arith.constant 0.000000e+00 : f32
    %48 = vector.broadcast %cst_25 : f32 to vector<8x128xf32>
    %49 = arith.maximumf %47, %48 : vector<8x128xf32>
    %50 = arith.truncf %49 : vector<8x128xf32> to vector<8x128xbf16>
    %c0_26 = arith.constant 0 : index
    %c0_27 = arith.constant 0 : index
    %51 = vector.load %arg7[%c0_26, %c0_27] : memref<128x64xbf16, #tpu.memory_space<vmem>>, vector<128x64xbf16>
    %cst_28 = arith.constant dense<0.000000e+00> : vector<8x64xf32>
    %52 = tpu.matmul %50, %51, %cst_28 {dimension_numbers = #tpu.dot_dimension_numbers<[1], [0], [0], [1], [0, 0, 1, 1], [], []>} : vector<8x128xbf16>, vector<128x64xbf16>, vector<8x64xf32> -> vector<8x64xf32>
    %c5 = arith.constant 5 : index
    %c0_29 = arith.constant 0 : index
    %53 = vector.load %arg9[%c5, %c0_29] : memref<7x1024xf32, #tpu.memory_space<vmem>>, vector<1x64xf32>
    %54 = vector.shape_cast %53 : vector<1x64xf32> to vector<64xf32>
    %55 = vector.shape_cast %54 : vector<64xf32> to vector<1x64xf32>
    %56 = vector.broadcast %55 : vector<1x64xf32> to vector<8x64xf32>
    %57 = arith.addf %52, %56 : vector<8x64xf32>
    %cst_30 = arith.constant 0.000000e+00 : f32
    %58 = vector.broadcast %cst_30 : f32 to vector<8x64xf32>
    %59 = arith.maximumf %57, %58 : vector<8x64xf32>
    %60 = arith.truncf %59 : vector<8x64xf32> to vector<8x64xbf16>
    %c0_31 = arith.constant 0 : index
    %c0_32 = arith.constant 0 : index
    %61 = vector.load %arg8[%c0_31, %c0_32] : memref<64x128xbf16, #tpu.memory_space<vmem>>, vector<64x128xbf16>
    %cst_33 = arith.constant dense<0.000000e+00> : vector<8x128xf32>
    %62 = tpu.matmul %60, %61, %cst_33 {dimension_numbers = #tpu.dot_dimension_numbers<[1], [0], [0], [1], [0, 0, 1, 1], [], []>} : vector<8x64xbf16>, vector<64x128xbf16>, vector<8x128xf32> -> vector<8x128xf32>
    %c6 = arith.constant 6 : index
    %c0_34 = arith.constant 0 : index
    %63 = vector.load %arg9[%c6, %c0_34] : memref<7x1024xf32, #tpu.memory_space<vmem>>, vector<1x128xf32>
    %64 = vector.shape_cast %63 : vector<1x128xf32> to vector<128xf32>
    %65 = vector.shape_cast %64 : vector<128xf32> to vector<1x128xf32>
    %66 = vector.broadcast %65 : vector<1x128xf32> to vector<8x128xf32>
    %67 = arith.addf %62, %66 : vector<8x128xf32>
    %c0_35 = arith.constant 0 : index
    %c0_36 = arith.constant 0 : index
    %68 = vector.load %arg10[%c0_35, %c0_36] : memref<8x128xf32, #tpu.memory_space<vmem>>, vector<8x128xf32>
    tpu.vector_store %arg10[%c0_35, %c0_36], %67 {strides = array<i32>} : memref<8x128xf32, #tpu.memory_space<vmem>>, vector<8x128xf32>,
    return
  }
  func.func @transform_0(%arg0: i32) -> (i32, i32) {
    %c0_i32 = arith.constant 0 : i32
    %c0_i32_0 = arith.constant 0 : i32
    return %arg0, %c0_i32 : i32, i32
  }
  func.func @transform_1(%arg0: i32) -> (i32, i32) {
    %c0_i32 = arith.constant 0 : i32
    %c0_i32_0 = arith.constant 0 : i32
    %c0_i32_1 = arith.constant 0 : i32
    return %c0_i32, %c0_i32_0 : i32, i32
  }
  func.func @transform_2(%arg0: i32) -> (i32, i32) {
    %c0_i32 = arith.constant 0 : i32
    %c0_i32_0 = arith.constant 0 : i32
    %c0_i32_1 = arith.constant 0 : i32
    return %c0_i32, %c0_i32_0 : i32, i32
  }
  func.func @transform_3(%arg0: i32) -> (i32, i32) {
    %c0_i32 = arith.constant 0 : i32
    %c0_i32_0 = arith.constant 0 : i32
    %c0_i32_1 = arith.constant 0 : i32
    return %c0_i32, %c0_i32_0 : i32, i32
  }
  func.func @transform_4(%arg0: i32) -> (i32, i32) {
    %c0_i32 = arith.constant 0 : i32
    %c0_i32_0 = arith.constant 0 : i32
    %c0_i32_1 = arith.constant 0 : i32
    return %c0_i32, %c0_i32_0 : i32, i32
  }
  func.func @transform_5(%arg0: i32) -> (i32, i32) {
    %c0_i32 = arith.constant 0 : i32
    %c0_i32_0 = arith.constant 0 : i32
    %c0_i32_1 = arith.constant 0 : i32
    return %c0_i32, %c0_i32_0 : i32, i32
  }
  func.func @transform_6(%arg0: i32) -> (i32, i32) {
    %c0_i32 = arith.constant 0 : i32
    %c0_i32_0 = arith.constant 0 : i32
    %c0_i32_1 = arith.constant 0 : i32
    return %c0_i32, %c0_i32_0 : i32, i32
  }
  func.func @transform_7(%arg0: i32) -> (i32, i32) {
    %c0_i32 = arith.constant 0 : i32
    %c0_i32_0 = arith.constant 0 : i32
    %c0_i32_1 = arith.constant 0 : i32
    return %c0_i32, %c0_i32_0 : i32, i32
  }
  func.func @transform_8(%arg0: i32) -> (i32, i32) {
    %c0_i32 = arith.constant 0 : i32
    %c0_i32_0 = arith.constant 0 : i32
    %c0_i32_1 = arith.constant 0 : i32
    return %c0_i32, %c0_i32_0 : i32, i32
  }
  func.func @transform_9(%arg0: i32) -> (i32, i32) {
    %c0_i32 = arith.constant 0 : i32
    %c0_i32_0 = arith.constant 0 : i32
    return %arg0, %c0_i32 : i32, i32
  }
}

</mosaic_0001>

<llo_original>
// kernel: tpu_custom_call.1
$region0: #{tpu_custom_call.1}
  #allocation0 [shape = 'u32[]', space=smem, size = 0x4, offset = 0x4, fixed_abs, tag = 'smem constant byte address 0x4 - core index']
  #allocation1 [shape = 'u32[72,128]{1,0:T(1,128)}', space=vmem, size = 0x9000, scoped, tag = 'internal scratch']
  %s0 = inlined_call_operand.hbm [shape: bf16[8,128], index: 0, kind: input, shape index: {}]
  %s1 = inlined_call_operand.hbm [shape: bf16[128,1024], index: 1, kind: input, shape index: {}]
  %s2 = inlined_call_operand.hbm [shape: bf16[1024,1024], index: 2, kind: input, shape index: {}]
  %s3 = inlined_call_operand.hbm [shape: bf16[1024,512], index: 3, kind: input, shape index: {}]
  %s4 = inlined_call_operand.hbm [shape: bf16[512,256], index: 4, kind: input, shape index: {}]
  %s5 = inlined_call_operand.hbm [shape: bf16[256,128], index: 5, kind: input, shape index: {}]
  %s6 = inlined_call_operand.vmem [shape: bf16[128,64], index: 6, kind: input, shape index: {}]
  %s7 = inlined_call_operand.hbm [shape: bf16[64,128], index: 7, kind: input, shape index: {}]
  %s8 = inlined_call_operand.hbm [shape: f32[7,1024], index: 8, kind: input, shape index: {}]
  %s9 = inlined_call_operand.hbm [shape: f32[8,128], index: 9, kind: output, shape index: {}]
  %s10 = sld [smem:[#allocation0]]
  $region78: #{tpu_custom_call.1} parent=0
    _
  %s12 = ssub.s32 1, %s10
  %s13 = scalar_select 0, %s12, %s10
  $region1: #{tpu_custom_call.1} parent=0
    #allocation2 [shape = 'u8[2048]{0}', space=vmem, size = 0x800, scoped, tag = 'input window, operand 0, single buffered']
    #allocation3 [shape = 's32[1]{0}', space=sflag, size = 0x4, scoped, tag = 'scoped memory for tpu_custom_call.1']
    #allocation4 [shape = 's32[1]{0}', space=sflag, size = 0x4, scoped, tag = 'scoped memory for tpu_custom_call.1']
    #allocation5 [shape = 'u8[262144]{0}', space=vmem, size = 0x40000, scoped, tag = 'input window, operand 1, single buffered']
    #allocation6 [shape = 's32[1]{0}', space=sflag, size = 0x4, scoped, tag = 'scoped memory for tpu_custom_call.1']
    #allocation7 [shape = 'u8[2097152]{0}', space=vmem, size = 0x200000, scoped, tag = 'input window, operand 2, single buffered']
    #allocation8 [shape = 'u8[1048576]{0}', space=vmem, size = 0x100000, scoped, tag = 'input window, operand 3, single buffered']
    #allocation9 [shape = 's32[1]{0}', space=sflag, size = 0x4, scoped, tag = 'scoped memory for tpu_custom_call.1']
    #allocation10 [shape = 'u8[262144]{0}', space=vmem, size = 0x40000, scoped, tag = 'input window, operand 4, single buffered']
    #allocation11 [shape = 'u8[65536]{0}', space=vmem, size = 0x10000, scoped, tag = 'input window, operand 5, single buffered']
    #allocation12 [shape = 's32[1]{0}', space=sflag, size = 0x4, scoped, tag = 'scoped memory for tpu_custom_call.1']
    #allocation13 [shape = 'u8[16384]{0}', space=vmem, size = 0x4000, scoped, tag = 'input window, operand 7, single buffered']
    #allocation14 [shape = 'u8[32768]{0}', space=vmem, size = 0x8000, scoped, tag = 'input window, operand 8, single buffered']
    #allocation15 [shape = 's32[1]{0}', space=sflag, size = 0x4, scoped, tag = 'scoped memory for tpu_custom_call.1']
    #allocation16 [shape = 'u8[4096]{0}', space=vmem, size = 0x1000, scoped, tag = 'output window, operand 0, single buffered']
    %14 = vsyncpa [#allocation3], 0
    %15 = vsyncpa [#allocation6], 0
    %16 = vsyncpa [#allocation9], 0
    %17 = vsyncpa [#allocation12], 0
    %18 = vsyncpa [#allocation15], 0
    %19 = vsyncpa [#allocation4], 0
    // Predicated region
    $region2: #{tpu_custom_call.1} parent=1 // pred_check
      _
    $region3: #{tpu_custom_call.1} parent=1 // pred_check_branch
      %21 = sbr.rel (0) target = $region5
    $region4: #{tpu_custom_call.1} parent=1 // pred_region
      %23 = vsyncadd [#allocation3], 0
      %s25 = sshll.u32 %s0, 4
      %s26 = int_to_ptr.hbm [resolvable:$true] %s25
      %s27 = sshll.u32 [#allocation2], 4
      %s28 = int_to_ptr.vmem [resolvable:$true] %s27
      %30 = dma.hbm_to_vmem [thread:$0]  %s26, 64, %s28, [#allocation3]
    $region5: #{tpu_custom_call.1} parent=1 // pred_fallthru
      _
    // Predicated region
    $region6: #{tpu_custom_call.1} parent=1 // pred_check
      _
    $region7: #{tpu_custom_call.1} parent=1 // pred_check_branch
      %32 = sbr.rel (0) target = $region9
    $region8: #{tpu_custom_call.1} parent=1 // pred_region
      %34 = vsyncadd [#allocation6], 0
      %s35 = sshll.u32 %s1, 4
      %s36 = int_to_ptr.hbm [resolvable:$true] %s35
      %s37 = sshll.u32 [#allocation5], 4
      %s38 = int_to_ptr.vmem [resolvable:$true] %s37
      %43 = dma.hbm_to_vmem [thread:$0]  %s36, 8192, %s38, [#allocation6], 512, 512, 32
    $region9: #{tpu_custom_call.1} parent=1 // pred_fallthru
      _
    // Predicated region
    $region10: #{tpu_custom_call.1} parent=1 // pred_check
      _
    $region11: #{tpu_custom_call.1} parent=1 // pred_check_branch
      %45 = sbr.rel (0) target = $region13
    $region12: #{tpu_custom_call.1} parent=1 // pred_region
      %47 = vsyncadd [#allocation6], 0
      %s48 = sshll.u32 %s2, 4
      %s49 = int_to_ptr.hbm [resolvable:$true] %s48
      %s50 = sshll.u32 [#allocation7], 4
      %s51 = int_to_ptr.vmem [resolvable:$true] %s50
      %56 = dma.hbm_to_vmem [thread:$0]  %s49, 65536, %s51, [#allocation6], 512, 512, 32
    $region13: #{tpu_custom_call.1} parent=1 // pred_fallthru
      _
    // Predicated region
    $region14: #{tpu_custom_call.1} parent=1 // pred_check
      _
    $region15: #{tpu_custom_call.1} parent=1 // pred_check_branch
      %58 = sbr.rel (0) target = $region17
    $region16: #{tpu_custom_call.1} parent=1 // pred_region
      %60 = vsyncadd [#allocation9], 0
      %s61 = sshll.u32 %s3, 4
      %s62 = int_to_ptr.hbm [resolvable:$true] %s61
      %s63 = sshll.u32 [#allocation8], 4
      %s64 = int_to_ptr.vmem [resolvable:$true] %s63
      %69 = dma.hbm_to_vmem [thread:$0]  %s62, 32768, %s64, [#allocation9], 256, 256, 16
    $region17: #{tpu_custom_call.1} parent=1 // pred_fallthru
      _
    // Predicated region
    $region18: #{tpu_custom_call.1} parent=1 // pred_check
      _
    $region19: #{tpu_custom_call.1} parent=1 // pred_check_branch
      %71 = sbr.rel (0) target = $region21
    $region20: #{tpu_custom_call.1} parent=1 // pred_region
      %73 = vsyncadd [#allocation9], 0
      %s74 = sshll.u32 %s4, 4
      %s75 = int_to_ptr.hbm [resolvable:$true] %s74
      %s76 = sshll.u32 [#allocation10], 4
      %s77 = int_to_ptr.vmem [resolvable:$true] %s76
      %82 = dma.hbm_to_vmem [thread:$0]  %s75, 8192, %s77, [#allocation9], 128, 128, 8
    $region21: #{tpu_custom_call.1} parent=1 // pred_fallthru
      _
    // Predicated region
    $region22: #{tpu_custom_call.1} parent=1 // pred_check
      _
    $region23: #{tpu_custom_call.1} parent=1 // pred_check_branch
      %84 = sbr.rel (0) target = $region25
    $region24: #{tpu_custom_call.1} parent=1 // pred_region
      %86 = vsyncadd [#allocation12], 0
      %s87 = sshll.u32 %s5, 4
      %s88 = int_to_ptr.hbm [resolvable:$true] %s87
      %s89 = sshll.u32 [#allocation11], 4
      %s90 = int_to_ptr.vmem [resolvable:$true] %s89
      %95 = dma.hbm_to_vmem [thread:$0]  %s88, 2048, %s90, [#allocation12], 64, 64, 4
    $region25: #{tpu_custom_call.1} parent=1 // pred_fallthru
      _
    // Predicated region
    $region26: #{tpu_custom_call.1} parent=1 // pred_check
      _
    $region27: #{tpu_custom_call.1} parent=1 // pred_check_branch
      %97 = sbr.rel (0) target = $region29
    $region28: #{tpu_custom_call.1} parent=1 // pred_region
      _
    $region29: #{tpu_custom_call.1} parent=1 // pred_fallthru
      _
    // Predicated region
    $region30: #{tpu_custom_call.1} parent=1 // pred_check
      _
    $region31: #{tpu_custom_call.1} parent=1 // pred_check_branch
      %99 = sbr.rel (0) target = $region33
    $region32: #{tpu_custom_call.1} parent=1 // pred_region
      %101 = vsyncadd [#allocation12], 0
      %s102 = sshll.u32 %s7, 4
      %s103 = int_to_ptr.hbm [resolvable:$true] %s102
      %s104 = sshll.u32 [#allocation13], 4
      %s105 = int_to_ptr.vmem [resolvable:$true] %s104
      %110 = dma.hbm_to_vmem [thread:$0]  %s103, 512, %s105, [#allocation12], 64, 64, 4
    $region33: #{tpu_custom_call.1} parent=1 // pred_fallthru
      _
    // Predicated region
    $region34: #{tpu_custom_call.1} parent=1 // pred_check
      _
    $region35: #{tpu_custom_call.1} parent=1 // pred_check_branch
      %112 = sbr.rel (0) target = $region37
    $region36: #{tpu_custom_call.1} parent=1 // pred_region
      %114 = vsyncadd [#allocation15], 0
      %s116 = sshll.u32 %s8, 4
      %s117 = int_to_ptr.hbm [resolvable:$true] %s116
      %s118 = sshll.u32 [#allocation14], 4
      %s119 = int_to_ptr.vmem [resolvable:$true] %s118
      %121 = dma.hbm_to_vmem [thread:$0]  %s117, 1024, %s119, [#allocation15]
    $region37: #{tpu_custom_call.1} parent=1 // pred_fallthru
      _
    // Predicated region
    $region38: #{tpu_custom_call.1} parent=1 // pred_check
      _
    $region39: #{tpu_custom_call.1} parent=1 // pred_check_branch
      %123 = sbr.rel (0) target = $region41
    $region40: #{tpu_custom_call.1} parent=1 // pred_region
      %125 = dma.done [#allocation3], 64
    $region41: #{tpu_custom_call.1} parent=1 // pred_fallthru
      _
    // Predicated region
    $region42: #{tpu_custom_call.1} parent=1 // pred_check
      _
    $region43: #{tpu_custom_call.1} parent=1 // pred_check_branch
      %127 = sbr.rel (0) target = $region45
    $region44: #{tpu_custom_call.1} parent=1 // pred_region
      %129 = dma.done [#allocation6], 8192
    $region45: #{tpu_custom_call.1} parent=1 // pred_fallthru
      _
    // Predicated region
    $region46: #{tpu_custom_call.1} parent=1 // pred_check
      _
    $region47: #{tpu_custom_call.1} parent=1 // pred_check_branch
      %131 = sbr.rel (0) target = $region49
    $region48: #{tpu_custom_call.1} parent=1 // pred_region
      %133 = dma.done [#allocation6], 65536
    $region49: #{tpu_custom_call.1} parent=1 // pred_fallthru
      _
    // Predicated region
    $region50: #{tpu_custom_call.1} parent=1 // pred_check
      _
    $region51: #{tpu_custom_call.1} parent=1 // pred_check_branch
      %135 = sbr.rel (0) target = $region53
    $region52: #{tpu_custom_call.1} parent=1 // pred_region
      %137 = dma.done [#allocation9], 32768
    $region53: #{tpu_custom_call.1} parent=1 // pred_fallthru
      _
    // Predicated region
    $region54: #{tpu_custom_call.1} parent=1 // pred_check
      _
    $region55: #{tpu_custom_call.1} parent=1 // pred_check_branch
      %139 = sbr.rel (0) target = $region57
    $region56: #{tpu_custom_call.1} parent=1 // pred_region
      %141 = dma.done [#allocation9], 8192
    $region57: #{tpu_custom_call.1} parent=1 // pred_fallthru
      _
    // Predicated region
    $region58: #{tpu_custom_call.1} parent=1 // pred_check
      _
    $region59: #{tpu_custom_call.1} parent=1 // pred_check_branch
      %143 = sbr.rel (0) target = $region61
    $region60: #{tpu_custom_call.1} parent=1 // pred_region
      %145 = dma.done [#allocation12], 2048
    $region61: #{tpu_custom_call.1} parent=1 // pred_fallthru
      _
    // Predicated region
    $region62: #{tpu_custom_call.1} parent=1 // pred_check
      _
    $region63: #{tpu_custom_call.1} parent=1 // pred_check_branch
      %147 = sbr.rel (0) target = $region65
    $region64: #{tpu_custom_call.1} parent=1 // pred_region
      %149 = dma.done [#allocation12], 512
    $region65: #{tpu_custom_call.1} parent=1 // pred_fallthru
      _
    // Predicated region
    $region66: #{tpu_custom_call.1} parent=1 // pred_check
      _
    $region67: #{tpu_custom_call.1} parent=1 // pred_check_branch
      %151 = sbr.rel (0) target = $region69
    $region68: #{tpu_custom_call.1} parent=1 // pred_region
      %153 = dma.done [#allocation15], 1024
    $region69: #{tpu_custom_call.1} parent=1 // pred_fallthru
      _
    %v155 = vld [vmem:[#allocation2] sm:$0xf]
    %v156 = vld [vmem:[#allocation5] sm:$0xff]
    %v157 = vld [vmem:[#allocation5 + $0x8] sm:$0xff]
    %v158 = vld [vmem:[#allocation5 + $0x10] sm:$0xff]
    %v159 = vld [vmem:[#allocation5 + $0x18] sm:$0xff]
    %v160 = vld [vmem:[#allocation5 + $0x20] sm:$0xff]
    %v161 = vld [vmem:[#allocation5 + $0x28] sm:$0xff]
    %v162 = vld [vmem:[#allocation5 + $0x30] sm:$0xff]
    %v163 = vld [vmem:[#allocation5 + $0x38] sm:$0xff]
    %v164 = vld [vmem:[#allocation5 + $0x40] sm:$0xff]
    %v165 = vld [vmem:[#allocation5 + $0x48] sm:$0xff]
    %v166 = vld [vmem:[#allocation5 + $0x50] sm:$0xff]
    %v167 = vld [vmem:[#allocation5 + $0x58] sm:$0xff]
    %v168 = vld [vmem:[#allocation5 + $0x60] sm:$0xff]
    %v169 = vld [vmem:[#allocation5 + $0x68] sm:$0xff]
    %v170 = vld [vmem:[#allocation5 + $0x70] sm:$0xff]
    %v171 = vld [vmem:[#allocation5 + $0x78] sm:$0xff]
    %v172 = vld [vmem:[#allocation5 + $0x80] sm:$0xff]
    %v173 = vld [vmem:[#allocation5 + $0x88] sm:$0xff]
    %v174 = vld [vmem:[#allocation5 + $0x90] sm:$0xff]
    %v175 = vld [vmem:[#allocation5 + $0x98] sm:$0xff]
    %v176 = vld [vmem:[#allocation5 + $0xa0] sm:$0xff]
    %v177 = vld [vmem:[#allocation5 + $0xa8] sm:$0xff]
    %v178 = vld [vmem:[#allocation5 + $0xb0] sm:$0xff]
    %v179 = vld [vmem:[#allocation5 + $0xb8] sm:$0xff]
    %v180 = vld [vmem:[#allocation5 + $0xc0] sm:$0xff]
    %v181 = vld [vmem:[#allocation5 + $0xc8] sm:$0xff]
    %v182 = vld [vmem:[#allocation5 + $0xd0] sm:$0xff]
    %v183 = vld [vmem:[#allocation5 + $0xd8] sm:$0xff]
    %v184 = vld [vmem:[#allocation5 + $0xe0] sm:$0xff]
    %v185 = vld [vmem:[#allocation5 + $0xe8] sm:$0xff]
    %v186 = vld [vmem:[#allocation5 + $0xf0] sm:$0xff]
    %v187 = vld [vmem:[#allocation5 + $0xf8] sm:$0xff]
    %v188 = vld [vmem:[#allocation5 + $0x100] sm:$0xff]
    %v189 = vld [vmem:[#allocation5 + $0x108] sm:$0xff]
    %v190 = vld [vmem:[#allocation5 + $0x110] sm:$0xff]
    %v191 = vld [vmem:[#allocation5 + $0x118] sm:$0xff]
    %v192 = vld [vmem:[#allocation5 + $0x120] sm:$0xff]
    %v193 = vld [vmem:[#allocation5 + $0x128] sm:$0xff]
    %v194 = vld [vmem:[#allocation5 + $0x130] sm:$0xff]
    %v195 = vld [vmem:[#allocation5 + $0x138] sm:$0xff]
    %v196 = vld [vmem:[#allocation5 + $0x140] sm:$0xff]
    %v197 = vld [vmem:[#allocation5 + $0x148] sm:$0xff]
    %v198 = vld [vmem:[#allocation5 + $0x150] sm:$0xff]
    %v199 = vld [vmem:[#allocation5 + $0x158] sm:$0xff]
    %v200 = vld [vmem:[#allocation5 + $0x160] sm:$0xff]
    %v201 = vld [vmem:[#allocation5 + $0x168] sm:$0xff]
    %v202 = vld [vmem:[#allocation5 + $0x170] sm:$0xff]
    %v203 = vld [vmem:[#allocation5 + $0x178] sm:$0xff]
    %v204 = vld [vmem:[#allocation5 + $0x180] sm:$0xff]
    %v205 = vld [vmem:[#allocation5 + $0x188] sm:$0xff]
    %v206 = vld [vmem:[#allocation5 + $0x190] sm:$0xff]
    %v207 = vld [vmem:[#allocation5 + $0x198] sm:$0xff]
    %v208 = vld [vmem:[#allocation5 + $0x1a0] sm:$0xff]
    %v209 = vld [vmem:[#allocation5 + $0x1a8] sm:$0xff]
    %v210 = vld [vmem:[#allocation5 + $0x1b0] sm:$0xff]
    %v211 = vld [vmem:[#allocation5 + $0x1b8] sm:$0xff]
    %v212 = vld [vmem:[#allocation5 + $0x1c0] sm:$0xff]
    %v213 = vld [vmem:[#allocation5 + $0x1c8] sm:$0xff]
    %v214 = vld [vmem:[#allocation5 + $0x1d0] sm:$0xff]
    %v215 = vld [vmem:[#allocation5 + $0x1d8] sm:$0xff]
    %v216 = vld [vmem:[#allocation5 + $0x1e0] sm:$0xff]
    %v217 = vld [vmem:[#allocation5 + $0x1e8] sm:$0xff]
    %v218 = vld [vmem:[#allocation5 + $0x1f0] sm:$0xff]
    %v219 = vld [vmem:[#allocation5 + $0x1f8] sm:$0xff]
    %v220 = vld [vmem:[#allocation14] ss:$8 sm:$0xf]
    %v221 = vld [vmem:[#allocation14] ss:$8 sm:$0xf0]
    %v222 = vor.u32 %v220, %v221
    %v224 = vperm.slane %v222, 0
    %v225 = vperm.slane %v222, 1
    %v226 = vperm.slane %v222, 2
    %v227 = vperm.slane %v222, 3
    %v228 = vperm.slane %v222, 4
    %v229 = vperm.slane %v222, 5
    %v230 = vperm.slane %v222, 6
    %v231 = vperm.slane %v222, 7
    %v304 = vunpack.c.l.b16 %v156
    %v305 = vunpack.c.h.b16 %v156
    %v306 = vunpack.c.l.b16 %v157
    %v307 = vunpack.c.h.b16 %v157
    %v308 = vunpack.c.l.b16 %v158
    %v309 = vunpack.c.h.b16 %v158
    %v310 = vunpack.c.l.b16 %v159
    %v311 = vunpack.c.h.b16 %v159
    %v312 = vunpack.c.l.b16 %v160
    %v313 = vunpack.c.h.b16 %v160
    %v314 = vunpack.c.l.b16 %v161
    %v315 = vunpack.c.h.b16 %v161
    %v316 = vunpack.c.l.b16 %v162
    %v317 = vunpack.c.h.b16 %v162
    %v318 = vunpack.c.l.b16 %v163
    %v319 = vunpack.c.h.b16 %v163
    %v320 = vunpack.c.l.b16 %v164
    %v321 = vunpack.c.h.b16 %v164
    %v322 = vunpack.c.l.b16 %v165
    %v323 = vunpack.c.h.b16 %v165
    %v324 = vunpack.c.l.b16 %v166
    %v325 = vunpack.c.h.b16 %v166
    %v326 = vunpack.c.l.b16 %v167
    %v327 = vunpack.c.h.b16 %v167
    %v328 = vunpack.c.l.b16 %v168
    %v329 = vunpack.c.h.b16 %v168
    %v330 = vunpack.c.l.b16 %v169
    %v331 = vunpack.c.h.b16 %v169
    %v332 = vunpack.c.l.b16 %v170
    %v333 = vunpack.c.h.b16 %v170
    %v334 = vunpack.c.l.b16 %v171
    %v335 = vunpack.c.h.b16 %v171
    %v336 = vunpack.c.l.b16 %v172
    %v337 = vunpack.c.h.b16 %v172
    %v338 = vunpack.c.l.b16 %v173
    %v339 = vunpack.c.h.b16 %v173
    %v340 = vunpack.c.l.b16 %v174
    %v341 = vunpack.c.h.b16 %v174
    %v342 = vunpack.c.l.b16 %v175
    %v343 = vunpack.c.h.b16 %v175
    %v344 = vunpack.c.l.b16 %v176
    %v345 = vunpack.c.h.b16 %v176
    %v346 = vunpack.c.l.b16 %v177
    %v347 = vunpack.c.h.b16 %v177
    %v348 = vunpack.c.l.b16 %v178
    %v349 = vunpack.c.h.b16 %v178
    %v350 = vunpack.c.l.b16 %v179
    %v351 = vunpack.c.h.b16 %v179
    %v352 = vunpack.c.l.b16 %v180
    %v353 = vunpack.c.h.b16 %v180
    %v354 = vunpack.c.l.b16 %v181
    %v355 = vunpack.c.h.b16 %v181
    %v356 = vunpack.c.l.b16 %v182
    %v357 = vunpack.c.h.b16 %v182
    %v358 = vunpack.c.l.b16 %v183
    %v359 = vunpack.c.h.b16 %v183
    %v360 = vunpack.c.l.b16 %v184
    %v361 = vunpack.c.h.b16 %v184
    %v362 = vunpack.c.l.b16 %v185
    %v363 = vunpack.c.h.b16 %v185
    %v364 = vunpack.c.l.b16 %v186
    %v365 = vunpack.c.h.b16 %v186
    %v366 = vunpack.c.l.b16 %v187
    %v367 = vunpack.c.h.b16 %v187
    %v368 = vunpack.c.l.b16 %v188
    %v369 = vunpack.c.h.b16 %v188
    %v370 = vunpack.c.l.b16 %v189
    %v371 = vunpack.c.h.b16 %v189
    %v372 = vunpack.c.l.b16 %v190
    %v373 = vunpack.c.h.b16 %v190
    %v374 = vunpack.c.l.b16 %v191
    %v375 = vunpack.c.h.b16 %v191
    %v376 = vunpack.c.l.b16 %v192
    %v377 = vunpack.c.h.b16 %v192
    %v378 = vunpack.c.l.b16 %v193
    %v379 = vunpack.c.h.b16 %v193
    %v380 = vunpack.c.l.b16 %v194
    %v381 = vunpack.c.h.b16 %v194
    %v382 = vunpack.c.l.b16 %v195
    %v383 = vunpack.c.h.b16 %v195
    %v384 = vunpack.c.l.b16 %v196
    %v385 = vunpack.c.h.b16 %v196
    %v386 = vunpack.c.l.b16 %v197
    %v387 = vunpack.c.h.b16 %v197
    %v388 = vunpack.c.l.b16 %v198
    %v389 = vunpack.c.h.b16 %v198
    %v390 = vunpack.c.l.b16 %v199
    %v391 = vunpack.c.h.b16 %v199
    %v392 = vunpack.c.l.b16 %v200
    %v393 = vunpack.c.h.b16 %v200
    %v394 = vunpack.c.l.b16 %v201
    %v395 = vunpack.c.h.b16 %v201
    %v396 = vunpack.c.l.b16 %v202
    %v397 = vunpack.c.h.b16 %v202
    %v398 = vunpack.c.l.b16 %v203
    %v399 = vunpack.c.h.b16 %v203
    %v400 = vunpack.c.l.b16 %v204
    %v401 = vunpack.c.h.b16 %v204
    %v402 = vunpack.c.l.b16 %v205
    %v403 = vunpack.c.h.b16 %v205
    %v404 = vunpack.c.l.b16 %v206
    %v405 = vunpack.c.h.b16 %v206
    %v406 = vunpack.c.l.b16 %v207
    %v407 = vunpack.c.h.b16 %v207
    %v408 = vunpack.c.l.b16 %v208
    %v409 = vunpack.c.h.b16 %v208
    %v410 = vunpack.c.l.b16 %v209
    %v411 = vunpack.c.h.b16 %v209
    %v412 = vunpack.c.l.b16 %v210
    %v413 = vunpack.c.h.b16 %v210
    %v414 = vunpack.c.l.b16 %v211
    %v415 = vunpack.c.h.b16 %v211
    %v416 = vunpack.c.l.b16 %v212
    %v417 = vunpack.c.h.b16 %v212
    %v418 = vunpack.c.l.b16 %v213
    %v419 = vunpack.c.h.b16 %v213
    %v420 = vunpack.c.l.b16 %v214
    %v421 = vunpack.c.h.b16 %v214
    %v422 = vunpack.c.l.b16 %v215
    %v423 = vunpack.c.h.b16 %v215
    %v424 = vunpack.c.l.b16 %v216
    %v425 = vunpack.c.h.b16 %v216
    %v426 = vunpack.c.l.b16 %v217
    %v427 = vunpack.c.h.b16 %v217
    %v428 = vunpack.c.l.b16 %v218
    %v429 = vunpack.c.h.b16 %v218
    %v430 = vunpack.c.l.b16 %v219
    %v431 = vunpack.c.h.b16 %v219
    %v432 = vpack.c.b16 %v312, %v304
    %v433 = vpack.c.b16 %v313, %v305
    %v434 = vpack.c.b16 %v314, %v306
    %v435 = vpack.c.b16 %v315, %v307
    %v436 = vpack.c.b16 %v316, %v308
    %v437 = vpack.c.b16 %v317, %v309
    %v438 = vpack.c.b16 %v318, %v310
    %v439 = vpack.c.b16 %v319, %v311
    %v440 = vpack.c.b16 %v328, %v320
    %v441 = vpack.c.b16 %v329, %v321
    %v442 = vpack.c.b16 %v330, %v322
    %v443 = vpack.c.b16 %v331, %v323
    %v444 = vpack.c.b16 %v332, %v324
    %v445 = vpack.c.b16 %v333, %v325
    %v446 = vpack.c.b16 %v334, %v326
    %v447 = vpack.c.b16 %v335, %v327
    %v448 = vpack.c.b16 %v344, %v336
    %v449 = vpack.c.b16 %v345, %v337
    %v450 = vpack.c.b16 %v346, %v338
    %v451 = vpack.c.b16 %v347, %v339
    %v452 = vpack.c.b16 %v348, %v340
    %v453 = vpack.c.b16 %v349, %v341
    %v454 = vpack.c.b16 %v350, %v342
    %v455 = vpack.c.b16 %v351, %v343
    %v456 = vpack.c.b16 %v360, %v352
    %v457 = vpack.c.b16 %v361, %v353
    %v458 = vpack.c.b16 %v362, %v354
    %v459 = vpack.c.b16 %v363, %v355
    %v460 = vpack.c.b16 %v364, %v356
    %v461 = vpack.c.b16 %v365, %v357
    %v462 = vpack.c.b16 %v366, %v358
    %v463 = vpack.c.b16 %v367, %v359
    %v464 = vpack.c.b16 %v376, %v368
    %v465 = vpack.c.b16 %v377, %v369
    %v466 = vpack.c.b16 %v378, %v370
    %v467 = vpack.c.b16 %v379, %v371
    %v468 = vpack.c.b16 %v380, %v372
    %v469 = vpack.c.b16 %v381, %v373
    %v470 = vpack.c.b16 %v382, %v374
    %v471 = vpack.c.b16 %v383, %v375
    %v472 = vpack.c.b16 %v392, %v384
    %v473 = vpack.c.b16 %v393, %v385
    %v474 = vpack.c.b16 %v394, %v386
    %v475 = vpack.c.b16 %v395, %v387
    %v476 = vpack.c.b16 %v396, %v388
    %v477 = vpack.c.b16 %v397, %v389
    %v478 = vpack.c.b16 %v398, %v390
    %v479 = vpack.c.b16 %v399, %v391
    %v480 = vpack.c.b16 %v408, %v400
    %v481 = vpack.c.b16 %v409, %v401
    %v482 = vpack.c.b16 %v410, %v402
    %v483 = vpack.c.b16 %v411, %v403
    %v484 = vpack.c.b16 %v412, %v404
    %v485 = vpack.c.b16 %v413, %v405
    %v486 = vpack.c.b16 %v414, %v406
    %v487 = vpack.c.b16 %v415, %v407
    %v488 = vpack.c.b16 %v424, %v416
    %v489 = vpack.c.b16 %v425, %v417
    %v490 = vpack.c.b16 %v426, %v418
    %v491 = vpack.c.b16 %v427, %v419
    %v492 = vpack.c.b16 %v428, %v420
    %v493 = vpack.c.b16 %v429, %v421
    %v494 = vpack.c.b16 %v430, %v422
    %v495 = vpack.c.b16 %v431, %v423
    %560 = vmatpush.bf16.msra.mxu0 %v488
    %561 = vmatpush.bf16.msra.mxu0 %v480
    %562 = vmatpush.bf16.msra.mxu0 %v472
    %563 = vmatpush.bf16.msra.mxu0 %v464
    %564 = vmatpush.bf16.msra.mxu0 %v456
    %565 = vmatpush.bf16.msra.mxu0 %v448
    %566 = vmatpush.bf16.msra.mxu0 %v440
    %567 = vmatpush.bf16.msra.mxu0 %v432
    %568 = vmatmul.bf16.gmra.mxu0 %v155
    %v569 = vpop.f32.mrf.mxu0
    %v570 = vadd.f32 %v224, %v569
    %v571 = vpop.f32.mrf.mxu0
    %572 = vdwg.mxu0
    %573 = vmatpush.bf16.msra.mxu0 %v489
    %574 = vmatpush.bf16.msra.mxu0 %v481
    %575 = vmatpush.bf16.msra.mxu0 %v473
    %576 = vmatpush.bf16.msra.mxu0 %v465
    %577 = vmatpush.bf16.msra.mxu0 %v457
    %578 = vmatpush.bf16.msra.mxu0 %v449
    %579 = vmatpush.bf16.msra.mxu0 %v441
    %580 = vmatpush.bf16.msra.mxu0 %v433
    %581 = vmatmul.bf16.gmra.mxu0 %v155
    %v582 = vpop.f32.mrf.mxu0
    %v583 = vadd.f32 %v225, %v582
    %v584 = vpop.f32.mrf.mxu0
    %585 = vdwg.mxu0
    %586 = vmatpush.bf16.msra.mxu0 %v490
    %587 = vmatpush.bf16.msra.mxu0 %v482
    %588 = vmatpush.bf16.msra.mxu0 %v474
    %589 = vmatpush.bf16.msra.mxu0 %v466
    %590 = vmatpush.bf16.msra.mxu0 %v458
    %591 = vmatpush.bf16.msra.mxu0 %v450
    %592 = vmatpush.bf16.msra.mxu0 %v442
    %593 = vmatpush.bf16.msra.mxu0 %v434
    %594 = vmatmul.bf16.gmra.mxu0 %v155
    %v595 = vpop.f32.mrf.mxu0
    %v596 = vadd.f32 %v226, %v595
    %v597 = vpop.f32.mrf.mxu0
    %598 = vdwg.mxu0
    %599 = vmatpush.bf16.msra.mxu0 %v491
    %600 = vmatpush.bf16.msra.mxu0 %v483
    %601 = vmatpush.bf16.msra.mxu0 %v475
    %602 = vmatpush.bf16.msra.mxu0 %v467
    %603 = vmatpush.bf16.msra.mxu0 %v459
    %604 = vmatpush.bf16.msra.mxu0 %v451
    %605 = vmatpush.bf16.msra.mxu0 %v443
    %606 = vmatpush.bf16.msra.mxu0 %v435
    %607 = vmatmul.bf16.gmra.mxu0 %v155
    %v608 = vpop.f32.mrf.mxu0
    %v609 = vadd.f32 %v227, %v608
    %v610 = vpop.f32.mrf.mxu0
    %611 = vdwg.mxu0
    %612 = vmatpush.bf16.msra.mxu0 %v492
    %613 = vmatpush.bf16.msra.mxu0 %v484
    %614 = vmatpush.bf16.msra.mxu0 %v476
    %615 = vmatpush.bf16.msra.mxu0 %v468
    %616 = vmatpush.bf16.msra.mxu0 %v460
    %617 = vmatpush.bf16.msra.mxu0 %v452
    %618 = vmatpush.bf16.msra.mxu0 %v444
    %619 = vmatpush.bf16.msra.mxu0 %v436
    %620 = vmatmul.bf16.gmra.mxu0 %v155
    %v621 = vpop.f32.mrf.mxu0
    %v622 = vadd.f32 %v228, %v621
    %v623 = vpop.f32.mrf.mxu0
    %624 = vdwg.mxu0
    %625 = vmatpush.bf16.msra.mxu0 %v493
    %626 = vmatpush.bf16.msra.mxu0 %v485
    %627 = vmatpush.bf16.msra.mxu0 %v477
    %628 = vmatpush.bf16.msra.mxu0 %v469
    %629 = vmatpush.bf16.msra.mxu0 %v461
    %630 = vmatpush.bf16.msra.mxu0 %v453
    %631 = vmatpush.bf16.msra.mxu0 %v445
    %632 = vmatpush.bf16.msra.mxu0 %v437
    %633 = vmatmul.bf16.gmra.mxu0 %v155
    %v634 = vpop.f32.mrf.mxu0
    %v635 = vadd.f32 %v229, %v634
    %v636 = vpop.f32.mrf.mxu0
    %637 = vdwg.mxu0
    %638 = vmatpush.bf16.msra.mxu0 %v494
    %639 = vmatpush.bf16.msra.mxu0 %v486
    %640 = vmatpush.bf16.msra.mxu0 %v478
    %641 = vmatpush.bf16.msra.mxu0 %v470
    %642 = vmatpush.bf16.msra.mxu0 %v462
    %643 = vmatpush.bf16.msra.mxu0 %v454
    %644 = vmatpush.bf16.msra.mxu0 %v446
    %645 = vmatpush.bf16.msra.mxu0 %v438
    %646 = vmatmul.bf16.gmra.mxu0 %v155
    %v647 = vpop.f32.mrf.mxu0
    %v648 = vadd.f32 %v230, %v647
    %v649 = vpop.f32.mrf.mxu0
    %650 = vdwg.mxu0
    %651 = vmatpush.bf16.msra.mxu0 %v495
    %652 = vmatpush.bf16.msra.mxu0 %v487
    %653 = vmatpush.bf16.msra.mxu0 %v479
    %654 = vmatpush.bf16.msra.mxu0 %v471
    %655 = vmatpush.bf16.msra.mxu0 %v463
    %656 = vmatpush.bf16.msra.mxu0 %v455
    %657 = vmatpush.bf16.msra.mxu0 %v447
    %658 = vmatpush.bf16.msra.mxu0 %v439
    %659 = vmatmul.bf16.gmra.mxu0 %v155
    %v660 = vpop.f32.mrf.mxu0
    %v661 = vadd.f32 %v231, %v660
    %v662 = vpop.f32.mrf.mxu0
    %663 = vdwg.mxu0
    %v664 = vmax.f32 %v570, 0.0
    %v665 = vmax.f32 %v583, 0.0
    %v666 = vmax.f32 %v596, 0.0
    %v667 = vmax.f32 %v609, 0.0
    %v668 = vmax.f32 %v622, 0.0
    %v669 = vmax.f32 %v635, 0.0
    %v670 = vmax.f32 %v648, 0.0
    %v671 = vmax.f32 %v661, 0.0
    %v672 = vpack.c.bf16 %v664, %v664
    %v673 = vpack.c.bf16 %v665, %v665
    %v674 = vpack.c.bf16 %v666, %v666
    %v675 = vpack.c.bf16 %v667, %v667
    %v676 = vpack.c.bf16 %v668, %v668
    %v677 = vpack.c.bf16 %v669, %v669
    %v678 = vpack.c.bf16 %v670, %v670
    %v679 = vpack.c.bf16 %v671, %v671
    %v680 = vld [vmem:[#allocation7] sm:$0xff]
    %v681 = vld [vmem:[#allocation7 + $0x8] sm:$0xff]
    %v682 = vld [vmem:[#allocation7 + $0x10] sm:$0xff]
    %v683 = vld [vmem:[#allocation7 + $0x18] sm:$0xff]
    %v684 = vld [vmem:[#allocation7 + $0x20] sm:$0xff]
    %v685 = vld [vmem:[#allocation7 + $0x28] sm:$0xff]
    %v686 = vld [vmem:[#allocation7 + $0x30] sm:$0xff]
    %v687 = vld [vmem:[#allocation7 + $0x38] sm:$0xff]
    %v688 = vld [vmem:[#allocation7 + $0x40] sm:$0xff]
    %v689 = vld [vmem:[#allocation7 + $0x48] sm:$0xff]
    %v690 = vld [vmem:[#allocation7 + $0x50] sm:$0xff]
    %v691 = vld [vmem:[#allocation7 + $0x58] sm:$0xff]
    %v692 = vld [vmem:[#allocation7 + $0x60] sm:$0xff]
    %v693 = vld [vmem:[#allocation7 + $0x68] sm:$0xff]
    %v694 = vld [vmem:[#allocation7 + $0x70] sm:$0xff]
    %v695 = vld [vmem:[#allocation7 + $0x78] sm:$0xff]
    %v696 = vld [vmem:[#allocation7 + $0x80] sm:$0xff]
    %v697 = vld [vmem:[#allocation7 + $0x88] sm:$0xff]
    %v698 = vld [vmem:[#allocation7 + $0x90] sm:$0xff]
    %v699 = vld [vmem:[#allocation7 + $0x98] sm:$0xff]
    %v700 = vld [vmem:[#allocation7 + $0xa0] sm:$0xff]
    %v701 = vld [vmem:[#allocation7 + $0xa8] sm:$0xff]
    %v702 = vld [vmem:[#allocation7 + $0xb0] sm:$0xff]
    %v703 = vld [vmem:[#allocation7 + $0xb8] sm:$0xff]
    %v704 = vld [vmem:[#allocation7 + $0xc0] sm:$0xff]
    %v705 = vld [vmem:[#allocation7 + $0xc8] sm:$0xff]
    %v706 = vld [vmem:[#allocation7 + $0xd0] sm:$0xff]
    %v707 = vld [vmem:[#allocation7 + $0xd8] sm:$0xff]
    %v708 = vld [vmem:[#allocation7 + $0xe0] sm:$0xff]
    %v709 = vld [vmem:[#allocation7 + $0xe8] sm:$0xff]
    %v710 = vld [vmem:[#allocation7 + $0xf0] sm:$0xff]
    %v711 = vld [vmem:[#allocation7 + $0xf8] sm:$0xff]
    %v712 = vld [vmem:[#allocation7 + $0x100] sm:$0xff]
    %v713 = vld [vmem:[#allocation7 + $0x108] sm:$0xff]
    %v714 = vld [vmem:[#allocation7 + $0x110] sm:$0xff]
    %v715 = vld [vmem:[#allocation7 + $0x118] sm:$0xff]
    %v716 = vld [vmem:[#allocation7 + $0x120] sm:$0xff]
    %v717 = vld [vmem:[#allocation7 + $0x128] sm:$0xff]
    %v718 = vld [vmem:[#allocation7 + $0x130] sm:$0xff]
    %v719 = vld [vmem:[#allocation7 + $0x138] sm:$0xff]
    %v720 = vld [vmem:[#allocation7 + $0x140] sm:$0xff]
    %v721 = vld [vmem:[#allocation7 + $0x148] sm:$0xff]
    %v722 = vld [vmem:[#allocation7 + $0x150] sm:$0xff]
    %v723 = vld [vmem:[#allocation7 + $0x158] sm:$0xff]
    %v724 = vld [vmem:[#allocation7 + $0x160] sm:$0xff]
    %v725 = vld [vmem:[#allocation7 + $0x168] sm:$0xff]
    %v726 = vld [vmem:[#allocation7 + $0x170] sm:$0xff]
    %v727 = vld [vmem:[#allocation7 + $0x178] sm:$0xff]
    %v728 = vld [vmem:[#allocation7 + $0x180] sm:$0xff]
    %v729 = vld [vmem:[#allocation7 + $0x188] sm:$0xff]
    %v730 = vld [vmem:[#allocation7 + $0x190] sm:$0xff]
    %v731 = vld [vmem:[#allocation7 + $0x198] sm:$0xff]
    %v732 = vld [vmem:[#allocation7 + $0x1a0] sm:$0xff]
    %v733 = vld [vmem:[#allocation7 + $0x1a8] sm:$0xff]
    %v734 = vld [vmem:[#allocation7 + $0x1b0] sm:$0xff]
    %v735 = vld [vmem:[#allocation7 + $0x1b8] sm:$0xff]
    %v736 = vld [vmem:[#allocation7 + $0x1c0] sm:$0xff]
    %v737 = vld [vmem:[#allocation7 + $0x1c8] sm:$0xff]
    %v738 = vld [vmem:[#allocation7 + $0x1d0] sm:$0xff]
    %v739 = vld [vmem:[#allocation7 + $0x1d8] sm:$0xff]
    %v740 = vld [vmem:[#allocation7 + $0x1e0] sm:$0xff]
    %v741 = vld [vmem:[#allocation7 + $0x1e8] sm:$0xff]
    %v742 = vld [vmem:[#allocation7 + $0x1f0] sm:$0xff]
    %v743 = vld [vmem:[#allocation7 + $0x1f8] sm:$0xff]
    %v744 = vld [vmem:[#allocation7 + $0x200] sm:$0xff]
    %v745 = vld [vmem:[#allocation7 + $0x208] sm:$0xff]
    %v746 = vld [vmem:[#allocation7 + $0x210] sm:$0xff]
    %v747 = vld [vmem:[#allocation7 + $0x218] sm:$0xff]
    %v748 = vld [vmem:[#allocation7 + $0x220] sm:$0xff]
    %v749 = vld [vmem:[#allocation7 + $0x228] sm:$0xff]
    %v750 = vld [vmem:[#allocation7 + $0x230] sm:$0xff]
    %v751 = vld [vmem:[#allocation7 + $0x238] sm:$0xff]
    %v752 = vld [vmem:[#allocation7 + $0x240] sm:$0xff]
    %v753 = vld [vmem:[#allocation7 + $0x248] sm:$0xff]
    %v754 = vld [vmem:[#allocation7 + $0x250] sm:$0xff]
    %v755 = vld [vmem:[#allocation7 + $0x258] sm:$0xff]
    %v756 = vld [vmem:[#allocation7 + $0x260] sm:$0xff]
    %v757 = vld [vmem:[#allocation7 + $0x268] sm:$0xff]
    %v758 = vld [vmem:[#allocation7 + $0x270] sm:$0xff]
    %v759 = vld [vmem:[#allocation7 + $0x278] sm:$0xff]
    %v760 = vld [vmem:[#allocation7 + $0x280] sm:$0xff]
    %v761 = vld [vmem:[#allocation7 + $0x288] sm:$0xff]
    %v762 = vld [vmem:[#allocation7 + $0x290] sm:$0xff]
    %v763 = vld [vmem:[#allocation7 + $0x298] sm:$0xff]
    %v764 = vld [vmem:[#allocation7 + $0x2a0] sm:$0xff]
    %v765 = vld [vmem:[#allocation7 + $0x2a8] sm:$0xff]
    %v766 = vld [vmem:[#allocation7 + $0x2b0] sm:$0xff]
    %v767 = vld [vmem:[#allocation7 + $0x2b8] sm:$0xff]
    %v768 = vld [vmem:[#allocation7 + $0x2c0] sm:$0xff]
    %v769 = vld [vmem:[#allocation7 + $0x2c8] sm:$0xff]
    %v770 = vld [vmem:[#allocation7 + $0x2d0] sm:$0xff]
    %v771 = vld [vmem:[#allocation7 + $0x2d8] sm:$0xff]
    %v772 = vld [vmem:[#allocation7 + $0x2e0] sm:$0xff]
    %v773 = vld [vmem:[#allocation7 + $0x2e8] sm:$0xff]
    %v774 = vld [vmem:[#allocation7 + $0x2f0] sm:$0xff]
    %v775 = vld [vmem:[#allocation7 + $0x2f8] sm:$0xff]
    %v776 = vld [vmem:[#allocation7 + $0x300] sm:$0xff]
    %v777 = vld [vmem:[#allocation7 + $0x308] sm:$0xff]
    %v778 = vld [vmem:[#allocation7 + $0x310] sm:$0xff]
    %v779 = vld [vmem:[#allocation7 + $0x318] sm:$0xff]
    %v780 = vld [vmem:[#allocation7 + $0x320] sm:$0xff]
    %v781 = vld [vmem:[#allocation7 + $0x328] sm:$0xff]
    %v782 = vld [vmem:[#allocation7 + $0x330] sm:$0xff]
    %v783 = vld [vmem:[#allocation7 + $0x338] sm:$0xff]
    %v784 = vld [vmem:[#allocation7 + $0x340] sm:$0xff]
    %v785 = vld [vmem:[#allocation7 + $0x348] sm:$0xff]
    %v786 = vld [vmem:[#allocation7 + $0x350] sm:$0xff]
    %v787 = vld [vmem:[#allocation7 + $0x358] sm:$0xff]
    %v788 = vld [vmem:[#allocation7 + $0x360] sm:$0xff]
    %v789 = vld [vmem:[#allocation7 + $0x368] sm:$0xff]
    %v790 = vld [vmem:[#allocation7 + $0x370] sm:$0xff]
    %v791 = vld [vmem:[#allocation7 + $0x378] sm:$0xff]
    %v792 = vld [vmem:[#allocation7 + $0x380] sm:$0xff]
    %v793 = vld [vmem:[#allocation7 + $0x388] sm:$0xff]
    %v794 = vld [vmem:[#allocation7 + $0x390] sm:$0xff]
    %v795 = vld [vmem:[#allocation7 + $0x398] sm:$0xff]
    %v796 = vld [vmem:[#allocation7 + $0x3a0] sm:$0xff]
    %v797 = vld [vmem:[#allocation7 + $0x3a8] sm:$0xff]
    %v798 = vld [vmem:[#allocation7 + $0x3b0] sm:$0xff]
    %v799 = vld [vmem:[#allocation7 + $0x3b8] sm:$0xff]
    %v800 = vld [vmem:[#allocation7 + $0x3c0] sm:$0xff]
    %v801 = vld [vmem:[#allocation7 + $0x3c8] sm:$0xff]
    %v802 = vld [vmem:[#allocation7 + $0x3d0] sm:$0xff]
    %v803 = vld [vmem:[#allocation7 + $0x3d8] sm:$0xff]
    %v804 = vld [vmem:[#allocation7 + $0x3e0] sm:$0xff]
    %v805 = vld [vmem:[#allocation7 + $0x3e8] sm:$0xff]
    %v806 = vld [vmem:[#allocation7 + $0x3f0] sm:$0xff]
    %v807 = vld [vmem:[#allocation7 + $0x3f8] sm:$0xff]
    %v808 = vld [vmem:[#allocation7 + $0x400] sm:$0xff]
    %v809 = vld [vmem:[#allocation7 + $0x408] sm:$0xff]
    %v810 = vld [vmem:[#allocation7 + $0x410] sm:$0xff]
    %v811 = vld [vmem:[#allocation7 + $0x418] sm:$0xff]
    %v812 = vld [vmem:[#allocation7 + $0x420] sm:$0xff]
    %v813 = vld [vmem:[#allocation7 + $0x428] sm:$0xff]
    %v814 = vld [vmem:[#allocation7 + $0x430] sm:$0xff]
    %v815 = vld [vmem:[#allocation7 + $0x438] sm:$0xff]
    %v816 = vld [vmem:[#allocation7 + $0x440] sm:$0xff]
    %v817 = vld [vmem:[#allocation7 + $0x448] sm:$0xff]
    %v818 = vld [vmem:[#allocation7 + $0x450] sm:$0xff]
    %v819 = vld [vmem:[#allocation7 + $0x458] sm:$0xff]
    %v820 = vld [vmem:[#allocation7 + $0x460] sm:$0xff]
    %v821 = vld [vmem:[#allocation7 + $0x468] sm:$0xff]
    %v822 = vld [vmem:[#allocation7 + $0x470] sm:$0xff]
    %v823 = vld [vmem:[#allocation7 + $0x478] sm:$0xff]
    %v824 = vld [vmem:[#allocation7 + $0x480] sm:$0xff]
    %v825 = vld [vmem:[#allocation7 + $0x488] sm:$0xff]
    %v826 = vld [vmem:[#allocation7 + $0x490] sm:$0xff]
    %v827 = vld [vmem:[#allocation7 + $0x498] sm:$0xff]
    %v828 = vld [vmem:[#allocation7 + $0x4a0] sm:$0xff]
    %v829 = vld [vmem:[#allocation7 + $0x4a8] sm:$0xff]
    %v830 = vld [vmem:[#allocation7 + $0x4b0] sm:$0xff]
    %v831 = vld [vmem:[#allocation7 + $0x4b8] sm:$0xff]
    %v832 = vld [vmem:[#allocation7 + $0x4c0] sm:$0xff]
    %v833 = vld [vmem:[#allocation7 + $0x4c8] sm:$0xff]
    %v834 = vld [vmem:[#allocation7 + $0x4d0] sm:$0xff]
    %v835 = vld [vmem:[#allocation7 + $0x4d8] sm:$0xff]
    %v836 = vld [vmem:[#allocation7 + $0x4e0] sm:$0xff]
    %v837 = vld [vmem:[#allocation7 + $0x4e8] sm:$0xff]
    %v838 = vld [vmem:[#allocation7 + $0x4f0] sm:$0xff]
    %v839 = vld [vmem:[#allocation7 + $0x4f8] sm:$0xff]
    %v840 = vld [vmem:[#allocation7 + $0x500] sm:$0xff]
    %v841 = vld [vmem:[#allocation7 + $0x508] sm:$0xff]
    %v842 = vld [vmem:[#allocation7 + $0x510] sm:$0xff]
    %v843 = vld [vmem:[#allocation7 + $0x518] sm:$0xff]
    %v844 = vld [vmem:[#allocation7 + $0x520] sm:$0xff]
    %v845 = vld [vmem:[#allocation7 + $0x528] sm:$0xff]
    %v846 = vld [vmem:[#allocation7 + $0x530] sm:$0xff]
    %v847 = vld [vmem:[#allocation7 + $0x538] sm:$0xff]
    %v848 = vld [vmem:[#allocation7 + $0x540] sm:$0xff]
    %v849 = vld [vmem:[#allocation7 + $0x548] sm:$0xff]
    %v850 = vld [vmem:[#allocation7 + $0x550] sm:$0xff]
    %v851 = vld [vmem:[#allocation7 + $0x558] sm:$0xff]
    %v852 = vld [vmem:[#allocation7 + $0x560] sm:$0xff]
    %v853 = vld [vmem:[#allocation7 + $0x568] sm:$0xff]
    %v854 = vld [vmem:[#allocation7 + $0x570] sm:$0xff]
    %v855 = vld [vmem:[#allocation7 + $0x578] sm:$0xff]
    %v856 = vld [vmem:[#allocation7 + $0x580] sm:$0xff]
    %v857 = vld [vmem:[#allocation7 + $0x588] sm:$0xff]
    %v858 = vld [vmem:[#allocation7 + $0x590] sm:$0xff]
    %v859 = vld [vmem:[#allocation7 + $0x598] sm:$0xff]
    %v860 = vld [vmem:[#allocation7 + $0x5a0] sm:$0xff]
    %v861 = vld [vmem:[#allocation7 + $0x5a8] sm:$0xff]
    %v862 = vld [vmem:[#allocation7 + $0x5b0] sm:$0xff]
    %v863 = vld [vmem:[#allocation7 + $0x5b8] sm:$0xff]
    %v864 = vld [vmem:[#allocation7 + $0x5c0] sm:$0xff]
    %v865 = vld [vmem:[#allocation7 + $0x5c8] sm:$0xff]
    %v866 = vld [vmem:[#allocation7 + $0x5d0] sm:$0xff]
    %v867 = vld [vmem:[#allocation7 + $0x5d8] sm:$0xff]
    %v868 = vld [vmem:[#allocation7 + $0x5e0] sm:$0xff]
    %v869 = vld [vmem:[#allocation7 + $0x5e8] sm:$0xff]
    %v870 = vld [vmem:[#allocation7 + $0x5f0] sm:$0xff]
    %v871 = vld [vmem:[#allocation7 + $0x5f8] sm:$0xff]
    %v872 = vld [vmem:[#allocation7 + $0x600] sm:$0xff]
    %v873 = vld [vmem:[#allocation7 + $0x608] sm:$0xff]
    %v874 = vld [vmem:[#allocation7 + $0x610] sm:$0xff]
    %v875 = vld [vmem:[#allocation7 + $0x618] sm:$0xff]
    %v876 = vld [vmem:[#allocation7 + $0x620] sm:$0xff]
    %v877 = vld [vmem:[#allocation7 + $0x628] sm:$0xff]
    %v878 = vld [vmem:[#allocation7 + $0x630] sm:$0xff]
    %v879 = vld [vmem:[#allocation7 + $0x638] sm:$0xff]
    %v880 = vld [vmem:[#allocation7 + $0x640] sm:$0xff]
    %v881 = vld [vmem:[#allocation7 + $0x648] sm:$0xff]
    %v882 = vld [vmem:[#allocation7 + $0x650] sm:$0xff]
    %v883 = vld [vmem:[#allocation7 + $0x658] sm:$0xff]
    %v884 = vld [vmem:[#allocation7 + $0x660] sm:$0xff]
    %v885 = vld [vmem:[#allocation7 + $0x668] sm:$0xff]
    %v886 = vld [vmem:[#allocation7 + $0x670] sm:$0xff]
    %v887 = vld [vmem:[#allocation7 + $0x678] sm:$0xff]
    %v888 = vld [vmem:[#allocation7 + $0x680] sm:$0xff]
    %v889 = vld [vmem:[#allocation7 + $0x688] sm:$0xff]
    %v890 = vld [vmem:[#allocation7 + $0x690] sm:$0xff]
    %v891 = vld [vmem:[#allocation7 + $0x698] sm:$0xff]
    %v892 = vld [vmem:[#allocation7 + $0x6a0] sm:$0xff]
    %v893 = vld [vmem:[#allocation7 + $0x6a8] sm:$0xff]
    %v894 = vld [vmem:[#allocation7 + $0x6b0] sm:$0xff]
    %v895 = vld [vmem:[#allocation7 + $0x6b8] sm:$0xff]
    %v896 = vld [vmem:[#allocation7 + $0x6c0] sm:$0xff]
    %v897 = vld [vmem:[#allocation7 + $0x6c8] sm:$0xff]
    %v898 = vld [vmem:[#allocation7 + $0x6d0] sm:$0xff]
    %v899 = vld [vmem:[#allocation7 + $0x6d8] sm:$0xff]
    %v900 = vld [vmem:[#allocation7 + $0x6e0] sm:$0xff]
    %v901 = vld [vmem:[#allocation7 + $0x6e8] sm:$0xff]
    %v902 = vld [vmem:[#allocation7 + $0x6f0] sm:$0xff]
    %v903 = vld [vmem:[#allocation7 + $0x6f8] sm:$0xff]
    %v904 = vld [vmem:[#allocation7 + $0x700] sm:$0xff]
    %v905 = vld [vmem:[#allocation7 + $0x708] sm:$0xff]
    %v906 = vld [vmem:[#allocation7 + $0x710] sm:$0xff]
    %v907 = vld [vmem:[#allocation7 + $0x718] sm:$0xff]
    %v908 = vld [vmem:[#allocation7 + $0x720] sm:$0xff]
    %v909 = vld [vmem:[#allocation7 + $0x728] sm:$0xff]
    %v910 = vld [vmem:[#allocation7 + $0x730] sm:$0xff]
    %v911 = vld [vmem:[#allocation7 + $0x738] sm:$0xff]
    %v912 = vld [vmem:[#allocation7 + $0x740] sm:$0xff]
    %v913 = vld [vmem:[#allocation7 + $0x748] sm:$0xff]
    %v914 = vld [vmem:[#allocation7 + $0x750] sm:$0xff]
    %v915 = vld [vmem:[#allocation7 + $0x758] sm:$0xff]
    %v916 = vld [vmem:[#allocation7 + $0x760] sm:$0xff]
    %v917 = vld [vmem:[#allocation7 + $0x768] sm:$0xff]
    %v918 = vld [vmem:[#allocation7 + $0x770] sm:$0xff]
    %v919 = vld [vmem:[#allocation7 + $0x778] sm:$0xff]
    %v920 = vld [vmem:[#allocation7 + $0x780] sm:$0xff]
    %v921 = vld [vmem:[#allocation7 + $0x788] sm:$0xff]
    %v922 = vld [vmem:[#allocation7 + $0x790] sm:$0xff]
    %v923 = vld [vmem:[#allocation7 + $0x798] sm:$0xff]
    %v924 = vld [vmem:[#allocation7 + $0x7a0] sm:$0xff]
    %v925 = vld [vmem:[#allocation7 + $0x7a8] sm:$0xff]
    %v926 = vld [vmem:[#allocation7 + $0x7b0] sm:$0xff]
    %v927 = vld [vmem:[#allocation7 + $0x7b8] sm:$0xff]
    %v928 = vld [vmem:[#allocation7 + $0x7c0] sm:$0xff]
    %v929 = vld [vmem:[#allocation7 + $0x7c8] sm:$0xff]
    %v930 = vld [vmem:[#allocation7 + $0x7d0] sm:$0xff]
    %v931 = vld [vmem:[#allocation7 + $0x7d8] sm:$0xff]
    %v932 = vld [vmem:[#allocation7 + $0x7e0] sm:$0xff]
    %v933 = vld [vmem:[#allocation7 + $0x7e8] sm:$0xff]
    %v934 = vld [vmem:[#allocation7 + $0x7f0] sm:$0xff]
    %v935 = vld [vmem:[#allocation7 + $0x7f8] sm:$0xff]
    %v936 = vld [vmem:[#allocation7 + $0x800] sm:$0xff]
    %v937 = vld [vmem:[#allocation7 + $0x808] sm:$0xff]
    %v938 = vld [vmem:[#allocation7 + $0x810] sm:$0xff]
    %v939 = vld [vmem:[#allocation7 + $0x818] sm:$0xff]
    %v940 = vld [vmem:[#allocation7 + $0x820] sm:$0xff]
    %v941 = vld [vmem:[#allocation7 + $0x828] sm:$0xff]
    %v942 = vld [vmem:[#allocation7 + $0x830] sm:$0xff]
    %v943 = vld [vmem:[#allocation7 + $0x838] sm:$0xff]
    %v944 = vld [vmem:[#allocation7 + $0x840] sm:$0xff]
    %v945 = vld [vmem:[#allocation7 + $0x848] sm:$0xff]
    %v946 = vld [vmem:[#allocation7 + $0x850] sm:$0xff]
    %v947 = vld [vmem:[#allocation7 + $0x858] sm:$0xff]
    %v948 = vld [vmem:[#allocation7 + $0x860] sm:$0xff]
    %v949 = vld [vmem:[#allocation7 + $0x868] sm:$0xff]
    %v950 = vld [vmem:[#allocation7 + $0x870] sm:$0xff]
    %v951 = vld [vmem:[#allocation7 + $0x878] sm:$0xff]
    %v952 = vld [vmem:[#allocation7 + $0x880] sm:$0xff]
    %v953 = vld [vmem:[#allocation7 + $0x888] sm:$0xff]
    %v954 = vld [vmem:[#allocation7 + $0x890] sm:$0xff]
    %v955 = vld [vmem:[#allocation7 + $0x898] sm:$0xff]
    %v956 = vld [vmem:[#allocation7 + $0x8a0] sm:$0xff]
    %v957 = vld [vmem:[#allocation7 + $0x8a8] sm:$0xff]
    %v958 = vld [vmem:[#allocation7 + $0x8b0] sm:$0xff]
    %v959 = vld [vmem:[#allocation7 + $0x8b8] sm:$0xff]
    %v960 = vld [vmem:[#allocation7 + $0x8c0] sm:$0xff]
    %v961 = vld [vmem:[#allocation7 + $0x8c8] sm:$0xff]
    %v962 = vld [vmem:[#allocation7 + $0x8d0] sm:$0xff]
    %v963 = vld [vmem:[#allocation7 + $0x8d8] sm:$0xff]
    %v964 = vld [vmem:[#allocation7 + $0x8e0] sm:$0xff]
    %v965 = vld [vmem:[#allocation7 + $0x8e8] sm:$0xff]
    %v966 = vld [vmem:[#allocation7 + $0x8f0] sm:$0xff]
    %v967 = vld [vmem:[#allocation7 + $0x8f8] sm:$0xff]
    %v968 = vld [vmem:[#allocation7 + $0x900] sm:$0xff]
    %v969 = vld [vmem:[#allocation7 + $0x908] sm:$0xff]
    %v970 = vld [vmem:[#allocation7 + $0x910] sm:$0xff]
    %v971 = vld [vmem:[#allocation7 + $0x918] sm:$0xff]
    %v972 = vld [vmem:[#allocation7 + $0x920] sm:$0xff]
    %v973 = vld [vmem:[#allocation7 + $0x928] sm:$0xff]
    %v974 = vld [vmem:[#allocation7 + $0x930] sm:$0xff]
    %v975 = vld [vmem:[#allocation7 + $0x938] sm:$0xff]
    %v976 = vld [vmem:[#allocation7 + $0x940] sm:$0xff]
    %v977 = vld [vmem:[#allocation7 + $0x948] sm:$0xff]
    %v978 = vld [vmem:[#allocation7 + $0x950] sm:$0xff]
    %v979 = vld [vmem:[#allocation7 + $0x958] sm:$0xff]
    %v980 = vld [vmem:[#allocation7 + $0x960] sm:$0xff]
    %v981 = vld [vmem:[#allocation7 + $0x968] sm:$0xff]
    %v982 = vld [vmem:[#allocation7 + $0x970] sm:$0xff]
    %v983 = vld [vmem:[#allocation7 + $0x978] sm:$0xff]
    %v984 = vld [vmem:[#allocation7 + $0x980] sm:$0xff]
    %v985 = vld [vmem:[#allocation7 + $0x988] sm:$0xff]
    %v986 = vld [vmem:[#allocation7 + $0x990] sm:$0xff]
    %v987 = vld [vmem:[#allocation7 + $0x998] sm:$0xff]
    %v988 = vld [vmem:[#allocation7 + $0x9a0] sm:$0xff]
    %v989 = vld [vmem:[#allocation7 + $0x9a8] sm:$0xff]
    %v990 = vld [vmem:[#allocation7 + $0x9b0] sm:$0xff]
    %v991 = vld [vmem:[#allocation7 + $0x9b8] sm:$0xff]
    %v992 = vld [vmem:[#allocation7 + $0x9c0] sm:$0xff]
    %v993 = vld [vmem:[#allocation7 + $0x9c8] sm:$0xff]
    %v994 = vld [vmem:[#allocation7 + $0x9d0] sm:$0xff]
    %v995 = vld [vmem:[#allocation7 + $0x9d8] sm:$0xff]
    %v996 = vld [vmem:[#allocation7 + $0x9e0] sm:$0xff]
    %v997 = vld [vmem:[#allocation7 + $0x9e8] sm:$0xff]
    %v998 = vld [vmem:[#allocation7 + $0x9f0] sm:$0xff]
    %v999 = vld [vmem:[#allocation7 + $0x9f8] sm:$0xff]
    %v1000 = vld [vmem:[#allocation7 + $0xa00] sm:$0xff]
    %v1001 = vld [vmem:[#allocation7 + $0xa08] sm:$0xff]
    %v1002 = vld [vmem:[#allocation7 + $0xa10] sm:$0xff]
    %v1003 = vld [vmem:[#allocation7 + $0xa18] sm:$0xff]
    %v1004 = vld [vmem:[#allocation7 + $0xa20] sm:$0xff]
    %v1005 = vld [vmem:[#allocation7 + $0xa28] sm:$0xff]
    %v1006 = vld [vmem:[#allocation7 + $0xa30] sm:$0xff]
    %v1007 = vld [vmem:[#allocation7 + $0xa38] sm:$0xff]
    %v1008 = vld [vmem:[#allocation7 + $0xa40] sm:$0xff]
    %v1009 = vld [vmem:[#allocation7 + $0xa48] sm:$0xff]
    %v1010 = vld [vmem:[#allocation7 + $0xa50] sm:$0xff]
    %v1011 = vld [vmem:[#allocation7 + $0xa58] sm:$0xff]
    %v1012 = vld [vmem:[#allocation7 + $0xa60] sm:$0xff]
    %v1013 = vld [vmem:[#allocation7 + $0xa68] sm:$0xff]
    %v1014 = vld [vmem:[#allocation7 + $0xa70] sm:$0xff]
    %v1015 = vld [vmem:[#allocation7 + $0xa78] sm:$0xff]
    %v1016 = vld [vmem:[#allocation7 + $0xa80] sm:$0xff]
    %v1017 = vld [vmem:[#allocation7 + $0xa88] sm:$0xff]
    %v1018 = vld [vmem:[#allocation7 + $0xa90] sm:$0xff]
    %v1019 = vld [vmem:[#allocation7 + $0xa98] sm:$0xff]
    %v1020 = vld [vmem:[#allocation7 + $0xaa0] sm:$0xff]
    %v1021 = vld [vmem:[#allocation7 + $0xaa8] sm:$0xff]
    %v1022 = vld [vmem:[#allocation7 + $0xab0] sm:$0xff]
    %v1023 = vld [vmem:[#allocation7 + $0xab8] sm:$0xff]
    %v1024 = vld [vmem:[#allocation7 + $0xac0] sm:$0xff]
    %v1025 = vld [vmem:[#allocation7 + $0xac8] sm:$0xff]
    %v1026 = vld [vmem:[#allocation7 + $0xad0] sm:$0xff]
    %v1027 = vld [vmem:[#allocation7 + $0xad8] sm:$0xff]
    %v1028 = vld [vmem:[#allocation7 + $0xae0] sm:$0xff]
    %v1029 = vld [vmem:[#allocation7 + $0xae8] sm:$0xff]
    %v1030 = vld [vmem:[#allocation7 + $0xaf0] sm:$0xff]
    %v1031 = vld [vmem:[#allocation7 + $0xaf8] sm:$0xff]
    %v1032 = vld [vmem:[#allocation7 + $0xb00] sm:$0xff]
    %v1033 = vld [vmem:[#allocation7 + $0xb08] sm:$0xff]
    %v1034 = vld [vmem:[#allocation7 + $0xb10] sm:$0xff]
    %v1035 = vld [vmem:[#allocation7 + $0xb18] sm:$0xff]
    %v1036 = vld [vmem:[#allocation7 + $0xb20] sm:$0xff]
    %v1037 = vld [vmem:[#allocation7 + $0xb28] sm:$0xff]
    %v1038 = vld [vmem:[#allocation7 + $0xb30] sm:$0xff]
    %v1039 = vld [vmem:[#allocation7 + $0xb38] sm:$0xff]
    %v1040 = vld [vmem:[#allocation7 + $0xb40] sm:$0xff]
    %v1041 = vld [vmem:[#allocation7 + $0xb48] sm:$0xff]
    %v1042 = vld [vmem:[#allocation7 + $0xb50] sm:$0xff]
    %v1043 = vld [vmem:[#allocation7 + $0xb58] sm:$0xff]
    %v1044 = vld [vmem:[#allocation7 + $0xb60] sm:$0xff]
    %v1045 = vld [vmem:[#allocation7 + $0xb68] sm:$0xff]
    %v1046 = vld [vmem:[#allocation7 + $0xb70] sm:$0xff]
    %v1047 = vld [vmem:[#allocation7 + $0xb78] sm:$0xff]
    %v1048 = vld [vmem:[#allocation7 + $0xb80] sm:$0xff]
    %v1049 = vld [vmem:[#allocation7 + $0xb88] sm:$0xff]
    %v1050 = vld [vmem:[#allocation7 + $0xb90] sm:$0xff]
    %v1051 = vld [vmem:[#allocation7 + $0xb98] sm:$0xff]
    %v1052 = vld [vmem:[#allocation7 + $0xba0] sm:$0xff]
    %v1053 = vld [vmem:[#allocation7 + $0xba8] sm:$0xff]
    %v1054 = vld [vmem:[#allocation7 + $0xbb0] sm:$0xff]
    %v1055 = vld [vmem:[#allocation7 + $0xbb8] sm:$0xff]
    %v1056 = vld [vmem:[#allocation7 + $0xbc0] sm:$0xff]
    %v1057 = vld [vmem:[#allocation7 + $0xbc8] sm:$0xff]
    %v1058 = vld [vmem:[#allocation7 + $0xbd0] sm:$0xff]
    %v1059 = vld [vmem:[#allocation7 + $0xbd8] sm:$0xff]
    %v1060 = vld [vmem:[#allocation7 + $0xbe0] sm:$0xff]
    %v1061 = vld [vmem:[#allocation7 + $0xbe8] sm:$0xff]
    %v1062 = vld [vmem:[#allocation7 + $0xbf0] sm:$0xff]
    %v1063 = vld [vmem:[#allocation7 + $0xbf8] sm:$0xff]
    %v1064 = vld [vmem:[#allocation7 + $0xc00] sm:$0xff]
    %v1065 = vld [vmem:[#allocation7 + $0xc08] sm:$0xff]
    %v1066 = vld [vmem:[#allocation7 + $0xc10] sm:$0xff]
    %v1067 = vld [vmem:[#allocation7 + $0xc18] sm:$0xff]
    %v1068 = vld [vmem:[#allocation7 + $0xc20] sm:$0xff]
    %v1069 = vld [vmem:[#allocation7 + $0xc28] sm:$0xff]
    %v1070 = vld [vmem:[#allocation7 + $0xc30] sm:$0xff]
    %v1071 = vld [vmem:[#allocation7 + $0xc38] sm:$0xff]
    %v1072 = vld [vmem:[#allocation7 + $0xc40] sm:$0xff]
    %v1073 = vld [vmem:[#allocation7 + $0xc48] sm:$0xff]
    %v1074 = vld [vmem:[#allocation7 + $0xc50] sm:$0xff]
    %v1075 = vld [vmem:[#allocation7 + $0xc58] sm:$0xff]
    %v1076 = vld [vmem:[#allocation7 + $0xc60] sm:$0xff]
    %v1077 = vld [vmem:[#allocation7 + $0xc68] sm:$0xff]
    %v1078 = vld [vmem:[#allocation7 + $0xc70] sm:$0xff]
    %v1079 = vld [vmem:[#allocation7 + $0xc78] sm:$0xff]
    %v1080 = vld [vmem:[#allocation7 + $0xc80] sm:$0xff]
    %v1081 = vld [vmem:[#allocation7 + $0xc88] sm:$0xff]
    %v1082 = vld [vmem:[#allocation7 + $0xc90] sm:$0xff]
    %v1083 = vld [vmem:[#allocation7 + $0xc98] sm:$0xff]
    %v1084 = vld [vmem:[#allocation7 + $0xca0] sm:$0xff]
    %v1085 = vld [vmem:[#allocation7 + $0xca8] sm:$0xff]
    %v1086 = vld [vmem:[#allocation7 + $0xcb0] sm:$0xff]
    %v1087 = vld [vmem:[#allocation7 + $0xcb8] sm:$0xff]
    %v1088 = vld [vmem:[#allocation7 + $0xcc0] sm:$0xff]
    %v1089 = vld [vmem:[#allocation7 + $0xcc8] sm:$0xff]
    %v1090 = vld [vmem:[#allocation7 + $0xcd0] sm:$0xff]
    %v1091 = vld [vmem:[#allocation7 + $0xcd8] sm:$0xff]
    %v1092 = vld [vmem:[#allocation7 + $0xce0] sm:$0xff]
    %v1093 = vld [vmem:[#allocation7 + $0xce8] sm:$0xff]
    %v1094 = vld [vmem:[#allocation7 + $0xcf0] sm:$0xff]
    %v1095 = vld [vmem:[#allocation7 + $0xcf8] sm:$0xff]
    %v1096 = vld [vmem:[#allocation7 + $0xd00] sm:$0xff]
    %v1097 = vld [vmem:[#allocation7 + $0xd08] sm:$0xff]
    %v1098 = vld [vmem:[#allocation7 + $0xd10] sm:$0xff]
    %v1099 = vld [vmem:[#allocation7 + $0xd18] sm:$0xff]
    %v1100 = vld [vmem:[#allocation7 + $0xd20] sm:$0xff]
    %v1101 = vld [vmem:[#allocation7 + $0xd28] sm:$0xff]
    %v1102 = vld [vmem:[#allocation7 + $0xd30] sm:$0xff]
    %v1103 = vld [vmem:[#allocation7 + $0xd38] sm:$0xff]
    %v1104 = vld [vmem:[#allocation7 + $0xd40] sm:$0xff]
    %v1105 = vld [vmem:[#allocation7 + $0xd48] sm:$0xff]
    %v1106 = vld [vmem:[#allocation7 + $0xd50] sm:$0xff]
    %v1107 = vld [vmem:[#allocation7 + $0xd58] sm:$0xff]
    %v1108 = vld [vmem:[#allocation7 + $0xd60] sm:$0xff]
    %v1109 = vld [vmem:[#allocation7 + $0xd68] sm:$0xff]
    %v1110 = vld [vmem:[#allocation7 + $0xd70] sm:$0xff]
    %v1111 = vld [vmem:[#allocation7 + $0xd78] sm:$0xff]
    %v1112 = vld [vmem:[#allocation7 + $0xd80] sm:$0xff]
    %v1113 = vld [vmem:[#allocation7 + $0xd88] sm:$0xff]
    %v1114 = vld [vmem:[#allocation7 + $0xd90] sm:$0xff]
    %v1115 = vld [vmem:[#allocation7 + $0xd98] sm:$0xff]
    %v1116 = vld [vmem:[#allocation7 + $0xda0] sm:$0xff]
    %v1117 = vld [vmem:[#allocation7 + $0xda8] sm:$0xff]
    %v1118 = vld [vmem:[#allocation7 + $0xdb0] sm:$0xff]
    %v1119 = vld [vmem:[#allocation7 + $0xdb8] sm:$0xff]
    %v1120 = vld [vmem:[#allocation7 + $0xdc0] sm:$0xff]
    %v1121 = vld [vmem:[#allocation7 + $0xdc8] sm:$0xff]
    %v1122 = vld [vmem:[#allocation7 + $0xdd0] sm:$0xff]
    %v1123 = vld [vmem:[#allocation7 + $0xdd8] sm:$0xff]
    %v1124 = vld [vmem:[#allocation7 + $0xde0] sm:$0xff]
    %v1125 = vld [vmem:[#allocation7 + $0xde8] sm:$0xff]
    %v1126 = vld [vmem:[#allocation7 + $0xdf0] sm:$0xff]
    %v1127 = vld [vmem:[#allocation7 + $0xdf8] sm:$0xff]
    %v1128 = vld [vmem:[#allocation7 + $0xe00] sm:$0xff]
    %v1129 = vld [vmem:[#allocation7 + $0xe08] sm:$0xff]
    %v1130 = vld [vmem:[#allocation7 + $0xe10] sm:$0xff]
    %v1131 = vld [vmem:[#allocation7 + $0xe18] sm:$0xff]
    %v1132 = vld [vmem:[#allocation7 + $0xe20] sm:$0xff]
    %v1133 = vld [vmem:[#allocation7 + $0xe28] sm:$0xff]
    %v1134 = vld [vmem:[#allocation7 + $0xe30] sm:$0xff]
    %v1135 = vld [vmem:[#allocation7 + $0xe38] sm:$0xff]
    %v1136 = vld [vmem:[#allocation7 + $0xe40] sm:$0xff]
    %v1137 = vld [vmem:[#allocation7 + $0xe48] sm:$0xff]
    %v1138 = vld [vmem:[#allocation7 + $0xe50] sm:$0xff]
    %v1139 = vld [vmem:[#allocation7 + $0xe58] sm:$0xff]
    %v1140 = vld [vmem:[#allocation7 + $0xe60] sm:$0xff]
    %v1141 = vld [vmem:[#allocation7 + $0xe68] sm:$0xff]
    %v1142 = vld [vmem:[#allocation7 + $0xe70] sm:$0xff]
    %v1143 = vld [vmem:[#allocation7 + $0xe78] sm:$0xff]
    %v1144 = vld [vmem:[#allocation7 + $0xe80] sm:$0xff]
    %v1145 = vld [vmem:[#allocation7 + $0xe88] sm:$0xff]
    %v1146 = vld [vmem:[#allocation7 + $0xe90] sm:$0xff]
    %v1147 = vld [vmem:[#allocation7 + $0xe98] sm:$0xff]
    %v1148 = vld [vmem:[#allocation7 + $0xea0] sm:$0xff]
    %v1149 = vld [vmem:[#allocation7 + $0xea8] sm:$0xff]
    %v1150 = vld [vmem:[#allocation7 + $0xeb0] sm:$0xff]
    %v1151 = vld [vmem:[#allocation7 + $0xeb8] sm:$0xff]
    %v1152 = vld [vmem:[#allocation7 + $0xec0] sm:$0xff]
    %v1153 = vld [vmem:[#allocation7 + $0xec8] sm:$0xff]
    %v1154 = vld [vmem:[#allocation7 + $0xed0] sm:$0xff]
    %v1155 = vld [vmem:[#allocation7 + $0xed8] sm:$0xff]
    %v1156 = vld [vmem:[#allocation7 + $0xee0] sm:$0xff]
    %v1157 = vld [vmem:[#allocation7 + $0xee8] sm:$0xff]
    %v1158 = vld [vmem:[#allocation7 + $0xef0] sm:$0xff]
    %v1159 = vld [vmem:[#allocation7 + $0xef8] sm:$0xff]
    %v1160 = vld [vmem:[#allocation7 + $0xf00] sm:$0xff]
    %v1161 = vld [vmem:[#allocation7 + $0xf08] sm:$0xff]
    %v1162 = vld [vmem:[#allocation7 + $0xf10] sm:$0xff]
    %v1163 = vld [vmem:[#allocation7 + $0xf18] sm:$0xff]
    %v1164 = vld [vmem:[#allocation7 + $0xf20] sm:$0xff]
    %v1165 = vld [vmem:[#allocation7 + $0xf28] sm:$0xff]
    %v1166 = vld [vmem:[#allocation7 + $0xf30] sm:$0xff]
    %v1167 = vld [vmem:[#allocation7 + $0xf38] sm:$0xff]
    %v1168 = vld [vmem:[#allocation7 + $0xf40] sm:$0xff]
    %v1169 = vld [vmem:[#allocation7 + $0xf48] sm:$0xff]
    %v1170 = vld [vmem:[#allocation7 + $0xf50] sm:$0xff]
    %v1171 = vld [vmem:[#allocation7 + $0xf58] sm:$0xff]
    %v1172 = vld [vmem:[#allocation7 + $0xf60] sm:$0xff]
    %v1173 = vld [vmem:[#allocation7 + $0xf68] sm:$0xff]
    %v1174 = vld [vmem:[#allocation7 + $0xf70] sm:$0xff]
    %v1175 = vld [vmem:[#allocation7 + $0xf78] sm:$0xff]
    %v1176 = vld [vmem:[#allocation7 + $0xf80] sm:$0xff]
    %v1177 = vld [vmem:[#allocation7 + $0xf88] sm:$0xff]
    %v1178 = vld [vmem:[#allocation7 + $0xf90] sm:$0xff]
    %v1179 = vld [vmem:[#allocation7 + $0xf98] sm:$0xff]
    %v1180 = vld [vmem:[#allocation7 + $0xfa0] sm:$0xff]
    %v1181 = vld [vmem:[#allocation7 + $0xfa8] sm:$0xff]
    %v1182 = vld [vmem:[#allocation7 + $0xfb0] sm:$0xff]
    %v1183 = vld [vmem:[#allocation7 + $0xfb8] sm:$0xff]
    %v1184 = vld [vmem:[#allocation7 + $0xfc0] sm:$0xff]
    %v1185 = vld [vmem:[#allocation7 + $0xfc8] sm:$0xff]
    %v1186 = vld [vmem:[#allocation7 + $0xfd0] sm:$0xff]
    %v1187 = vld [vmem:[#allocation7 + $0xfd8] sm:$0xff]
    %v1188 = vld [vmem:[#allocation7 + $0xfe0] sm:$0xff]
    %v1189 = vld [vmem:[#allocation7 + $0xfe8] sm:$0xff]
    %v1190 = vld [vmem:[#allocation7 + $0xff0] sm:$0xff]
    %v1191 = vld [vmem:[#allocation7 + $0xff8] sm:$0xff]
    %s1192 = scalar_lea.vmem [#allocation14], 1
    %v1193 = vld [vmem:[%s1192] ss:$8 sm:$0xf]
    %v1194 = vld [vmem:[%s1192] ss:$8 sm:$0xf0]
    %v1195 = vor.u32 %v1193, %v1194
    %v1197 = vperm.slane %v1195, 0
    %v1198 = vperm.slane %v1195, 1
    %v1199 = vperm.slane %v1195, 2
    %v1200 = vperm.slane %v1195, 3
    %v1201 = vperm.slane %v1195, 4
    %v1202 = vperm.slane %v1195, 5
    %v1203 = vperm.slane %v1195, 6
    %v1204 = vperm.slane %v1195, 7
    %v1725 = vunpack.c.l.b16 %v680
    %v1726 = vunpack.c.h.b16 %v680
    %v1727 = vunpack.c.l.b16 %v681
    %v1728 = vunpack.c.h.b16 %v681
    %v1729 = vunpack.c.l.b16 %v682
    %v1730 = vunpack.c.h.b16 %v682
    %v1731 = vunpack.c.l.b16 %v683
    %v1732 = vunpack.c.h.b16 %v683
    %v1733 = vunpack.c.l.b16 %v684
    %v1734 = vunpack.c.h.b16 %v684
    %v1735 = vunpack.c.l.b16 %v685
    %v1736 = vunpack.c.h.b16 %v685
    %v1737 = vunpack.c.l.b16 %v686
    %v1738 = vunpack.c.h.b16 %v686
    %v1739 = vunpack.c.l.b16 %v687
    %v1740 = vunpack.c.h.b16 %v687
    %v1741 = vunpack.c.l.b16 %v688
    %v1742 = vunpack.c.h.b16 %v688
    %v1743 = vunpack.c.l.b16 %v689
    %v1744 = vunpack.c.h.b16 %v689
    %v1745 = vunpack.c.l.b16 %v690
    %v1746 = vunpack.c.h.b16 %v690
    %v1747 = vunpack.c.l.b16 %v691
    %v1748 = vunpack.c.h.b16 %v691
    %v1749 = vunpack.c.l.b16 %v692
    %v1750 = vunpack.c.h.b16 %v692
    %v1751 = vunpack.c.l.b16 %v693
    %v1752 = vunpack.c.h.b16 %v693
    %v1753 = vunpack.c.l.b16 %v694
    %v1754 = vunpack.c.h.b16 %v694
    %v1755 = vunpack.c.l.b16 %v695
    %v1756 = vunpack.c.h.b16 %v695
    %v1757 = vunpack.c.l.b16 %v696
    %v1758 = vunpack.c.h.b16 %v696
    %v1759 = vunpack.c.l.b16 %v697
    %v1760 = vunpack.c.h.b16 %v697
    %v1761 = vunpack.c.l.b16 %v698
    %v1762 = vunpack.c.h.b16 %v698
    %v1763 = vunpack.c.l.b16 %v699
    %v1764 = vunpack.c.h.b16 %v699
    %v1765 = vunpack.c.l.b16 %v700
    %v1766 = vunpack.c.h.b16 %v700
    %v1767 = vunpack.c.l.b16 %v701
    %v1768 = vunpack.c.h.b16 %v701
    %v1769 = vunpack.c.l.b16 %v702
    %v1770 = vunpack.c.h.b16 %v702
    %v1771 = vunpack.c.l.b16 %v703
    %v1772 = vunpack.c.h.b16 %v703
    %v1773 = vunpack.c.l.b16 %v704
    %v1774 = vunpack.c.h.b16 %v704
    %v1775 = vunpack.c.l.b16 %v705
    %v1776 = vunpack.c.h.b16 %v705
    %v1777 = vunpack.c.l.b16 %v706
    %v1778 = vunpack.c.h.b16 %v706
    %v1779 = vunpack.c.l.b16 %v707
    %v1780 = vunpack.c.h.b16 %v707
    %v1781 = vunpack.c.l.b16 %v708
    %v1782 = vunpack.c.h.b16 %v708
    %v1783 = vunpack.c.l.b16 %v709
    %v1784 = vunpack.c.h.b16 %v709
    %v1785 = vunpack.c.l.b16 %v710
    %v1786 = vunpack.c.h.b16 %v710
    %v1787 = vunpack.c.l.b16 %v711
    %v1788 = vunpack.c.h.b16 %v711
    %v1789 = vunpack.c.l.b16 %v712
    %v1790 = vunpack.c.h.b16 %v712
    %v1791 = vunpack.c.l.b16 %v713
    %v1792 = vunpack.c.h.b16 %v713
    %v1793 = vunpack.c.l.b16 %v714
    %v1794 = vunpack.c.h.b16 %v714
    %v1795 = vunpack.c.l.b16 %v715
    %v1796 = vunpack.c.h.b16 %v715
    %v1797 = vunpack.c.l.b16 %v716
    %v1798 = vunpack.c.h.b16 %v716
    %v1799 = vunpack.c.l.b16 %v717
    %v1800 = vunpack.c.h.b16 %v717
    %v1801 = vunpack.c.l.b16 %v718
    %v1802 = vunpack.c.h.b16 %v718
    %v1803 = vunpack.c.l.b16 %v719
    %v1804 = vunpack.c.h.b16 %v719
    %v1805 = vunpack.c.l.b16 %v720
    %v1806 = vunpack.c.h.b16 %v720
    %v1807 = vunpack.c.l.b16 %v721
    %v1808 = vunpack.c.h.b16 %v721
    %v1809 = vunpack.c.l.b16 %v722
    %v1810 = vunpack.c.h.b16 %v722
    %v1811 = vunpack.c.l.b16 %v723
    %v1812 = vunpack.c.h.b16 %v723
    %v1813 = vunpack.c.l.b16 %v724
    %v1814 = vunpack.c.h.b16 %v724
    %v1815 = vunpack.c.l.b16 %v725
    %v1816 = vunpack.c.h.b16 %v725
    %v1817 = vunpack.c.l.b16 %v726
    %v1818 = vunpack.c.h.b16 %v726
    %v1819 = vunpack.c.l.b16 %v727
    %v1820 = vunpack.c.h.b16 %v727
    %v1821 = vunpack.c.l.b16 %v728
    %v1822 = vunpack.c.h.b16 %v728
    %v1823 = vunpack.c.l.b16 %v729
    %v1824 = vunpack.c.h.b16 %v729
    %v1825 = vunpack.c.l.b16 %v730
    %v1826 = vunpack.c.h.b16 %v730
    %v1827 = vunpack.c.l.b16 %v731
    %v1828 = vunpack.c.h.b16 %v731
    %v1829 = vunpack.c.l.b16 %v732
    %v1830 = vunpack.c.h.b16 %v732
    %v1831 = vunpack.c.l.b16 %v733
    %v1832 = vunpack.c.h.b16 %v733
    %v1833 = vunpack.c.l.b16 %v734
    %v1834 = vunpack.c.h.b16 %v734
    %v1835 = vunpack.c.l.b16 %v735
    %v1836 = vunpack.c.h.b16 %v735
    %v1837 = vunpack.c.l.b16 %v736
    %v1838 = vunpack.c.h.b16 %v736
    %v1839 = vunpack.c.l.b16 %v737
    %v1840 = vunpack.c.h.b16 %v737
    %v1841 = vunpack.c.l.b16 %v738
    %v1842 = vunpack.c.h.b16 %v738
    %v1843 = vunpack.c.l.b16 %v739
    %v1844 = vunpack.c.h.b16 %v739
    %v1845 = vunpack.c.l.b16 %v740
    %v1846 = vunpack.c.h.b16 %v740
    %v1847 = vunpack.c.l.b16 %v741
    %v1848 = vunpack.c.h.b16 %v741
    %v1849 = vunpack.c.l.b16 %v742
    %v1850 = vunpack.c.h.b16 %v742
    %v1851 = vunpack.c.l.b16 %v743
    %v1852 = vunpack.c.h.b16 %v743
    %v1853 = vunpack.c.l.b16 %v744
    %v1854 = vunpack.c.h.b16 %v744
    %v1855 = vunpack.c.l.b16 %v745
    %v1856 = vunpack.c.h.b16 %v745
    %v1857 = vunpack.c.l.b16 %v746
    %v1858 = vunpack.c.h.b16 %v746
    %v1859 = vunpack.c.l.b16 %v747
    %v1860 = vunpack.c.h.b16 %v747
    %v1861 = vunpack.c.l.b16 %v748
    %v1862 = vunpack.c.h.b16 %v748
    %v1863 = vunpack.c.l.b16 %v749
    %v1864 = vunpack.c.h.b16 %v749
    %v1865 = vunpack.c.l.b16 %v750
    %v1866 = vunpack.c.h.b16 %v750
    %v1867 = vunpack.c.l.b16 %v751
    %v1868 = vunpack.c.h.b16 %v751
    %v1869 = vunpack.c.l.b16 %v752
    %v1870 = vunpack.c.h.b16 %v752
    %v1871 = vunpack.c.l.b16 %v753
    %v1872 = vunpack.c.h.b16 %v753
    %v1873 = vunpack.c.l.b16 %v754
    %v1874 = vunpack.c.h.b16 %v754
    %v1875 = vunpack.c.l.b16 %v755
    %v1876 = vunpack.c.h.b16 %v755
    %v1877 = vunpack.c.l.b16 %v756
    %v1878 = vunpack.c.h.b16 %v756
    %v1879 = vunpack.c.l.b16 %v757
    %v1880 = vunpack.c.h.b16 %v757
    %v1881 = vunpack.c.l.b16 %v758
    %v1882 = vunpack.c.h.b16 %v758
    %v1883 = vunpack.c.l.b16 %v759
    %v1884 = vunpack.c.h.b16 %v759
    %v1885 = vunpack.c.l.b16 %v760
    %v1886 = vunpack.c.h.b16 %v760
    %v1887 = vunpack.c.l.b16 %v761
    %v1888 = vunpack.c.h.b16 %v761
    %v1889 = vunpack.c.l.b16 %v762
    %v1890 = vunpack.c.h.b16 %v762
    %v1891 = vunpack.c.l.b16 %v763
    %v1892 = vunpack.c.h.b16 %v763
    %v1893 = vunpack.c.l.b16 %v764
    %v1894 = vunpack.c.h.b16 %v764
    %v1895 = vunpack.c.l.b16 %v765
    %v1896 = vunpack.c.h.b16 %v765
    %v1897 = vunpack.c.l.b16 %v766
    %v1898 = vunpack.c.h.b16 %v766
    %v1899 = vunpack.c.l.b16 %v767
    %v1900 = vunpack.c.h.b16 %v767
    %v1901 = vunpack.c.l.b16 %v768
    %v1902 = vunpack.c.h.b16 %v768
    %v1903 = vunpack.c.l.b16 %v769
    %v1904 = vunpack.c.h.b16 %v769
    %v1905 = vunpack.c.l.b16 %v770
    %v1906 = vunpack.c.h.b16 %v770
    %v1907 = vunpack.c.l.b16 %v771
    %v1908 = vunpack.c.h.b16 %v771
    %v1909 = vunpack.c.l.b16 %v772
    %v1910 = vunpack.c.h.b16 %v772
    %v1911 = vunpack.c.l.b16 %v773
    %v1912 = vunpack.c.h.b16 %v773
    %v1913 = vunpack.c.l.b16 %v774
    %v1914 = vunpack.c.h.b16 %v774
    %v1915 = vunpack.c.l.b16 %v775
    %v1916 = vunpack.c.h.b16 %v775
    %v1917 = vunpack.c.l.b16 %v776
    %v1918 = vunpack.c.h.b16 %v776
    %v1919 = vunpack.c.l.b16 %v777
    %v1920 = vunpack.c.h.b16 %v777
    %v1921 = vunpack.c.l.b16 %v778
    %v1922 = vunpack.c.h.b16 %v778
    %v1923 = vunpack.c.l.b16 %v779
    %v1924 = vunpack.c.h.b16 %v779
    %v1925 = vunpack.c.l.b16 %v780
    %v1926 = vunpack.c.h.b16 %v780
    %v1927 = vunpack.c.l.b16 %v781
    %v1928 = vunpack.c.h.b16 %v781
    %v1929 = vunpack.c.l.b16 %v782
    %v1930 = vunpack.c.h.b16 %v782
    %v1931 = vunpack.c.l.b16 %v783
    %v1932 = vunpack.c.h.b16 %v783
    %v1933 = vunpack.c.l.b16 %v784
    %v1934 = vunpack.c.h.b16 %v784
    %v1935 = vunpack.c.l.b16 %v785
    %v1936 = vunpack.c.h.b16 %v785
    %v1937 = vunpack.c.l.b16 %v786
    %v1938 = vunpack.c.h.b16 %v786
    %v1939 = vunpack.c.l.b16 %v787
    %v1940 = vunpack.c.h.b16 %v787
    %v1941 = vunpack.c.l.b16 %v788
    %v1942 = vunpack.c.h.b16 %v788
    %v1943 = vunpack.c.l.b16 %v789
    %v1944 = vunpack.c.h.b16 %v789
    %v1945 = vunpack.c.l.b16 %v790
    %v1946 = vunpack.c.h.b16 %v790
    %v1947 = vunpack.c.l.b16 %v791
    %v1948 = vunpack.c.h.b16 %v791
    %v1949 = vunpack.c.l.b16 %v792
    %v1950 = vunpack.c.h.b16 %v792
    %v1951 = vunpack.c.l.b16 %v793
    %v1952 = vunpack.c.h.b16 %v793
    %v1953 = vunpack.c.l.b16 %v794
    %v1954 = vunpack.c.h.b16 %v794
    %v1955 = vunpack.c.l.b16 %v795
    %v1956 = vunpack.c.h.b16 %v795
    %v1957 = vunpack.c.l.b16 %v796
    %v1958 = vunpack.c.h.b16 %v796
    %v1959 = vunpack.c.l.b16 %v797
    %v1960 = vunpack.c.h.b16 %v797
    %v1961 = vunpack.c.l.b16 %v798
    %v1962 = vunpack.c.h.b16 %v798
    %v1963 = vunpack.c.l.b16 %v799
    %v1964 = vunpack.c.h.b16 %v799
    %v1965 = vunpack.c.l.b16 %v800
    %v1966 = vunpack.c.h.b16 %v800
    %v1967 = vunpack.c.l.b16 %v801
    %v1968 = vunpack.c.h.b16 %v801
    %v1969 = vunpack.c.l.b16 %v802
    %v1970 = vunpack.c.h.b16 %v802
    %v1971 = vunpack.c.l.b16 %v803
    %v1972 = vunpack.c.h.b16 %v803
    %v1973 = vunpack.c.l.b16 %v804
    %v1974 = vunpack.c.h.b16 %v804
    %v1975 = vunpack.c.l.b16 %v805
    %v1976 = vunpack.c.h.b16 %v805
    %v1977 = vunpack.c.l.b16 %v806
    %v1978 = vunpack.c.h.b16 %v806
    %v1979 = vunpack.c.l.b16 %v807
    %v1980 = vunpack.c.h.b16 %v807
    %v1981 = vunpack.c.l.b16 %v808
    %v1982 = vunpack.c.h.b16 %v808
    %v1983 = vunpack.c.l.b16 %v809
    %v1984 = vunpack.c.h.b16 %v809
    %v1985 = vunpack.c.l.b16 %v810
    %v1986 = vunpack.c.h.b16 %v810
    %v1987 = vunpack.c.l.b16 %v811
    %v1988 = vunpack.c.h.b16 %v811
    %v1989 = vunpack.c.l.b16 %v812
    %v1990 = vunpack.c.h.b16 %v812
    %v1991 = vunpack.c.l.b16 %v813
    %v1992 = vunpack.c.h.b16 %v813
    %v1993 = vunpack.c.l.b16 %v814
    %v1994 = vunpack.c.h.b16 %v814
    %v1995 = vunpack.c.l.b16 %v815
    %v1996 = vunpack.c.h.b16 %v815
    %v1997 = vunpack.c.l.b16 %v816
    %v1998 = vunpack.c.h.b16 %v816
    %v1999 = vunpack.c.l.b16 %v817
    %v2000 = vunpack.c.h.b16 %v817
    %v2001 = vunpack.c.l.b16 %v818
    %v2002 = vunpack.c.h.b16 %v818
    %v2003 = vunpack.c.l.b16 %v819
    %v2004 = vunpack.c.h.b16 %v819
    %v2005 = vunpack.c.l.b16 %v820
    %v2006 = vunpack.c.h.b16 %v820
    %v2007 = vunpack.c.l.b16 %v821
    %v2008 = vunpack.c.h.b16 %v821
    %v2009 = vunpack.c.l.b16 %v822
    %v2010 = vunpack.c.h.b16 %v822
    %v2011 = vunpack.c.l.b16 %v823
    %v2012 = vunpack.c.h.b16 %v823
    %v2013 = vunpack.c.l.b16 %v824
    %v2014 = vunpack.c.h.b16 %v824
    %v2015 = vunpack.c.l.b16 %v825
    %v2016 = vunpack.c.h.b16 %v825
    %v2017 = vunpack.c.l.b16 %v826
    %v2018 = vunpack.c.h.b16 %v826
    %v2019 = vunpack.c.l.b16 %v827
    %v2020 = vunpack.c.h.b16 %v827
    %v2021 = vunpack.c.l.b16 %v828
    %v2022 = vunpack.c.h.b16 %v828
    %v2023 = vunpack.c.l.b16 %v829
    %v2024 = vunpack.c.h.b16 %v829
    %v2025 = vunpack.c.l.b16 %v830
    %v2026 = vunpack.c.h.b16 %v830
    %v2027 = vunpack.c.l.b16 %v831
    %v2028 = vunpack.c.h.b16 %v831
    %v2029 = vunpack.c.l.b16 %v832
    %v2030 = vunpack.c.h.b16 %v832
    %v2031 = vunpack.c.l.b16 %v833
    %v2032 = vunpack.c.h.b16 %v833
    %v2033 = vunpack.c.l.b16 %v834
    %v2034 = vunpack.c.h.b16 %v834
    %v2035 = vunpack.c.l.b16 %v835
    %v2036 = vunpack.c.h.b16 %v835
    %v2037 = vunpack.c.l.b16 %v836
    %v2038 = vunpack.c.h.b16 %v836
    %v2039 = vunpack.c.l.b16 %v837
    %v2040 = vunpack.c.h.b16 %v837
    %v2041 = vunpack.c.l.b16 %v838
    %v2042 = vunpack.c.h.b16 %v838
    %v2043 = vunpack.c.l.b16 %v839
    %v2044 = vunpack.c.h.b16 %v839
    %v2045 = vunpack.c.l.b16 %v840
    %v2046 = vunpack.c.h.b16 %v840
    %v2047 = vunpack.c.l.b16 %v841
    %v2048 = vunpack.c.h.b16 %v841
    %v2049 = vunpack.c.l.b16 %v842
    %v2050 = vunpack.c.h.b16 %v842
    %v2051 = vunpack.c.l.b16 %v843
    %v2052 = vunpack.c.h.b16 %v843
    %v2053 = vunpack.c.l.b16 %v844
    %v2054 = vunpack.c.h.b16 %v844
    %v2055 = vunpack.c.l.b16 %v845
    %v2056 = vunpack.c.h.b16 %v845
    %v2057 = vunpack.c.l.b16 %v846
    %v2058 = vunpack.c.h.b16 %v846
    %v2059 = vunpack.c.l.b16 %v847
    %v2060 = vunpack.c.h.b16 %v847
    %v2061 = vunpack.c.l.b16 %v848
    %v2062 = vunpack.c.h.b16 %v848
    %v2063 = vunpack.c.l.b16 %v849
    %v2064 = vunpack.c.h.b16 %v849
    %v2065 = vunpack.c.l.b16 %v850
    %v2066 = vunpack.c.h.b16 %v850
    %v2067 = vunpack.c.l.b16 %v851
    %v2068 = vunpack.c.h.b16 %v851
    %v2069 = vunpack.c.l.b16 %v852
    %v2070 = vunpack.c.h.b16 %v852
    %v2071 = vunpack.c.l.b16 %v853
    %v2072 = vunpack.c.h.b16 %v853
    %v2073 = vunpack.c.l.b16 %v854
    %v2074 = vunpack.c.h.b16 %v854
    %v2075 = vunpack.c.l.b16 %v855
    %v2076 = vunpack.c.h.b16 %v855
    %v2077 = vunpack.c.l.b16 %v856
    %v2078 = vunpack.c.h.b16 %v856
    %v2079 = vunpack.c.l.b16 %v857
    %v2080 = vunpack.c.h.b16 %v857
    %v2081 = vunpack.c.l.b16 %v858
    %v2082 = vunpack.c.h.b16 %v858
    %v2083 = vunpack.c.l.b16 %v859
    %v2084 = vunpack.c.h.b16 %v859
    %v2085 = vunpack.c.l.b16 %v860
    %v2086 = vunpack.c.h.b16 %v860
    %v2087 = vunpack.c.l.b16 %v861
    %v2088 = vunpack.c.h.b16 %v861
    %v2089 = vunpack.c.l.b16 %v862
    %v2090 = vunpack.c.h.b16 %v862
    %v2091 = vunpack.c.l.b16 %v863
    %v2092 = vunpack.c.h.b16 %v863
    %v2093 = vunpack.c.l.b16 %v864
    %v2094 = vunpack.c.h.b16 %v864
    %v2095 = vunpack.c.l.b16 %v865
    %v2096 = vunpack.c.h.b16 %v865
    %v2097 = vunpack.c.l.b16 %v866
    %v2098 = vunpack.c.h.b16 %v866
    %v2099 = vunpack.c.l.b16 %v867
    %v2100 = vunpack.c.h.b16 %v867
    %v2101 = vunpack.c.l.b16 %v868
    %v2102 = vunpack.c.h.b16 %v868
    %v2103 = vunpack.c.l.b16 %v869
    %v2104 = vunpack.c.h.b16 %v869
    %v2105 = vunpack.c.l.b16 %v870
    %v2106 = vunpack.c.h.b16 %v870
    %v2107 = vunpack.c.l.b16 %v871
    %v2108 = vunpack.c.h.b16 %v871
    %v2109 = vunpack.c.l.b16 %v872
    %v2110 = vunpack.c.h.b16 %v872
    %v2111 = vunpack.c.l.b16 %v873
    %v2112 = vunpack.c.h.b16 %v873
    %v2113 = vunpack.c.l.b16 %v874
    %v2114 = vunpack.c.h.b16 %v874
    %v2115 = vunpack.c.l.b16 %v875
    %v2116 = vunpack.c.h.b16 %v875
    %v2117 = vunpack.c.l.b16 %v876
    %v2118 = vunpack.c.h.b16 %v876
    %v2119 = vunpack.c.l.b16 %v877
    %v2120 = vunpack.c.h.b16 %v877
    %v2121 = vunpack.c.l.b16 %v878
    %v2122 = vunpack.c.h.b16 %v878
    %v2123 = vunpack.c.l.b16 %v879
    %v2124 = vunpack.c.h.b16 %v879
    %v2125 = vunpack.c.l.b16 %v880
    %v2126 = vunpack.c.h.b16 %v880
    %v2127 = vunpack.c.l.b16 %v881
    %v2128 = vunpack.c.h.b16 %v881
    %v2129 = vunpack.c.l.b16 %v882
    %v2130 = vunpack.c.h.b16 %v882
    %v2131 = vunpack.c.l.b16 %v883
    %v2132 = vunpack.c.h.b16 %v883
    %v2133 = vunpack.c.l.b16 %v884
    %v2134 = vunpack.c.h.b16 %v884
    %v2135 = vunpack.c.l.b16 %v885
    %v2136 = vunpack.c.h.b16 %v885
    %v2137 = vunpack.c.l.b16 %v886
    %v2138 = vunpack.c.h.b16 %v886
    %v2139 = vunpack.c.l.b16 %v887
    %v2140 = vunpack.c.h.b16 %v887
    %v2141 = vunpack.c.l.b16 %v888
    %v2142 = vunpack.c.h.b16 %v888
    %v2143 = vunpack.c.l.b16 %v889
    %v2144 = vunpack.c.h.b16 %v889
    %v2145 = vunpack.c.l.b16 %v890
    %v2146 = vunpack.c.h.b16 %v890
    %v2147 = vunpack.c.l.b16 %v891
    %v2148 = vunpack.c.h.b16 %v891
    %v2149 = vunpack.c.l.b16 %v892
    %v2150 = vunpack.c.h.b16 %v892
    %v2151 = vunpack.c.l.b16 %v893
    %v2152 = vunpack.c.h.b16 %v893
    %v2153 = vunpack.c.l.b16 %v894
    %v2154 = vunpack.c.h.b16 %v894
    %v2155 = vunpack.c.l.b16 %v895
    %v2156 = vunpack.c.h.b16 %v895
    %v2157 = vunpack.c.l.b16 %v896
    %v2158 = vunpack.c.h.b16 %v896
    %v2159 = vunpack.c.l.b16 %v897
    %v2160 = vunpack.c.h.b16 %v897
    %v2161 = vunpack.c.l.b16 %v898
    %v2162 = vunpack.c.h.b16 %v898
    %v2163 = vunpack.c.l.b16 %v899
    %v2164 = vunpack.c.h.b16 %v899
    %v2165 = vunpack.c.l.b16 %v900
    %v2166 = vunpack.c.h.b16 %v900
    %v2167 = vunpack.c.l.b16 %v901
    %v2168 = vunpack.c.h.b16 %v901
    %v2169 = vunpack.c.l.b16 %v902
    %v2170 = vunpack.c.h.b16 %v902
    %v2171 = vunpack.c.l.b16 %v903
    %v2172 = vunpack.c.h.b16 %v903
    %v2173 = vunpack.c.l.b16 %v904
    %v2174 = vunpack.c.h.b16 %v904
    %v2175 = vunpack.c.l.b16 %v905
    %v2176 = vunpack.c.h.b16 %v905
    %v2177 = vunpack.c.l.b16 %v906
    %v2178 = vunpack.c.h.b16 %v906
    %v2179 = vunpack.c.l.b16 %v907
    %v2180 = vunpack.c.h.b16 %v907
    %v2181 = vunpack.c.l.b16 %v908
    %v2182 = vunpack.c.h.b16 %v908
    %v2183 = vunpack.c.l.b16 %v909
    %v2184 = vunpack.c.h.b16 %v909
    %v2185 = vunpack.c.l.b16 %v910
    %v2186 = vunpack.c.h.b16 %v910
    %v2187 = vunpack.c.l.b16 %v911
    %v2188 = vunpack.c.h.b16 %v911
    %v2189 = vunpack.c.l.b16 %v912
    %v2190 = vunpack.c.h.b16 %v912
    %v2191 = vunpack.c.l.b16 %v913
    %v2192 = vunpack.c.h.b16 %v913
    %v2193 = vunpack.c.l.b16 %v914
    %v2194 = vunpack.c.h.b16 %v914
    %v2195 = vunpack.c.l.b16 %v915
    %v2196 = vunpack.c.h.b16 %v915
    %v2197 = vunpack.c.l.b16 %v916
    %v2198 = vunpack.c.h.b16 %v916
    %v2199 = vunpack.c.l.b16 %v917
    %v2200 = vunpack.c.h.b16 %v917
    %v2201 = vunpack.c.l.b16 %v918
    %v2202 = vunpack.c.h.b16 %v918
    %v2203 = vunpack.c.l.b16 %v919
    %v2204 = vunpack.c.h.b16 %v919
    %v2205 = vunpack.c.l.b16 %v920
    %v2206 = vunpack.c.h.b16 %v920
    %v2207 = vunpack.c.l.b16 %v921
    %v2208 = vunpack.c.h.b16 %v921
    %v2209 = vunpack.c.l.b16 %v922
    %v2210 = vunpack.c.h.b16 %v922
    %v2211 = vunpack.c.l.b16 %v923
    %v2212 = vunpack.c.h.b16 %v923
    %v2213 = vunpack.c.l.b16 %v924
    %v2214 = vunpack.c.h.b16 %v924
    %v2215 = vunpack.c.l.b16 %v925
    %v2216 = vunpack.c.h.b16 %v925
    %v2217 = vunpack.c.l.b16 %v926
    %v2218 = vunpack.c.h.b16 %v926
    %v2219 = vunpack.c.l.b16 %v927
    %v2220 = vunpack.c.h.b16 %v927
    %v2221 = vunpack.c.l.b16 %v928
    %v2222 = vunpack.c.h.b16 %v928
    %v2223 = vunpack.c.l.b16 %v929
    %v2224 = vunpack.c.h.b16 %v929
    %v2225 = vunpack.c.l.b16 %v930
    %v2226 = vunpack.c.h.b16 %v930
    %v2227 = vunpack.c.l.b16 %v931
    %v2228 = vunpack.c.h.b16 %v931
    %v2229 = vunpack.c.l.b16 %v932
    %v2230 = vunpack.c.h.b16 %v932
    %v2231 = vunpack.c.l.b16 %v933
    %v2232 = vunpack.c.h.b16 %v933
    %v2233 = vunpack.c.l.b16 %v934
    %v2234 = vunpack.c.h.b16 %v934
    %v2235 = vunpack.c.l.b16 %v935
    %v2236 = vunpack.c.h.b16 %v935
    %v2237 = vunpack.c.l.b16 %v936
    %v2238 = vunpack.c.h.b16 %v936
    %v2239 = vunpack.c.l.b16 %v937
    %v2240 = vunpack.c.h.b16 %v937
    %v2241 = vunpack.c.l.b16 %v938
    %v2242 = vunpack.c.h.b16 %v938
    %v2243 = vunpack.c.l.b16 %v939
    %v2244 = vunpack.c.h.b16 %v939
    %v2245 = vunpack.c.l.b16 %v940
    %v2246 = vunpack.c.h.b16 %v940
    %v2247 = vunpack.c.l.b16 %v941
    %v2248 = vunpack.c.h.b16 %v941
    %v2249 = vunpack.c.l.b16 %v942
    %v2250 = vunpack.c.h.b16 %v942
    %v2251 = vunpack.c.l.b16 %v943
    %v2252 = vunpack.c.h.b16 %v943
    %v2253 = vunpack.c.l.b16 %v944
    %v2254 = vunpack.c.h.b16 %v944
    %v2255 = vunpack.c.l.b16 %v945
    %v2256 = vunpack.c.h.b16 %v945
    %v2257 = vunpack.c.l.b16 %v946
    %v2258 = vunpack.c.h.b16 %v946
    %v2259 = vunpack.c.l.b16 %v947
    %v2260 = vunpack.c.h.b16 %v947
    %v2261 = vunpack.c.l.b16 %v948
    %v2262 = vunpack.c.h.b16 %v948
    %v2263 = vunpack.c.l.b16 %v949
    %v2264 = vunpack.c.h.b16 %v949
    %v2265 = vunpack.c.l.b16 %v950
    %v2266 = vunpack.c.h.b16 %v950
    %v2267 = vunpack.c.l.b16 %v951
    %v2268 = vunpack.c.h.b16 %v951
    %v2269 = vunpack.c.l.b16 %v952
    %v2270 = vunpack.c.h.b16 %v952
    %v2271 = vunpack.c.l.b16 %v953
    %v2272 = vunpack.c.h.b16 %v953
    %v2273 = vunpack.c.l.b16 %v954
    %v2274 = vunpack.c.h.b16 %v954
    %v2275 = vunpack.c.l.b16 %v955
    %v2276 = vunpack.c.h.b16 %v955
    %v2277 = vunpack.c.l.b16 %v956
    %v2278 = vunpack.c.h.b16 %v956
    %v2279 = vunpack.c.l.b16 %v957
    %v2280 = vunpack.c.h.b16 %v957
    %v2281 = vunpack.c.l.b16 %v958
    %v2282 = vunpack.c.h.b16 %v958
    %v2283 = vunpack.c.l.b16 %v959
    %v2284 = vunpack.c.h.b16 %v959
    %v2285 = vunpack.c.l.b16 %v960
    %v2286 = vunpack.c.h.b16 %v960
    %v2287 = vunpack.c.l.b16 %v961
    %v2288 = vunpack.c.h.b16 %v961
    %v2289 = vunpack.c.l.b16 %v962
    %v2290 = vunpack.c.h.b16 %v962
    %v2291 = vunpack.c.l.b16 %v963
    %v2292 = vunpack.c.h.b16 %v963
    %v2293 = vunpack.c.l.b16 %v964
    %v2294 = vunpack.c.h.b16 %v964
    %v2295 = vunpack.c.l.b16 %v965
    %v2296 = vunpack.c.h.b16 %v965
    %v2297 = vunpack.c.l.b16 %v966
    %v2298 = vunpack.c.h.b16 %v966
    %v2299 = vunpack.c.l.b16 %v967
    %v2300 = vunpack.c.h.b16 %v967
    %v2301 = vunpack.c.l.b16 %v968
    %v2302 = vunpack.c.h.b16 %v968
    %v2303 = vunpack.c.l.b16 %v969
    %v2304 = vunpack.c.h.b16 %v969
    %v2305 = vunpack.c.l.b16 %v970
    %v2306 = vunpack.c.h.b16 %v970
    %v2307 = vunpack.c.l.b16 %v971
    %v2308 = vunpack.c.h.b16 %v971
    %v2309 = vunpack.c.l.b16 %v972
    %v2310 = vunpack.c.h.b16 %v972
    %v2311 = vunpack.c.l.b16 %v973
    %v2312 = vunpack.c.h.b16 %v973
    %v2313 = vunpack.c.l.b16 %v974
    %v2314 = vunpack.c.h.b16 %v974
    %v2315 = vunpack.c.l.b16 %v975
    %v2316 = vunpack.c.h.b16 %v975
    %v2317 = vunpack.c.l.b16 %v976
    %v2318 = vunpack.c.h.b16 %v976
    %v2319 = vunpack.c.l.b16 %v977
    %v2320 = vunpack.c.h.b16 %v977
    %v2321 = vunpack.c.l.b16 %v978
    %v2322 = vunpack.c.h.b16 %v978
    %v2323 = vunpack.c.l.b16 %v979
    %v2324 = vunpack.c.h.b16 %v979
    %v2325 = vunpack.c.l.b16 %v980
    %v2326 = vunpack.c.h.b16 %v980
    %v2327 = vunpack.c.l.b16 %v981
    %v2328 = vunpack.c.h.b16 %v981
    %v2329 = vunpack.c.l.b16 %v982
    %v2330 = vunpack.c.h.b16 %v982
    %v2331 = vunpack.c.l.b16 %v983
    %v2332 = vunpack.c.h.b16 %v983
    %v2333 = vunpack.c.l.b16 %v984
    %v2334 = vunpack.c.h.b16 %v984
    %v2335 = vunpack.c.l.b16 %v985
    %v2336 = vunpack.c.h.b16 %v985
    %v2337 = vunpack.c.l.b16 %v986
    %v2338 = vunpack.c.h.b16 %v986
    %v2339 = vunpack.c.l.b16 %v987
    %v2340 = vunpack.c.h.b16 %v987
    %v2341 = vunpack.c.l.b16 %v988
    %v2342 = vunpack.c.h.b16 %v988
    %v2343 = vunpack.c.l.b16 %v989
    %v2344 = vunpack.c.h.b16 %v989
    %v2345 = vunpack.c.l.b16 %v990
    %v2346 = vunpack.c.h.b16 %v990
    %v2347 = vunpack.c.l.b16 %v991
    %v2348 = vunpack.c.h.b16 %v991
    %v2349 = vunpack.c.l.b16 %v992
    %v2350 = vunpack.c.h.b16 %v992
    %v2351 = vunpack.c.l.b16 %v993
    %v2352 = vunpack.c.h.b16 %v993
    %v2353 = vunpack.c.l.b16 %v994
    %v2354 = vunpack.c.h.b16 %v994
    %v2355 = vunpack.c.l.b16 %v995
    %v2356 = vunpack.c.h.b16 %v995
    %v2357 = vunpack.c.l.b16 %v996
    %v2358 = vunpack.c.h.b16 %v996
    %v2359 = vunpack.c.l.b16 %v997
    %v2360 = vunpack.c.h.b16 %v997
    %v2361 = vunpack.c.l.b16 %v998
    %v2362 = vunpack.c.h.b16 %v998
    %v2363 = vunpack.c.l.b16 %v999
    %v2364 = vunpack.c.h.b16 %v999
    %v2365 = vunpack.c.l.b16 %v1000
    %v2366 = vunpack.c.h.b16 %v1000
    %v2367 = vunpack.c.l.b16 %v1001
    %v2368 = vunpack.c.h.b16 %v1001
    %v2369 = vunpack.c.l.b16 %v1002
    %v2370 = vunpack.c.h.b16 %v1002
    %v2371 = vunpack.c.l.b16 %v1003
    %v2372 = vunpack.c.h.b16 %v1003
    %v2373 = vunpack.c.l.b16 %v1004
    %v2374 = vunpack.c.h.b16 %v1004
    %v2375 = vunpack.c.l.b16 %v1005
    %v2376 = vunpack.c.h.b16 %v1005
    %v2377 = vunpack.c.l.b16 %v1006
    %v2378 = vunpack.c.h.b16 %v1006
    %v2379 = vunpack.c.l.b16 %v1007
    %v2380 = vunpack.c.h.b16 %v1007
    %v2381 = vunpack.c.l.b16 %v1008
    %v2382 = vunpack.c.h.b16 %v1008
    %v2383 = vunpack.c.l.b16 %v1009
    %v2384 = vunpack.c.h.b16 %v1009
    %v2385 = vunpack.c.l.b16 %v1010
    %v2386 = vunpack.c.h.b16 %v1010
    %v2387 = vunpack.c.l.b16 %v1011
    %v2388 = vunpack.c.h.b16 %v1011
    %v2389 = vunpack.c.l.b16 %v1012
    %v2390 = vunpack.c.h.b16 %v1012
    %v2391 = vunpack.c.l.b16 %v1013
    %v2392 = vunpack.c.h.b16 %v1013
    %v2393 = vunpack.c.l.b16 %v1014
    %v2394 = vunpack.c.h.b16 %v1014
    %v2395 = vunpack.c.l.b16 %v1015
    %v2396 = vunpack.c.h.b16 %v1015
    %v2397 = vunpack.c.l.b16 %v1016
    %v2398 = vunpack.c.h.b16 %v1016
    %v2399 = vunpack.c.l.b16 %v1017
    %v2400 = vunpack.c.h.b16 %v1017
    %v2401 = vunpack.c.l.b16 %v1018
    %v2402 = vunpack.c.h.b16 %v1018
    %v2403 = vunpack.c.l.b16 %v1019
    %v2404 = vunpack.c.h.b16 %v1019
    %v2405 = vunpack.c.l.b16 %v1020
    %v2406 = vunpack.c.h.b16 %v1020
    %v2407 = vunpack.c.l.b16 %v1021
    %v2408 = vunpack.c.h.b16 %v1021
    %v2409 = vunpack.c.l.b16 %v1022
    %v2410 = vunpack.c.h.b16 %v1022
    %v2411 = vunpack.c.l.b16 %v1023
    %v2412 = vunpack.c.h.b16 %v1023
    %v2413 = vunpack.c.l.b16 %v1024
    %v2414 = vunpack.c.h.b16 %v1024
    %v2415 = vunpack.c.l.b16 %v1025
    %v2416 = vunpack.c.h.b16 %v1025
    %v2417 = vunpack.c.l.b16 %v1026
    %v2418 = vunpack.c.h.b16 %v1026
    %v2419 = vunpack.c.l.b16 %v1027
    %v2420 = vunpack.c.h.b16 %v1027
    %v2421 = vunpack.c.l.b16 %v1028
    %v2422 = vunpack.c.h.b16 %v1028
    %v2423 = vunpack.c.l.b16 %v1029
    %v2424 = vunpack.c.h.b16 %v1029
    %v2425 = vunpack.c.l.b16 %v1030
    %v2426 = vunpack.c.h.b16 %v1030
    %v2427 = vunpack.c.l.b16 %v1031
    %v2428 = vunpack.c.h.b16 %v1031
    %v2429 = vunpack.c.l.b16 %v1032
    %v2430 = vunpack.c.h.b16 %v1032
    %v2431 = vunpack.c.l.b16 %v1033
    %v2432 = vunpack.c.h.b16 %v1033
    %v2433 = vunpack.c.l.b16 %v1034
    %v2434 = vunpack.c.h.b16 %v1034
    %v2435 = vunpack.c.l.b16 %v1035
    %v2436 = vunpack.c.h.b16 %v1035
    %v2437 = vunpack.c.l.b16 %v1036
    %v2438 = vunpack.c.h.b16 %v1036
    %v2439 = vunpack.c.l.b16 %v1037
    %v2440 = vunpack.c.h.b16 %v1037
    %v2441 = vunpack.c.l.b16 %v1038
    %v2442 = vunpack.c.h.b16 %v1038
    %v2443 = vunpack.c.l.b16 %v1039
    %v2444 = vunpack.c.h.b16 %v1039
    %v2445 = vunpack.c.l.b16 %v1040
    %v2446 = vunpack.c.h.b16 %v1040
    %v2447 = vunpack.c.l.b16 %v1041
    %v2448 = vunpack.c.h.b16 %v1041
    %v2449 = vunpack.c.l.b16 %v1042
    %v2450 = vunpack.c.h.b16 %v1042
    %v2451 = vunpack.c.l.b16 %v1043
    %v2452 = vunpack.c.h.b16 %v1043
    %v2453 = vunpack.c.l.b16 %v1044
    %v2454 = vunpack.c.h.b16 %v1044
    %v2455 = vunpack.c.l.b16 %v1045
    %v2456 = vunpack.c.h.b16 %v1045
    %v2457 = vunpack.c.l.b16 %v1046
    %v2458 = vunpack.c.h.b16 %v1046
    %v2459 = vunpack.c.l.b16 %v1047
    %v2460 = vunpack.c.h.b16 %v1047
    %v2461 = vunpack.c.l.b16 %v1048
    %v2462 = vunpack.c.h.b16 %v1048
    %v2463 = vunpack.c.l.b16 %v1049
    %v2464 = vunpack.c.h.b16 %v1049
    %v2465 = vunpack.c.l.b16 %v1050
    %v2466 = vunpack.c.h.b16 %v1050
    %v2467 = vunpack.c.l.b16 %v1051
    %v2468 = vunpack.c.h.b16 %v1051
    %v2469 = vunpack.c.l.b16 %v1052
    %v2470 = vunpack.c.h.b16 %v1052
    %v2471 = vunpack.c.l.b16 %v1053
    %v2472 = vunpack.c.h.b16 %v1053
    %v2473 = vunpack.c.l.b16 %v1054
    %v2474 = vunpack.c.h.b16 %v1054
    %v2475 = vunpack.c.l.b16 %v1055
    %v2476 = vunpack.c.h.b16 %v1055
    %v2477 = vunpack.c.l.b16 %v1056
    %v2478 = vunpack.c.h.b16 %v1056
    %v2479 = vunpack.c.l.b16 %v1057
    %v2480 = vunpack.c.h.b16 %v1057
    %v2481 = vunpack.c.l.b16 %v1058
    %v2482 = vunpack.c.h.b16 %v1058
    %v2483 = vunpack.c.l.b16 %v1059
    %v2484 = vunpack.c.h.b16 %v1059
    %v2485 = vunpack.c.l.b16 %v1060
    %v2486 = vunpack.c.h.b16 %v1060
    %v2487 = vunpack.c.l.b16 %v1061
    %v2488 = vunpack.c.h.b16 %v1061
    %v2489 = vunpack.c.l.b16 %v1062
    %v2490 = vunpack.c.h.b16 %v1062
    %v2491 = vunpack.c.l.b16 %v1063
    %v2492 = vunpack.c.h.b16 %v1063
    %v2493 = vunpack.c.l.b16 %v1064
    %v2494 = vunpack.c.h.b16 %v1064
    %v2495 = vunpack.c.l.b16 %v1065
    %v2496 = vunpack.c.h.b16 %v1065
    %v2497 = vunpack.c.l.b16 %v1066
    %v2498 = vunpack.c.h.b16 %v1066
    %v2499 = vunpack.c.l.b16 %v1067
    %v2500 = vunpack.c.h.b16 %v1067
    %v2501 = vunpack.c.l.b16 %v1068
    %v2502 = vunpack.c.h.b16 %v1068
    %v2503 = vunpack.c.l.b16 %v1069
    %v2504 = vunpack.c.h.b16 %v1069
    %v2505 = vunpack.c.l.b16 %v1070
    %v2506 = vunpack.c.h.b16 %v1070
    %v2507 = vunpack.c.l.b16 %v1071
    %v2508 = vunpack.c.h.b16 %v1071
    %v2509 = vunpack.c.l.b16 %v1072
    %v2510 = vunpack.c.h.b16 %v1072
    %v2511 = vunpack.c.l.b16 %v1073
    %v2512 = vunpack.c.h.b16 %v1073
    %v2513 = vunpack.c.l.b16 %v1074
    %v2514 = vunpack.c.h.b16 %v1074
    %v2515 = vunpack.c.l.b16 %v1075
    %v2516 = vunpack.c.h.b16 %v1075
    %v2517 = vunpack.c.l.b16 %v1076
    %v2518 = vunpack.c.h.b16 %v1076
    %v2519 = vunpack.c.l.b16 %v1077
    %v2520 = vunpack.c.h.b16 %v1077
    %v2521 = vunpack.c.l.b16 %v1078
    %v2522 = vunpack.c.h.b16 %v1078
    %v2523 = vunpack.c.l.b16 %v1079
    %v2524 = vunpack.c.h.b16 %v1079
    %v2525 = vunpack.c.l.b16 %v1080
    %v2526 = vunpack.c.h.b16 %v1080
    %v2527 = vunpack.c.l.b16 %v1081
    %v2528 = vunpack.c.h.b16 %v1081
    %v2529 = vunpack.c.l.b16 %v1082
    %v2530 = vunpack.c.h.b16 %v1082
    %v2531 = vunpack.c.l.b16 %v1083
    %v2532 = vunpack.c.h.b16 %v1083
    %v2533 = vunpack.c.l.b16 %v1084
    %v2534 = vunpack.c.h.b16 %v1084
    %v2535 = vunpack.c.l.b16 %v1085
    %v2536 = vunpack.c.h.b16 %v1085
    %v2537 = vunpack.c.l.b16 %v1086
    %v2538 = vunpack.c.h.b16 %v1086
    %v2539 = vunpack.c.l.b16 %v1087
    %v2540 = vunpack.c.h.b16 %v1087
    %v2541 = vunpack.c.l.b16 %v1088
    %v2542 = vunpack.c.h.b16 %v1088
    %v2543 = vunpack.c.l.b16 %v1089
    %v2544 = vunpack.c.h.b16 %v1089
    %v2545 = vunpack.c.l.b16 %v1090
    %v2546 = vunpack.c.h.b16 %v1090
    %v2547 = vunpack.c.l.b16 %v1091
    %v2548 = vunpack.c.h.b16 %v1091
    %v2549 = vunpack.c.l.b16 %v1092
    %v2550 = vunpack.c.h.b16 %v1092
    %v2551 = vunpack.c.l.b16 %v1093
    %v2552 = vunpack.c.h.b16 %v1093
    %v2553 = vunpack.c.l.b16 %v1094
    %v2554 = vunpack.c.h.b16 %v1094
    %v2555 = vunpack.c.l.b16 %v1095
    %v2556 = vunpack.c.h.b16 %v1095
    %v2557 = vunpack.c.l.b16 %v1096
    %v2558 = vunpack.c.h.b16 %v1096
    %v2559 = vunpack.c.l.b16 %v1097
    %v2560 = vunpack.c.h.b16 %v1097
    %v2561 = vunpack.c.l.b16 %v1098
    %v2562 = vunpack.c.h.b16 %v1098
    %v2563 = vunpack.c.l.b16 %v1099
    %v2564 = vunpack.c.h.b16 %v1099
    %v2565 = vunpack.c.l.b16 %v1100
    %v2566 = vunpack.c.h.b16 %v1100
    %v2567 = vunpack.c.l.b16 %v1101
    %v2568 = vunpack.c.h.b16 %v1101
    %v2569 = vunpack.c.l.b16 %v1102
    %v2570 = vunpack.c.h.b16 %v1102
    %v2571 = vunpack.c.l.b16 %v1103
    %v2572 = vunpack.c.h.b16 %v1103
    %v2573 = vunpack.c.l.b16 %v1104
    %v2574 = vunpack.c.h.b16 %v1104
    %v2575 = vunpack.c.l.b16 %v1105
    %v2576 = vunpack.c.h.b16 %v1105
    %v2577 = vunpack.c.l.b16 %v1106
    %v2578 = vunpack.c.h.b16 %v1106
    %v2579 = vunpack.c.l.b16 %v1107
    %v2580 = vunpack.c.h.b16 %v1107
    %v2581 = vunpack.c.l.b16 %v1108
    %v2582 = vunpack.c.h.b16 %v1108
    %v2583 = vunpack.c.l.b16 %v1109
    %v2584 = vunpack.c.h.b16 %v1109
    %v2585 = vunpack.c.l.b16 %v1110
    %v2586 = vunpack.c.h.b16 %v1110
    %v2587 = vunpack.c.l.b16 %v1111
    %v2588 = vunpack.c.h.b16 %v1111
    %v2589 = vunpack.c.l.b16 %v1112
    %v2590 = vunpack.c.h.b16 %v1112
    %v2591 = vunpack.c.l.b16 %v1113
    %v2592 = vunpack.c.h.b16 %v1113
    %v2593 = vunpack.c.l.b16 %v1114
    %v2594 = vunpack.c.h.b16 %v1114
    %v2595 = vunpack.c.l.b16 %v1115
    %v2596 = vunpack.c.h.b16 %v1115
    %v2597 = vunpack.c.l.b16 %v1116
    %v2598 = vunpack.c.h.b16 %v1116
    %v2599 = vunpack.c.l.b16 %v1117
    %v2600 = vunpack.c.h.b16 %v1117
    %v2601 = vunpack.c.l.b16 %v1118
    %v2602 = vunpack.c.h.b16 %v1118
    %v2603 = vunpack.c.l.b16 %v1119
    %v2604 = vunpack.c.h.b16 %v1119
    %v2605 = vunpack.c.l.b16 %v1120
    %v2606 = vunpack.c.h.b16 %v1120
    %v2607 = vunpack.c.l.b16 %v1121
    %v2608 = vunpack.c.h.b16 %v1121
    %v2609 = vunpack.c.l.b16 %v1122
    %v2610 = vunpack.c.h.b16 %v1122
    %v2611 = vunpack.c.l.b16 %v1123
    %v2612 = vunpack.c.h.b16 %v1123
    %v2613 = vunpack.c.l.b16 %v1124
    %v2614 = vunpack.c.h.b16 %v1124
    %v2615 = vunpack.c.l.b16 %v1125
    %v2616 = vunpack.c.h.b16 %v1125
    %v2617 = vunpack.c.l.b16 %v1126
    %v2618 = vunpack.c.h.b16 %v1126
    %v2619 = vunpack.c.l.b16 %v1127
    %v2620 = vunpack.c.h.b16 %v1127
    %v2621 = vunpack.c.l.b16 %v1128
    %v2622 = vunpack.c.h.b16 %v1128
    %v2623 = vunpack.c.l.b16 %v1129
    %v2624 = vunpack.c.h.b16 %v1129
    %v2625 = vunpack.c.l.b16 %v1130
    %v2626 = vunpack.c.h.b16 %v1130
    %v2627 = vunpack.c.l.b16 %v1131
    %v2628 = vunpack.c.h.b16 %v1131
    %v2629 = vunpack.c.l.b16 %v1132
    %v2630 = vunpack.c.h.b16 %v1132
    %v2631 = vunpack.c.l.b16 %v1133
    %v2632 = vunpack.c.h.b16 %v1133
    %v2633 = vunpack.c.l.b16 %v1134
    %v2634 = vunpack.c.h.b16 %v1134
    %v2635 = vunpack.c.l.b16 %v1135
    %v2636 = vunpack.c.h.b16 %v1135
    %v2637 = vunpack.c.l.b16 %v1136
    %v2638 = vunpack.c.h.b16 %v1136
    %v2639 = vunpack.c.l.b16 %v1137
    %v2640 = vunpack.c.h.b16 %v1137
    %v2641 = vunpack.c.l.b16 %v1138
    %v2642 = vunpack.c.h.b16 %v1138
    %v2643 = vunpack.c.l.b16 %v1139
    %v2644 = vunpack.c.h.b16 %v1139
    %v2645 = vunpack.c.l.b16 %v1140
    %v2646 = vunpack.c.h.b16 %v1140
    %v2647 = vunpack.c.l.b16 %v1141
    %v2648 = vunpack.c.h.b16 %v1141
    %v2649 = vunpack.c.l.b16 %v1142
    %v2650 = vunpack.c.h.b16 %v1142
    %v2651 = vunpack.c.l.b16 %v1143
    %v2652 = vunpack.c.h.b16 %v1143
    %v2653 = vunpack.c.l.b16 %v1144
    %v2654 = vunpack.c.h.b16 %v1144
    %v2655 = vunpack.c.l.b16 %v1145
    %v2656 = vunpack.c.h.b16 %v1145
    %v2657 = vunpack.c.l.b16 %v1146
    %v2658 = vunpack.c.h.b16 %v1146
    %v2659 = vunpack.c.l.b16 %v1147
    %v2660 = vunpack.c.h.b16 %v1147
    %v2661 = vunpack.c.l.b16 %v1148
    %v2662 = vunpack.c.h.b16 %v1148
    %v2663 = vunpack.c.l.b16 %v1149
    %v2664 = vunpack.c.h.b16 %v1149
    %v2665 = vunpack.c.l.b16 %v1150
    %v2666 = vunpack.c.h.b16 %v1150
    %v2667 = vunpack.c.l.b16 %v1151
    %v2668 = vunpack.c.h.b16 %v1151
    %v2669 = vunpack.c.l.b16 %v1152
    %v2670 = vunpack.c.h.b16 %v1152
    %v2671 = vunpack.c.l.b16 %v1153
    %v2672 = vunpack.c.h.b16 %v1153
    %v2673 = vunpack.c.l.b16 %v1154
    %v2674 = vunpack.c.h.b16 %v1154
    %v2675 = vunpack.c.l.b16 %v1155
    %v2676 = vunpack.c.h.b16 %v1155
    %v2677 = vunpack.c.l.b16 %v1156
    %v2678 = vunpack.c.h.b16 %v1156
    %v2679 = vunpack.c.l.b16 %v1157
    %v2680 = vunpack.c.h.b16 %v1157
    %v2681 = vunpack.c.l.b16 %v1158
    %v2682 = vunpack.c.h.b16 %v1158
    %v2683 = vunpack.c.l.b16 %v1159
    %v2684 = vunpack.c.h.b16 %v1159
    %v2685 = vunpack.c.l.b16 %v1160
    %v2686 = vunpack.c.h.b16 %v1160
    %v2687 = vunpack.c.l.b16 %v1161
    %v2688 = vunpack.c.h.b16 %v1161
    %v2689 = vunpack.c.l.b16 %v1162
    %v2690 = vunpack.c.h.b16 %v1162
    %v2691 = vunpack.c.l.b16 %v1163
    %v2692 = vunpack.c.h.b16 %v1163
    %v2693 = vunpack.c.l.b16 %v1164
    %v2694 = vunpack.c.h.b16 %v1164
    %v2695 = vunpack.c.l.b16 %v1165
    %v2696 = vunpack.c.h.b16 %v1165
    %v2697 = vunpack.c.l.b16 %v1166
    %v2698 = vunpack.c.h.b16 %v1166
    %v2699 = vunpack.c.l.b16 %v1167
    %v2700 = vunpack.c.h.b16 %v1167
    %v2701 = vunpack.c.l.b16 %v1168
    %v2702 = vunpack.c.h.b16 %v1168
    %v2703 = vunpack.c.l.b16 %v1169
    %v2704 = vunpack.c.h.b16 %v1169
    %v2705 = vunpack.c.l.b16 %v1170
    %v2706 = vunpack.c.h.b16 %v1170
    %v2707 = vunpack.c.l.b16 %v1171
    %v2708 = vunpack.c.h.b16 %v1171
    %v2709 = vunpack.c.l.b16 %v1172
    %v2710 = vunpack.c.h.b16 %v1172
    %v2711 = vunpack.c.l.b16 %v1173
    %v2712 = vunpack.c.h.b16 %v1173
    %v2713 = vunpack.c.l.b16 %v1174
    %v2714 = vunpack.c.h.b16 %v1174
    %v2715 = vunpack.c.l.b16 %v1175
    %v2716 = vunpack.c.h.b16 %v1175
    %v2717 = vunpack.c.l.b16 %v1176
    %v2718 = vunpack.c.h.b16 %v1176
    %v2719 = vunpack.c.l.b16 %v1177
    %v2720 = vunpack.c.h.b16 %v1177
    %v2721 = vunpack.c.l.b16 %v1178
    %v2722 = vunpack.c.h.b16 %v1178
    %v2723 = vunpack.c.l.b16 %v1179
    %v2724 = vunpack.c.h.b16 %v1179
    %v2725 = vunpack.c.l.b16 %v1180
    %v2726 = vunpack.c.h.b16 %v1180
    %v2727 = vunpack.c.l.b16 %v1181
    %v2728 = vunpack.c.h.b16 %v1181
    %v2729 = vunpack.c.l.b16 %v1182
    %v2730 = vunpack.c.h.b16 %v1182
    %v2731 = vunpack.c.l.b16 %v1183
    %v2732 = vunpack.c.h.b16 %v1183
    %v2733 = vunpack.c.l.b16 %v1184
    %v2734 = vunpack.c.h.b16 %v1184
    %v2735 = vunpack.c.l.b16 %v1185
    %v2736 = vunpack.c.h.b16 %v1185
    %v2737 = vunpack.c.l.b16 %v1186
    %v2738 = vunpack.c.h.b16 %v1186
    %v2739 = vunpack.c.l.b16 %v1187
    %v2740 = vunpack.c.h.b16 %v1187
    %v2741 = vunpack.c.l.b16 %v1188
    %v2742 = vunpack.c.h.b16 %v1188
    %v2743 = vunpack.c.l.b16 %v1189
    %v2744 = vunpack.c.h.b16 %v1189
    %v2745 = vunpack.c.l.b16 %v1190
    %v2746 = vunpack.c.h.b16 %v1190
    %v2747 = vunpack.c.l.b16 %v1191
    %v2748 = vunpack.c.h.b16 %v1191
    %v2749 = vpack.c.b16 %v1733, %v1725
    %v2750 = vpack.c.b16 %v1734, %v1726
    %v2751 = vpack.c.b16 %v1735, %v1727
    %v2752 = vpack.c.b16 %v1736, %v1728
    %v2753 = vpack.c.b16 %v1737, %v1729
    %v2754 = vpack.c.b16 %v1738, %v1730
    %v2755 = vpack.c.b16 %v1739, %v1731
    %v2756 = vpack.c.b16 %v1740, %v1732
    %v2757 = vpack.c.b16 %v1749, %v1741
    %v2758 = vpack.c.b16 %v1750, %v1742
    %v2759 = vpack.c.b16 %v1751, %v1743
    %v2760 = vpack.c.b16 %v1752, %v1744
    %v2761 = vpack.c.b16 %v1753, %v1745
    %v2762 = vpack.c.b16 %v1754, %v1746
    %v2763 = vpack.c.b16 %v1755, %v1747
    %v2764 = vpack.c.b16 %v1756, %v1748
    %v2765 = vpack.c.b16 %v1765, %v1757
    %v2766 = vpack.c.b16 %v1766, %v1758
    %v2767 = vpack.c.b16 %v1767, %v1759
    %v2768 = vpack.c.b16 %v1768, %v1760
    %v2769 = vpack.c.b16 %v1769, %v1761
    %v2770 = vpack.c.b16 %v1770, %v1762
    %v2771 = vpack.c.b16 %v1771, %v1763
    %v2772 = vpack.c.b16 %v1772, %v1764
    %v2773 = vpack.c.b16 %v1781, %v1773
    %v2774 = vpack.c.b16 %v1782, %v1774
    %v2775 = vpack.c.b16 %v1783, %v1775
    %v2776 = vpack.c.b16 %v1784, %v1776
    %v2777 = vpack.c.b16 %v1785, %v1777
    %v2778 = vpack.c.b16 %v1786, %v1778
    %v2779 = vpack.c.b16 %v1787, %v1779
    %v2780 = vpack.c.b16 %v1788, %v1780
    %v2781 = vpack.c.b16 %v1797, %v1789
    %v2782 = vpack.c.b16 %v1798, %v1790
    %v2783 = vpack.c.b16 %v1799, %v1791
    %v2784 = vpack.c.b16 %v1800, %v1792
    %v2785 = vpack.c.b16 %v1801, %v1793
    %v2786 = vpack.c.b16 %v1802, %v1794
    %v2787 = vpack.c.b16 %v1803, %v1795
    %v2788 = vpack.c.b16 %v1804, %v1796
    %v2789 = vpack.c.b16 %v1813, %v1805
    %v2790 = vpack.c.b16 %v1814, %v1806
    %v2791 = vpack.c.b16 %v1815, %v1807
    %v2792 = vpack.c.b16 %v1816, %v1808
    %v2793 = vpack.c.b16 %v1817, %v1809
    %v2794 = vpack.c.b16 %v1818, %v1810
    %v2795 = vpack.c.b16 %v1819, %v1811
    %v2796 = vpack.c.b16 %v1820, %v1812
    %v2797 = vpack.c.b16 %v1829, %v1821
    %v2798 = vpack.c.b16 %v1830, %v1822
    %v2799 = vpack.c.b16 %v1831, %v1823
    %v2800 = vpack.c.b16 %v1832, %v1824
    %v2801 = vpack.c.b16 %v1833, %v1825
    %v2802 = vpack.c.b16 %v1834, %v1826
    %v2803 = vpack.c.b16 %v1835, %v1827
    %v2804 = vpack.c.b16 %v1836, %v1828
    %v2805 = vpack.c.b16 %v1845, %v1837
    %v2806 = vpack.c.b16 %v1846, %v1838
    %v2807 = vpack.c.b16 %v1847, %v1839
    %v2808 = vpack.c.b16 %v1848, %v1840
    %v2809 = vpack.c.b16 %v1849, %v1841
    %v2810 = vpack.c.b16 %v1850, %v1842
    %v2811 = vpack.c.b16 %v1851, %v1843
    %v2812 = vpack.c.b16 %v1852, %v1844
    %v2813 = vpack.c.b16 %v1861, %v1853
    %v2814 = vpack.c.b16 %v1862, %v1854
    %v2815 = vpack.c.b16 %v1863, %v1855
    %v2816 = vpack.c.b16 %v1864, %v1856
    %v2817 = vpack.c.b16 %v1865, %v1857
    %v2818 = vpack.c.b16 %v1866, %v1858
    %v2819 = vpack.c.b16 %v1867, %v1859
    %v2820 = vpack.c.b16 %v1868, %v1860
    %v2821 = vpack.c.b16 %v1877, %v1869
    %v2822 = vpack.c.b16 %v1878, %v1870
    %v2823 = vpack.c.b16 %v1879, %v1871
    %v2824 = vpack.c.b16 %v1880, %v1872
    %v2825 = vpack.c.b16 %v1881, %v1873
    %v2826 = vpack.c.b16 %v1882, %v1874
    %v2827 = vpack.c.b16 %v1883, %v1875
    %v2828 = vpack.c.b16 %v1884, %v1876
    %v2829 = vpack.c.b16 %v1893, %v1885
    %v2830 = vpack.c.b16 %v1894, %v1886
    %v2831 = vpack.c.b16 %v1895, %v1887
    %v2832 = vpack.c.b16 %v1896, %v1888
    %v2833 = vpack.c.b16 %v1897, %v1889
    %v2834 = vpack.c.b16 %v1898, %v1890
    %v2835 = vpack.c.b16 %v1899, %v1891
    %v2836 = vpack.c.b16 %v1900, %v1892
    %v2837 = vpack.c.b16 %v1909, %v1901
    %v2838 = vpack.c.b16 %v1910, %v1902
    %v2839 = vpack.c.b16 %v1911, %v1903
    %v2840 = vpack.c.b16 %v1912, %v1904
    %v2841 = vpack.c.b16 %v1913, %v1905
    %v2842 = vpack.c.b16 %v1914, %v1906
    %v2843 = vpack.c.b16 %v1915, %v1907
    %v2844 = vpack.c.b16 %v1916, %v1908
    %v2845 = vpack.c.b16 %v1925, %v1917
    %v2846 = vpack.c.b16 %v1926, %v1918
    %v2847 = vpack.c.b16 %v1927, %v1919
    %v2848 = vpack.c.b16 %v1928, %v1920
    %v2849 = vpack.c.b16 %v1929, %v1921
    %v2850 = vpack.c.b16 %v1930, %v1922
    %v2851 = vpack.c.b16 %v1931, %v1923
    %v2852 = vpack.c.b16 %v1932, %v1924
    %v2853 = vpack.c.b16 %v1941, %v1933
    %v2854 = vpack.c.b16 %v1942, %v1934
    %v2855 = vpack.c.b16 %v1943, %v1935
    %v2856 = vpack.c.b16 %v1944, %v1936
    %v2857 = vpack.c.b16 %v1945, %v1937
    %v2858 = vpack.c.b16 %v1946, %v1938
    %v2859 = vpack.c.b16 %v1947, %v1939
    %v2860 = vpack.c.b16 %v1948, %v1940
    %v2861 = vpack.c.b16 %v1957, %v1949
    %v2862 = vpack.c.b16 %v1958, %v1950
    %v2863 = vpack.c.b16 %v1959, %v1951
    %v2864 = vpack.c.b16 %v1960, %v1952
    %v2865 = vpack.c.b16 %v1961, %v1953
    %v2866 = vpack.c.b16 %v1962, %v1954
    %v2867 = vpack.c.b16 %v1963, %v1955
    %v2868 = vpack.c.b16 %v1964, %v1956
    %v2869 = vpack.c.b16 %v1973, %v1965
    %v2870 = vpack.c.b16 %v1974, %v1966
    %v2871 = vpack.c.b16 %v1975, %v1967
    %v2872 = vpack.c.b16 %v1976, %v1968
    %v2873 = vpack.c.b16 %v1977, %v1969
    %v2874 = vpack.c.b16 %v1978, %v1970
    %v2875 = vpack.c.b16 %v1979, %v1971
    %v2876 = vpack.c.b16 %v1980, %v1972
    %v2877 = vpack.c.b16 %v1989, %v1981
    %v2878 = vpack.c.b16 %v1990, %v1982
    %v2879 = vpack.c.b16 %v1991, %v1983
    %v2880 = vpack.c.b16 %v1992, %v1984
    %v2881 = vpack.c.b16 %v1993, %v1985
    %v2882 = vpack.c.b16 %v1994, %v1986
    %v2883 = vpack.c.b16 %v1995, %v1987
    %v2884 = vpack.c.b16 %v1996, %v1988
    %v2885 = vpack.c.b16 %v2005, %v1997
    %v2886 = vpack.c.b16 %v2006, %v1998
    %v2887 = vpack.c.b16 %v2007, %v1999
    %v2888 = vpack.c.b16 %v2008, %v2000
    %v2889 = vpack.c.b16 %v2009, %v2001
    %v2890 = vpack.c.b16 %v2010, %v2002
    %v2891 = vpack.c.b16 %v2011, %v2003
    %v2892 = vpack.c.b16 %v2012, %v2004
    %v2893 = vpack.c.b16 %v2021, %v2013
    %v2894 = vpack.c.b16 %v2022, %v2014
    %v2895 = vpack.c.b16 %v2023, %v2015
    %v2896 = vpack.c.b16 %v2024, %v2016
    %v2897 = vpack.c.b16 %v2025, %v2017
    %v2898 = vpack.c.b16 %v2026, %v2018
    %v2899 = vpack.c.b16 %v2027, %v2019
    %v2900 = vpack.c.b16 %v2028, %v2020
    %v2901 = vpack.c.b16 %v2037, %v2029
    %v2902 = vpack.c.b16 %v2038, %v2030
    %v2903 = vpack.c.b16 %v2039, %v2031
    %v2904 = vpack.c.b16 %v2040, %v2032
    %v2905 = vpack.c.b16 %v2041, %v2033
    %v2906 = vpack.c.b16 %v2042, %v2034
    %v2907 = vpack.c.b16 %v2043, %v2035
    %v2908 = vpack.c.b16 %v2044, %v2036
    %v2909 = vpack.c.b16 %v2053, %v2045
    %v2910 = vpack.c.b16 %v2054, %v2046
    %v2911 = vpack.c.b16 %v2055, %v2047
    %v2912 = vpack.c.b16 %v2056, %v2048
    %v2913 = vpack.c.b16 %v2057, %v2049
    %v2914 = vpack.c.b16 %v2058, %v2050
    %v2915 = vpack.c.b16 %v2059, %v2051
    %v2916 = vpack.c.b16 %v2060, %v2052
    %v2917 = vpack.c.b16 %v2069, %v2061
    %v2918 = vpack.c.b16 %v2070, %v2062
    %v2919 = vpack.c.b16 %v2071, %v2063
    %v2920 = vpack.c.b16 %v2072, %v2064
    %v2921 = vpack.c.b16 %v2073, %v2065
    %v2922 = vpack.c.b16 %v2074, %v2066
    %v2923 = vpack.c.b16 %v2075, %v2067
    %v2924 = vpack.c.b16 %v2076, %v2068
    %v2925 = vpack.c.b16 %v2085, %v2077
    %v2926 = vpack.c.b16 %v2086, %v2078
    %v2927 = vpack.c.b16 %v2087, %v2079
    %v2928 = vpack.c.b16 %v2088, %v2080
    %v2929 = vpack.c.b16 %v2089, %v2081
    %v2930 = vpack.c.b16 %v2090, %v2082
    %v2931 = vpack.c.b16 %v2091, %v2083
    %v2932 = vpack.c.b16 %v2092, %v2084
    %v2933 = vpack.c.b16 %v2101, %v2093
    %v2934 = vpack.c.b16 %v2102, %v2094
    %v2935 = vpack.c.b16 %v2103, %v2095
    %v2936 = vpack.c.b16 %v2104, %v2096
    %v2937 = vpack.c.b16 %v2105, %v2097
    %v2938 = vpack.c.b16 %v2106, %v2098
    %v2939 = vpack.c.b16 %v2107, %v2099
    %v2940 = vpack.c.b16 %v2108, %v2100
    %v2941 = vpack.c.b16 %v2117, %v2109
    %v2942 = vpack.c.b16 %v2118, %v2110
    %v2943 = vpack.c.b16 %v2119, %v2111
    %v2944 = vpack.c.b16 %v2120, %v2112
    %v2945 = vpack.c.b16 %v2121, %v2113
    %v2946 = vpack.c.b16 %v2122, %v2114
    %v2947 = vpack.c.b16 %v2123, %v2115
    %v2948 = vpack.c.b16 %v2124, %v2116
    %v2949 = vpack.c.b16 %v2133, %v2125
    %v2950 = vpack.c.b16 %v2134, %v2126
    %v2951 = vpack.c.b16 %v2135, %v2127
    %v2952 = vpack.c.b16 %v2136, %v2128
    %v2953 = vpack.c.b16 %v2137, %v2129
    %v2954 = vpack.c.b16 %v2138, %v2130
    %v2955 = vpack.c.b16 %v2139, %v2131
    %v2956 = vpack.c.b16 %v2140, %v2132
    %v2957 = vpack.c.b16 %v2149, %v2141
    %v2958 = vpack.c.b16 %v2150, %v2142
    %v2959 = vpack.c.b16 %v2151, %v2143
    %v2960 = vpack.c.b16 %v2152, %v2144
    %v2961 = vpack.c.b16 %v2153, %v2145
    %v2962 = vpack.c.b16 %v2154, %v2146
    %v2963 = vpack.c.b16 %v2155, %v2147
    %v2964 = vpack.c.b16 %v2156, %v2148
    %v2965 = vpack.c.b16 %v2165, %v2157
    %v2966 = vpack.c.b16 %v2166, %v2158
    %v2967 = vpack.c.b16 %v2167, %v2159
    %v2968 = vpack.c.b16 %v2168, %v2160
    %v2969 = vpack.c.b16 %v2169, %v2161
    %v2970 = vpack.c.b16 %v2170, %v2162
    %v2971 = vpack.c.b16 %v2171, %v2163
    %v2972 = vpack.c.b16 %v2172, %v2164
    %v2973 = vpack.c.b16 %v2181, %v2173
    %v2974 = vpack.c.b16 %v2182, %v2174
    %v2975 = vpack.c.b16 %v2183, %v2175
    %v2976 = vpack.c.b16 %v2184, %v2176
    %v2977 = vpack.c.b16 %v2185, %v2177
    %v2978 = vpack.c.b16 %v2186, %v2178
    %v2979 = vpack.c.b16 %v2187, %v2179
    %v2980 = vpack.c.b16 %v2188, %v2180
    %v2981 = vpack.c.b16 %v2197, %v2189
    %v2982 = vpack.c.b16 %v2198, %v2190
    %v2983 = vpack.c.b16 %v2199, %v2191
    %v2984 = vpack.c.b16 %v2200, %v2192
    %v2985 = vpack.c.b16 %v2201, %v2193
    %v2986 = vpack.c.b16 %v2202, %v2194
    %v2987 = vpack.c.b16 %v2203, %v2195
    %v2988 = vpack.c.b16 %v2204, %v2196
    %v2989 = vpack.c.b16 %v2213, %v2205
    %v2990 = vpack.c.b16 %v2214, %v2206
    %v2991 = vpack.c.b16 %v2215, %v2207
    %v2992 = vpack.c.b16 %v2216, %v2208
    %v2993 = vpack.c.b16 %v2217, %v2209
    %v2994 = vpack.c.b16 %v2218, %v2210
    %v2995 = vpack.c.b16 %v2219, %v2211
    %v2996 = vpack.c.b16 %v2220, %v2212
    %v2997 = vpack.c.b16 %v2229, %v2221
    %v2998 = vpack.c.b16 %v2230, %v2222
    %v2999 = vpack.c.b16 %v2231, %v2223
    %v3000 = vpack.c.b16 %v2232, %v2224
    %v3001 = vpack.c.b16 %v2233, %v2225
    %v3002 = vpack.c.b16 %v2234, %v2226
    %v3003 = vpack.c.b16 %v2235, %v2227
    %v3004 = vpack.c.b16 %v2236, %v2228
    %v3005 = vpack.c.b16 %v2245, %v2237
    %v3006 = vpack.c.b16 %v2246, %v2238
    %v3007 = vpack.c.b16 %v2247, %v2239
    %v3008 = vpack.c.b16 %v2248, %v2240
    %v3009 = vpack.c.b16 %v2249, %v2241
    %v3010 = vpack.c.b16 %v2250, %v2242
    %v3011 = vpack.c.b16 %v2251, %v2243
    %v3012 = vpack.c.b16 %v2252, %v2244
    %v3013 = vpack.c.b16 %v2261, %v2253
    %v3014 = vpack.c.b16 %v2262, %v2254
    %v3015 = vpack.c.b16 %v2263, %v2255
    %v3016 = vpack.c.b16 %v2264, %v2256
    %v3017 = vpack.c.b16 %v2265, %v2257
    %v3018 = vpack.c.b16 %v2266, %v2258
    %v3019 = vpack.c.b16 %v2267, %v2259
    %v3020 = vpack.c.b16 %v2268, %v2260
    %v3021 = vpack.c.b16 %v2277, %v2269
    %v3022 = vpack.c.b16 %v2278, %v2270
    %v3023 = vpack.c.b16 %v2279, %v2271
    %v3024 = vpack.c.b16 %v2280, %v2272
    %v3025 = vpack.c.b16 %v2281, %v2273
    %v3026 = vpack.c.b16 %v2282, %v2274
    %v3027 = vpack.c.b16 %v2283, %v2275
    %v3028 = vpack.c.b16 %v2284, %v2276
    %v3029 = vpack.c.b16 %v2293, %v2285
    %v3030 = vpack.c.b16 %v2294, %v2286
    %v3031 = vpack.c.b16 %v2295, %v2287
    %v3032 = vpack.c.b16 %v2296, %v2288
    %v3033 = vpack.c.b16 %v2297, %v2289
    %v3034 = vpack.c.b16 %v2298, %v2290
    %v3035 = vpack.c.b16 %v2299, %v2291
    %v3036 = vpack.c.b16 %v2300, %v2292
    %v3037 = vpack.c.b16 %v2309, %v2301
    %v3038 = vpack.c.b16 %v2310, %v2302
    %v3039 = vpack.c.b16 %v2311, %v2303
    %v3040 = vpack.c.b16 %v2312, %v2304
    %v3041 = vpack.c.b16 %v2313, %v2305
    %v3042 = vpack.c.b16 %v2314, %v2306
    %v3043 = vpack.c.b16 %v2315, %v2307
    %v3044 = vpack.c.b16 %v2316, %v2308
    %v3045 = vpack.c.b16 %v2325, %v2317
    %v3046 = vpack.c.b16 %v2326, %v2318
    %v3047 = vpack.c.b16 %v2327, %v2319
    %v3048 = vpack.c.b16 %v2328, %v2320
    %v3049 = vpack.c.b16 %v2329, %v2321
    %v3050 = vpack.c.b16 %v2330, %v2322
    %v3051 = vpack.c.b16 %v2331, %v2323
    %v3052 = vpack.c.b16 %v2332, %v2324
    %v3053 = vpack.c.b16 %v2341, %v2333
    %v3054 = vpack.c.b16 %v2342, %v2334
    %v3055 = vpack.c.b16 %v2343, %v2335
    %v3056 = vpack.c.b16 %v2344, %v2336
    %v3057 = vpack.c.b16 %v2345, %v2337
    %v3058 = vpack.c.b16 %v2346, %v2338
    %v3059 = vpack.c.b16 %v2347, %v2339
    %v3060 = vpack.c.b16 %v2348, %v2340
    %v3061 = vpack.c.b16 %v2357, %v2349
    %v3062 = vpack.c.b16 %v2358, %v2350
    %v3063 = vpack.c.b16 %v2359, %v2351
    %v3064 = vpack.c.b16 %v2360, %v2352
    %v3065 = vpack.c.b16 %v2361, %v2353
    %v3066 = vpack.c.b16 %v2362, %v2354
    %v3067 = vpack.c.b16 %v2363, %v2355
    %v3068 = vpack.c.b16 %v2364, %v2356
    %v3069 = vpack.c.b16 %v2373, %v2365
    %v3070 = vpack.c.b16 %v2374, %v2366
    %v3071 = vpack.c.b16 %v2375, %v2367
    %v3072 = vpack.c.b16 %v2376, %v2368
    %v3073 = vpack.c.b16 %v2377, %v2369
    %v3074 = vpack.c.b16 %v2378, %v2370
    %v3075 = vpack.c.b16 %v2379, %v2371
    %v3076 = vpack.c.b16 %v2380, %v2372
    %v3077 = vpack.c.b16 %v2389, %v2381
    %v3078 = vpack.c.b16 %v2390, %v2382
    %v3079 = vpack.c.b16 %v2391, %v2383
    %v3080 = vpack.c.b16 %v2392, %v2384
    %v3081 = vpack.c.b16 %v2393, %v2385
    %v3082 = vpack.c.b16 %v2394, %v2386
    %v3083 = vpack.c.b16 %v2395, %v2387
    %v3084 = vpack.c.b16 %v2396, %v2388
    %v3085 = vpack.c.b16 %v2405, %v2397
    %v3086 = vpack.c.b16 %v2406, %v2398
    %v3087 = vpack.c.b16 %v2407, %v2399
    %v3088 = vpack.c.b16 %v2408, %v2400
    %v3089 = vpack.c.b16 %v2409, %v2401
    %v3090 = vpack.c.b16 %v2410, %v2402
    %v3091 = vpack.c.b16 %v2411, %v2403
    %v3092 = vpack.c.b16 %v2412, %v2404
    %v3093 = vpack.c.b16 %v2421, %v2413
    %v3094 = vpack.c.b16 %v2422, %v2414
    %v3095 = vpack.c.b16 %v2423, %v2415
    %v3096 = vpack.c.b16 %v2424, %v2416
    %v3097 = vpack.c.b16 %v2425, %v2417
    %v3098 = vpack.c.b16 %v2426, %v2418
    %v3099 = vpack.c.b16 %v2427, %v2419
    %v3100 = vpack.c.b16 %v2428, %v2420
    %v3101 = vpack.c.b16 %v2437, %v2429
    %v3102 = vpack.c.b16 %v2438, %v2430
    %v3103 = vpack.c.b16 %v2439, %v2431
    %v3104 = vpack.c.b16 %v2440, %v2432
    %v3105 = vpack.c.b16 %v2441, %v2433
    %v3106 = vpack.c.b16 %v2442, %v2434
    %v3107 = vpack.c.b16 %v2443, %v2435
    %v3108 = vpack.c.b16 %v2444, %v2436
    %v3109 = vpack.c.b16 %v2453, %v2445
    %v3110 = vpack.c.b16 %v2454, %v2446
    %v3111 = vpack.c.b16 %v2455, %v2447
    %v3112 = vpack.c.b16 %v2456, %v2448
    %v3113 = vpack.c.b16 %v2457, %v2449
    %v3114 = vpack.c.b16 %v2458, %v2450
    %v3115 = vpack.c.b16 %v2459, %v2451
    %v3116 = vpack.c.b16 %v2460, %v2452
    %v3117 = vpack.c.b16 %v2469, %v2461
    %v3118 = vpack.c.b16 %v2470, %v2462
    %v3119 = vpack.c.b16 %v2471, %v2463
    %v3120 = vpack.c.b16 %v2472, %v2464
    %v3121 = vpack.c.b16 %v2473, %v2465
    %v3122 = vpack.c.b16 %v2474, %v2466
    %v3123 = vpack.c.b16 %v2475, %v2467
    %v3124 = vpack.c.b16 %v2476, %v2468
    %v3125 = vpack.c.b16 %v2485, %v2477
    %v3126 = vpack.c.b16 %v2486, %v2478
    %v3127 = vpack.c.b16 %v2487, %v2479
    %v3128 = vpack.c.b16 %v2488, %v2480
    %v3129 = vpack.c.b16 %v2489, %v2481
    %v3130 = vpack.c.b16 %v2490, %v2482
    %v3131 = vpack.c.b16 %v2491, %v2483
    %v3132 = vpack.c.b16 %v2492, %v2484
    %v3133 = vpack.c.b16 %v2501, %v2493
    %v3134 = vpack.c.b16 %v2502, %v2494
    %v3135 = vpack.c.b16 %v2503, %v2495
    %v3136 = vpack.c.b16 %v2504, %v2496
    %v3137 = vpack.c.b16 %v2505, %v2497
    %v3138 = vpack.c.b16 %v2506, %v2498
    %v3139 = vpack.c.b16 %v2507, %v2499
    %v3140 = vpack.c.b16 %v2508, %v2500
    %v3141 = vpack.c.b16 %v2517, %v2509
    %v3142 = vpack.c.b16 %v2518, %v2510
    %v3143 = vpack.c.b16 %v2519, %v2511
    %v3144 = vpack.c.b16 %v2520, %v2512
    %v3145 = vpack.c.b16 %v2521, %v2513
    %v3146 = vpack.c.b16 %v2522, %v2514
    %v3147 = vpack.c.b16 %v2523, %v2515
    %v3148 = vpack.c.b16 %v2524, %v2516
    %v3149 = vpack.c.b16 %v2533, %v2525
    %v3150 = vpack.c.b16 %v2534, %v2526
    %v3151 = vpack.c.b16 %v2535, %v2527
    %v3152 = vpack.c.b16 %v2536, %v2528
    %v3153 = vpack.c.b16 %v2537, %v2529
    %v3154 = vpack.c.b16 %v2538, %v2530
    %v3155 = vpack.c.b16 %v2539, %v2531
    %v3156 = vpack.c.b16 %v2540, %v2532
    %v3157 = vpack.c.b16 %v2549, %v2541
    %v3158 = vpack.c.b16 %v2550, %v2542
    %v3159 = vpack.c.b16 %v2551, %v2543
    %v3160 = vpack.c.b16 %v2552, %v2544
    %v3161 = vpack.c.b16 %v2553, %v2545
    %v3162 = vpack.c.b16 %v2554, %v2546
    %v3163 = vpack.c.b16 %v2555, %v2547
    %v3164 = vpack.c.b16 %v2556, %v2548
    %v3165 = vpack.c.b16 %v2565, %v2557
    %v3166 = vpack.c.b16 %v2566, %v2558
    %v3167 = vpack.c.b16 %v2567, %v2559
    %v3168 = vpack.c.b16 %v2568, %v2560
    %v3169 = vpack.c.b16 %v2569, %v2561
    %v3170 = vpack.c.b16 %v2570, %v2562
    %v3171 = vpack.c.b16 %v2571, %v2563
    %v3172 = vpack.c.b16 %v2572, %v2564
    %v3173 = vpack.c.b16 %v2581, %v2573
    %v3174 = vpack.c.b16 %v2582, %v2574
    %v3175 = vpack.c.b16 %v2583, %v2575
    %v3176 = vpack.c.b16 %v2584, %v2576
    %v3177 = vpack.c.b16 %v2585, %v2577
    %v3178 = vpack.c.b16 %v2586, %v2578
    %v3179 = vpack.c.b16 %v2587, %v2579
    %v3180 = vpack.c.b16 %v2588, %v2580
    %v3181 = vpack.c.b16 %v2597, %v2589
    %v3182 = vpack.c.b16 %v2598, %v2590
    %v3183 = vpack.c.b16 %v2599, %v2591
    %v3184 = vpack.c.b16 %v2600, %v2592
    %v3185 = vpack.c.b16 %v2601, %v2593
    %v3186 = vpack.c.b16 %v2602, %v2594
    %v3187 = vpack.c.b16 %v2603, %v2595
    %v3188 = vpack.c.b16 %v2604, %v2596
    %v3189 = vpack.c.b16 %v2613, %v2605
    %v3190 = vpack.c.b16 %v2614, %v2606
    %v3191 = vpack.c.b16 %v2615, %v2607
    %v3192 = vpack.c.b16 %v2616, %v2608
    %v3193 = vpack.c.b16 %v2617, %v2609
    %v3194 = vpack.c.b16 %v2618, %v2610
    %v3195 = vpack.c.b16 %v2619, %v2611
    %v3196 = vpack.c.b16 %v2620, %v2612
    %v3197 = vpack.c.b16 %v2629, %v2621
    %v3198 = vpack.c.b16 %v2630, %v2622
    %v3199 = vpack.c.b16 %v2631, %v2623
    %v3200 = vpack.c.b16 %v2632, %v2624
    %v3201 = vpack.c.b16 %v2633, %v2625
    %v3202 = vpack.c.b16 %v2634, %v2626
    %v3203 = vpack.c.b16 %v2635, %v2627
    %v3204 = vpack.c.b16 %v2636, %v2628
    %v3205 = vpack.c.b16 %v2645, %v2637
    %v3206 = vpack.c.b16 %v2646, %v2638
    %v3207 = vpack.c.b16 %v2647, %v2639
    %v3208 = vpack.c.b16 %v2648, %v2640
    %v3209 = vpack.c.b16 %v2649, %v2641
    %v3210 = vpack.c.b16 %v2650, %v2642
    %v3211 = vpack.c.b16 %v2651, %v2643
    %v3212 = vpack.c.b16 %v2652, %v2644
    %v3213 = vpack.c.b16 %v2661, %v2653
    %v3214 = vpack.c.b16 %v2662, %v2654
    %v3215 = vpack.c.b16 %v2663, %v2655
    %v3216 = vpack.c.b16 %v2664, %v2656
    %v3217 = vpack.c.b16 %v2665, %v2657
    %v3218 = vpack.c.b16 %v2666, %v2658
    %v3219 = vpack.c.b16 %v2667, %v2659
    %v3220 = vpack.c.b16 %v2668, %v2660
    %v3221 = vpack.c.b16 %v2677, %v2669
    %v3222 = vpack.c.b16 %v2678, %v2670
    %v3223 = vpack.c.b16 %v2679, %v2671
    %v3224 = vpack.c.b16 %v2680, %v2672
    %v3225 = vpack.c.b16 %v2681, %v2673
    %v3226 = vpack.c.b16 %v2682, %v2674
    %v3227 = vpack.c.b16 %v2683, %v2675
    %v3228 = vpack.c.b16 %v2684, %v2676
    %v3229 = vpack.c.b16 %v2693, %v2685
    %v3230 = vpack.c.b16 %v2694, %v2686
    %v3231 = vpack.c.b16 %v2695, %v2687
    %v3232 = vpack.c.b16 %v2696, %v2688
    %v3233 = vpack.c.b16 %v2697, %v2689
    %v3234 = vpack.c.b16 %v2698, %v2690
    %v3235 = vpack.c.b16 %v2699, %v2691
    %v3236 = vpack.c.b16 %v2700, %v2692
    %v3237 = vpack.c.b16 %v2709, %v2701
    %v3238 = vpack.c.b16 %v2710, %v2702
    %v3239 = vpack.c.b16 %v2711, %v2703
    %v3240 = vpack.c.b16 %v2712, %v2704
    %v3241 = vpack.c.b16 %v2713, %v2705
    %v3242 = vpack.c.b16 %v2714, %v2706
    %v3243 = vpack.c.b16 %v2715, %v2707
    %v3244 = vpack.c.b16 %v2716, %v2708
    %v3245 = vpack.c.b16 %v2725, %v2717
    %v3246 = vpack.c.b16 %v2726, %v2718
    %v3247 = vpack.c.b16 %v2727, %v2719
    %v3248 = vpack.c.b16 %v2728, %v2720
    %v3249 = vpack.c.b16 %v2729, %v2721
    %v3250 = vpack.c.b16 %v2730, %v2722
    %v3251 = vpack.c.b16 %v2731, %v2723
    %v3252 = vpack.c.b16 %v2732, %v2724
    %v3253 = vpack.c.b16 %v2741, %v2733
    %v3254 = vpack.c.b16 %v2742, %v2734
    %v3255 = vpack.c.b16 %v2743, %v2735
    %v3256 = vpack.c.b16 %v2744, %v2736
    %v3257 = vpack.c.b16 %v2745, %v2737
    %v3258 = vpack.c.b16 %v2746, %v2738
    %v3259 = vpack.c.b16 %v2747, %v2739
    %v3260 = vpack.c.b16 %v2748, %v2740
    %3773 = vmatpush.bf16.msra.mxu0 %v2805
    %3774 = vmatpush.bf16.msra.mxu0 %v2797
    %3775 = vmatpush.bf16.msra.mxu0 %v2789
    %3776 = vmatpush.bf16.msra.mxu0 %v2781
    %3777 = vmatpush.bf16.msra.mxu0 %v2773
    %3778 = vmatpush.bf16.msra.mxu0 %v2765
    %3779 = vmatpush.bf16.msra.mxu0 %v2757
    %3780 = vmatpush.bf16.msra.mxu0 %v2749
    %3781 = vmatmul.bf16.gmra.mxu0 %v672
    %v3782 = vpop.f32.mrf.mxu0
    %v3783 = vadd.f32 %v1197, %v3782
    %v3784 = vpop.f32.mrf.mxu0
    %3785 = vdwg.mxu0
    %3786 = vmatpush.bf16.msra.mxu0 %v2869
    %3787 = vmatpush.bf16.msra.mxu0 %v2861
    %3788 = vmatpush.bf16.msra.mxu0 %v2853
    %3789 = vmatpush.bf16.msra.mxu0 %v2845
    %3790 = vmatpush.bf16.msra.mxu0 %v2837
    %3791 = vmatpush.bf16.msra.mxu0 %v2829
    %3792 = vmatpush.bf16.msra.mxu0 %v2821
    %3793 = vmatpush.bf16.msra.mxu0 %v2813
    %3794 = vmatmul.bf16.gmra.mxu0 %v673
    %v3795 = vpop.f32.mrf.mxu0
    %v3796 = vadd.f32 %v3783, %v3795
    %v3797 = vpop.f32.mrf.mxu0
    %3798 = vdwg.mxu0
    %3799 = vmatpush.bf16.msra.mxu0 %v2933
    %3800 = vmatpush.bf16.msra.mxu0 %v2925
    %3801 = vmatpush.bf16.msra.mxu0 %v2917
    %3802 = vmatpush.bf16.msra.mxu0 %v2909
    %3803 = vmatpush.bf16.msra.mxu0 %v2901
    %3804 = vmatpush.bf16.msra.mxu0 %v2893
    %3805 = vmatpush.bf16.msra.mxu0 %v2885
    %3806 = vmatpush.bf16.msra.mxu0 %v2877
    %3807 = vmatmul.bf16.gmra.mxu0 %v674
    %v3808 = vpop.f32.mrf.mxu0
    %v3809 = vadd.f32 %v3796, %v3808
    %v3810 = vpop.f32.mrf.mxu0
    %3811 = vdwg.mxu0
    %3812 = vmatpush.bf16.msra.mxu0 %v2997
    %3813 = vmatpush.bf16.msra.mxu0 %v2989
    %3814 = vmatpush.bf16.msra.mxu0 %v2981
    %3815 = vmatpush.bf16.msra.mxu0 %v2973
    %3816 = vmatpush.bf16.msra.mxu0 %v2965
    %3817 = vmatpush.bf16.msra.mxu0 %v2957
    %3818 = vmatpush.bf16.msra.mxu0 %v2949
    %3819 = vmatpush.bf16.msra.mxu0 %v2941
    %3820 = vmatmul.bf16.gmra.mxu0 %v675
    %v3821 = vpop.f32.mrf.mxu0
    %v3822 = vadd.f32 %v3809, %v3821
    %v3823 = vpop.f32.mrf.mxu0
    %3824 = vdwg.mxu0
    %3825 = vmatpush.bf16.msra.mxu0 %v3061
    %3826 = vmatpush.bf16.msra.mxu0 %v3053
    %3827 = vmatpush.bf16.msra.mxu0 %v3045
    %3828 = vmatpush.bf16.msra.mxu0 %v3037
    %3829 = vmatpush.bf16.msra.mxu0 %v3029
    %3830 = vmatpush.bf16.msra.mxu0 %v3021
    %3831 = vmatpush.bf16.msra.mxu0 %v3013
    %3832 = vmatpush.bf16.msra.mxu0 %v3005
    %3833 = vmatmul.bf16.gmra.mxu0 %v676
    %v3834 = vpop.f32.mrf.mxu0
    %v3835 = vadd.f32 %v3822, %v3834
    %v3836 = vpop.f32.mrf.mxu0
    %3837 = vdwg.mxu0
    %3838 = vmatpush.bf16.msra.mxu0 %v3125
    %3839 = vmatpush.bf16.msra.mxu0 %v3117
    %3840 = vmatpush.bf16.msra.mxu0 %v3109
    %3841 = vmatpush.bf16.msra.mxu0 %v3101
    %3842 = vmatpush.bf16.msra.mxu0 %v3093
    %3843 = vmatpush.bf16.msra.mxu0 %v3085
    %3844 = vmatpush.bf16.msra.mxu0 %v3077
    %3845 = vmatpush.bf16.msra.mxu0 %v3069
    %3846 = vmatmul.bf16.gmra.mxu0 %v677
    %v3847 = vpop.f32.mrf.mxu0
    %v3848 = vadd.f32 %v3835, %v3847
    %v3849 = vpop.f32.mrf.mxu0
    %3850 = vdwg.mxu0
    %3851 = vmatpush.bf16.msra.mxu0 %v3189
    %3852 = vmatpush.bf16.msra.mxu0 %v3181
    %3853 = vmatpush.bf16.msra.mxu0 %v3173
    %3854 = vmatpush.bf16.msra.mxu0 %v3165
    %3855 = vmatpush.bf16.msra.mxu0 %v3157
    %3856 = vmatpush.bf16.msra.mxu0 %v3149
    %3857 = vmatpush.bf16.msra.mxu0 %v3141
    %3858 = vmatpush.bf16.msra.mxu0 %v3133
    %3859 = vmatmul.bf16.gmra.mxu0 %v678
    %v3860 = vpop.f32.mrf.mxu0
    %v3861 = vadd.f32 %v3848, %v3860
    %v3862 = vpop.f32.mrf.mxu0
    %3863 = vdwg.mxu0
    %3864 = vmatpush.bf16.msra.mxu0 %v3253
    %3865 = vmatpush.bf16.msra.mxu0 %v3245
    %3866 = vmatpush.bf16.msra.mxu0 %v3237
    %3867 = vmatpush.bf16.msra.mxu0 %v3229
    %3868 = vmatpush.bf16.msra.mxu0 %v3221
    %3869 = vmatpush.bf16.msra.mxu0 %v3213
    %3870 = vmatpush.bf16.msra.mxu0 %v3205
    %3871 = vmatpush.bf16.msra.mxu0 %v3197
    %3872 = vmatmul.bf16.gmra.mxu0 %v679
    %v3873 = vpop.f32.mrf.mxu0
    %v3874 = vadd.f32 %v3861, %v3873
    %v3875 = vpop.f32.mrf.mxu0
    %3876 = vdwg.mxu0
    %3877 = vmatpush.bf16.msra.mxu0 %v2806
    %3878 = vmatpush.bf16.msra.mxu0 %v2798
    %3879 = vmatpush.bf16.msra.mxu0 %v2790
    %3880 = vmatpush.bf16.msra.mxu0 %v2782
    %3881 = vmatpush.bf16.msra.mxu0 %v2774
    %3882 = vmatpush.bf16.msra.mxu0 %v2766
    %3883 = vmatpush.bf16.msra.mxu0 %v2758
    %3884 = vmatpush.bf16.msra.mxu0 %v2750
    %3885 = vmatmul.bf16.gmra.mxu0 %v672
    %v3886 = vpop.f32.mrf.mxu0
    %v3887 = vadd.f32 %v1198, %v3886
    %v3888 = vpop.f32.mrf.mxu0
    %3889 = vdwg.mxu0
    %3890 = vmatpush.bf16.msra.mxu0 %v2870
    %3891 = vmatpush.bf16.msra.mxu0 %v2862
    %3892 = vmatpush.bf16.msra.mxu0 %v2854
    %3893 = vmatpush.bf16.msra.mxu0 %v2846
    %3894 = vmatpush.bf16.msra.mxu0 %v2838
    %3895 = vmatpush.bf16.msra.mxu0 %v2830
    %3896 = vmatpush.bf16.msra.mxu0 %v2822
    %3897 = vmatpush.bf16.msra.mxu0 %v2814
    %3898 = vmatmul.bf16.gmra.mxu0 %v673
    %v3899 = vpop.f32.mrf.mxu0
    %v3900 = vadd.f32 %v3887, %v3899
    %v3901 = vpop.f32.mrf.mxu0
    %3902 = vdwg.mxu0
    %3903 = vmatpush.bf16.msra.mxu0 %v2934
    %3904 = vmatpush.bf16.msra.mxu0 %v2926
    %3905 = vmatpush.bf16.msra.mxu0 %v2918
    %3906 = vmatpush.bf16.msra.mxu0 %v2910
    %3907 = vmatpush.bf16.msra.mxu0 %v2902
    %3908 = vmatpush.bf16.msra.mxu0 %v2894
    %3909 = vmatpush.bf16.msra.mxu0 %v2886
    %3910 = vmatpush.bf16.msra.mxu0 %v2878
    %3911 = vmatmul.bf16.gmra.mxu0 %v674
    %v3912 = vpop.f32.mrf.mxu0
    %v3913 = vadd.f32 %v3900, %v3912
    %v3914 = vpop.f32.mrf.mxu0
    %3915 = vdwg.mxu0
    %3916 = vmatpush.bf16.msra.mxu0 %v2998
    %3917 = vmatpush.bf16.msra.mxu0 %v2990
    %3918 = vmatpush.bf16.msra.mxu0 %v2982
    %3919 = vmatpush.bf16.msra.mxu0 %v2974
    %3920 = vmatpush.bf16.msra.mxu0 %v2966
    %3921 = vmatpush.bf16.msra.mxu0 %v2958
    %3922 = vmatpush.bf16.msra.mxu0 %v2950
    %3923 = vmatpush.bf16.msra.mxu0 %v2942
    %3924 = vmatmul.bf16.gmra.mxu0 %v675
    %v3925 = vpop.f32.mrf.mxu0
    %v3926 = vadd.f32 %v3913, %v3925
    %v3927 = vpop.f32.mrf.mxu0
    %3928 = vdwg.mxu0
    %3929 = vmatpush.bf16.msra.mxu0 %v3062
    %3930 = vmatpush.bf16.msra.mxu0 %v3054
    %3931 = vmatpush.bf16.msra.mxu0 %v3046
    %3932 = vmatpush.bf16.msra.mxu0 %v3038
    %3933 = vmatpush.bf16.msra.mxu0 %v3030
    %3934 = vmatpush.bf16.msra.mxu0 %v3022
    %3935 = vmatpush.bf16.msra.mxu0 %v3014
    %3936 = vmatpush.bf16.msra.mxu0 %v3006
    %3937 = vmatmul.bf16.gmra.mxu0 %v676
    %v3938 = vpop.f32.mrf.mxu0
    %v3939 = vadd.f32 %v3926, %v3938
    %v3940 = vpop.f32.mrf.mxu0
    %3941 = vdwg.mxu0
    %3942 = vmatpush.bf16.msra.mxu0 %v3126
    %3943 = vmatpush.bf16.msra.mxu0 %v3118
    %3944 = vmatpush.bf16.msra.mxu0 %v3110
    %3945 = vmatpush.bf16.msra.mxu0 %v3102
    %3946 = vmatpush.bf16.msra.mxu0 %v3094
    %3947 = vmatpush.bf16.msra.mxu0 %v3086
    %3948 = vmatpush.bf16.msra.mxu0 %v3078
    %3949 = vmatpush.bf16.msra.mxu0 %v3070
    %3950 = vmatmul.bf16.gmra.mxu0 %v677
    %v3951 = vpop.f32.mrf.mxu0
    %v3952 = vadd.f32 %v3939, %v3951
    %v3953 = vpop.f32.mrf.mxu0
    %3954 = vdwg.mxu0
    %3955 = vmatpush.bf16.msra.mxu0 %v3190
    %3956 = vmatpush.bf16.msra.mxu0 %v3182
    %3957 = vmatpush.bf16.msra.mxu0 %v3174
    %3958 = vmatpush.bf16.msra.mxu0 %v3166
    %3959 = vmatpush.bf16.msra.mxu0 %v3158
    %3960 = vmatpush.bf16.msra.mxu0 %v3150
    %3961 = vmatpush.bf16.msra.mxu0 %v3142
    %3962 = vmatpush.bf16.msra.mxu0 %v3134
    %3963 = vmatmul.bf16.gmra.mxu0 %v678
    %v3964 = vpop.f32.mrf.mxu0
    %v3965 = vadd.f32 %v3952, %v3964
    %v3966 = vpop.f32.mrf.mxu0
    %3967 = vdwg.mxu0
    %3968 = vmatpush.bf16.msra.mxu0 %v3254
    %3969 = vmatpush.bf16.msra.mxu0 %v3246
    %3970 = vmatpush.bf16.msra.mxu0 %v3238
    %3971 = vmatpush.bf16.msra.mxu0 %v3230
    %3972 = vmatpush.bf16.msra.mxu0 %v3222
    %3973 = vmatpush.bf16.msra.mxu0 %v3214
    %3974 = vmatpush.bf16.msra.mxu0 %v3206
    %3975 = vmatpush.bf16.msra.mxu0 %v3198
    %3976 = vmatmul.bf16.gmra.mxu0 %v679
    %v3977 = vpop.f32.mrf.mxu0
    %v3978 = vadd.f32 %v3965, %v3977
    %v3979 = vpop.f32.mrf.mxu0
    %3980 = vdwg.mxu0
    %3981 = vmatpush.bf16.msra.mxu0 %v2807
    %3982 = vmatpush.bf16.msra.mxu0 %v2799
    %3983 = vmatpush.bf16.msra.mxu0 %v2791
    %3984 = vmatpush.bf16.msra.mxu0 %v2783
    %3985 = vmatpush.bf16.msra.mxu0 %v2775
    %3986 = vmatpush.bf16.msra.mxu0 %v2767
    %3987 = vmatpush.bf16.msra.mxu0 %v2759
    %3988 = vmatpush.bf16.msra.mxu0 %v2751
    %3989 = vmatmul.bf16.gmra.mxu0 %v672
    %v3990 = vpop.f32.mrf.mxu0
    %v3991 = vadd.f32 %v1199, %v3990
    %v3992 = vpop.f32.mrf.mxu0
    %3993 = vdwg.mxu0
    %3994 = vmatpush.bf16.msra.mxu0 %v2871
    %3995 = vmatpush.bf16.msra.mxu0 %v2863
    %3996 = vmatpush.bf16.msra.mxu0 %v2855
    %3997 = vmatpush.bf16.msra.mxu0 %v2847
    %3998 = vmatpush.bf16.msra.mxu0 %v2839
    %3999 = vmatpush.bf16.msra.mxu0 %v2831
    %4000 = vmatpush.bf16.msra.mxu0 %v2823
    %4001 = vmatpush.bf16.msra.mxu0 %v2815
    %4002 = vmatmul.bf16.gmra.mxu0 %v673
    %v4003 = vpop.f32.mrf.mxu0
    %v4004 = vadd.f32 %v3991, %v4003
    %v4005 = vpop.f32.mrf.mxu0
    %4006 = vdwg.mxu0
    %4007 = vmatpush.bf16.msra.mxu0 %v2935
    %4008 = vmatpush.bf16.msra.mxu0 %v2927
    %4009 = vmatpush.bf16.msra.mxu0 %v2919
    %4010 = vmatpush.bf16.msra.mxu0 %v2911
    %4011 = vmatpush.bf16.msra.mxu0 %v2903
    %4012 = vmatpush.bf16.msra.mxu0 %v2895
    %4013 = vmatpush.bf16.msra.mxu0 %v2887
    %4014 = vmatpush.bf16.msra.mxu0 %v2879
    %4015 = vmatmul.bf16.gmra.mxu0 %v674
    %v4016 = vpop.f32.mrf.mxu0
    %v4017 = vadd.f32 %v4004, %v4016
    %v4018 = vpop.f32.mrf.mxu0
    %4019 = vdwg.mxu0
    %4020 = vmatpush.bf16.msra.mxu0 %v2999
    %4021 = vmatpush.bf16.msra.mxu0 %v2991
    %4022 = vmatpush.bf16.msra.mxu0 %v2983
    %4023 = vmatpush.bf16.msra.mxu0 %v2975
    %4024 = vmatpush.bf16.msra.mxu0 %v2967
    %4025 = vmatpush.bf16.msra.mxu0 %v2959
    %4026 = vmatpush.bf16.msra.mxu0 %v2951
    %4027 = vmatpush.bf16.msra.mxu0 %v2943
    %4028 = vmatmul.bf16.gmra.mxu0 %v675
    %v4029 = vpop.f32.mrf.mxu0
    %v4030 = vadd.f32 %v4017, %v4029
    %v4031 = vpop.f32.mrf.mxu0
    %4032 = vdwg.mxu0
    %4033 = vmatpush.bf16.msra.mxu0 %v3063
    %4034 = vmatpush.bf16.msra.mxu0 %v3055
    %4035 = vmatpush.bf16.msra.mxu0 %v3047
    %4036 = vmatpush.bf16.msra.mxu0 %v3039
    %4037 = vmatpush.bf16.msra.mxu0 %v3031
    %4038 = vmatpush.bf16.msra.mxu0 %v3023
    %4039 = vmatpush.bf16.msra.mxu0 %v3015
    %4040 = vmatpush.bf16.msra.mxu0 %v3007
    %4041 = vmatmul.bf16.gmra.mxu0 %v676
    %v4042 = vpop.f32.mrf.mxu0
    %v4043 = vadd.f32 %v4030, %v4042
    %v4044 = vpop.f32.mrf.mxu0
    %4045 = vdwg.mxu0
    %4046 = vmatpush.bf16.msra.mxu0 %v3127
    %4047 = vmatpush.bf16.msra.mxu0 %v3119
    %4048 = vmatpush.bf16.msra.mxu0 %v3111
    %4049 = vmatpush.bf16.msra.mxu0 %v3103
    %4050 = vmatpush.bf16.msra.mxu0 %v3095
    %4051 = vmatpush.bf16.msra.mxu0 %v3087
    %4052 = vmatpush.bf16.msra.mxu0 %v3079
    %4053 = vmatpush.bf16.msra.mxu0 %v3071
    %4054 = vmatmul.bf16.gmra.mxu0 %v677
    %v4055 = vpop.f32.mrf.mxu0
    %v4056 = vadd.f32 %v4043, %v4055
    %v4057 = vpop.f32.mrf.mxu0
    %4058 = vdwg.mxu0
    %4059 = vmatpush.bf16.msra.mxu0 %v3191
    %4060 = vmatpush.bf16.msra.mxu0 %v3183
    %4061 = vmatpush.bf16.msra.mxu0 %v3175
    %4062 = vmatpush.bf16.msra.mxu0 %v3167
    %4063 = vmatpush.bf16.msra.mxu0 %v3159
    %4064 = vmatpush.bf16.msra.mxu0 %v3151
    %4065 = vmatpush.bf16.msra.mxu0 %v3143
    %4066 = vmatpush.bf16.msra.mxu0 %v3135
    %4067 = vmatmul.bf16.gmra.mxu0 %v678
    %v4068 = vpop.f32.mrf.mxu0
    %v4069 = vadd.f32 %v4056, %v4068
    %v4070 = vpop.f32.mrf.mxu0
    %4071 = vdwg.mxu0
    %4072 = vmatpush.bf16.msra.mxu0 %v3255
    %4073 = vmatpush.bf16.msra.mxu0 %v3247
    %4074 = vmatpush.bf16.msra.mxu0 %v3239
    %4075 = vmatpush.bf16.msra.mxu0 %v3231
    %4076 = vmatpush.bf16.msra.mxu0 %v3223
    %4077 = vmatpush.bf16.msra.mxu0 %v3215
    %4078 = vmatpush.bf16.msra.mxu0 %v3207
    %4079 = vmatpush.bf16.msra.mxu0 %v3199
    %4080 = vmatmul.bf16.gmra.mxu0 %v679
    %v4081 = vpop.f32.mrf.mxu0
    %v4082 = vadd.f32 %v4069, %v4081
    %v4083 = vpop.f32.mrf.mxu0
    %4084 = vdwg.mxu0
    %4085 = vmatpush.bf16.msra.mxu0 %v2808
    %4086 = vmatpush.bf16.msra.mxu0 %v2800
    %4087 = vmatpush.bf16.msra.mxu0 %v2792
    %4088 = vmatpush.bf16.msra.mxu0 %v2784
    %4089 = vmatpush.bf16.msra.mxu0 %v2776
    %4090 = vmatpush.bf16.msra.mxu0 %v2768
    %4091 = vmatpush.bf16.msra.mxu0 %v2760
    %4092 = vmatpush.bf16.msra.mxu0 %v2752
    %4093 = vmatmul.bf16.gmra.mxu0 %v672
    %v4094 = vpop.f32.mrf.mxu0
    %v4095 = vadd.f32 %v1200, %v4094
    %v4096 = vpop.f32.mrf.mxu0
    %4097 = vdwg.mxu0
    %4098 = vmatpush.bf16.msra.mxu0 %v2872
    %4099 = vmatpush.bf16.msra.mxu0 %v2864
    %4100 = vmatpush.bf16.msra.mxu0 %v2856
    %4101 = vmatpush.bf16.msra.mxu0 %v2848
    %4102 = vmatpush.bf16.msra.mxu0 %v2840
    %4103 = vmatpush.bf16.msra.mxu0 %v2832
    %4104 = vmatpush.bf16.msra.mxu0 %v2824
    %4105 = vmatpush.bf16.msra.mxu0 %v2816
    %4106 = vmatmul.bf16.gmra.mxu0 %v673
    %v4107 = vpop.f32.mrf.mxu0
    %v4108 = vadd.f32 %v4095, %v4107
    %v4109 = vpop.f32.mrf.mxu0
    %4110 = vdwg.mxu0
    %4111 = vmatpush.bf16.msra.mxu0 %v2936
    %4112 = vmatpush.bf16.msra.mxu0 %v2928
    %4113 = vmatpush.bf16.msra.mxu0 %v2920
    %4114 = vmatpush.bf16.msra.mxu0 %v2912
    %4115 = vmatpush.bf16.msra.mxu0 %v2904
    %4116 = vmatpush.bf16.msra.mxu0 %v2896
    %4117 = vmatpush.bf16.msra.mxu0 %v2888
    %4118 = vmatpush.bf16.msra.mxu0 %v2880
    %4119 = vmatmul.bf16.gmra.mxu0 %v674
    %v4120 = vpop.f32.mrf.mxu0
    %v4121 = vadd.f32 %v4108, %v4120
    %v4122 = vpop.f32.mrf.mxu0
    %4123 = vdwg.mxu0
    %4124 = vmatpush.bf16.msra.mxu0 %v3000
    %4125 = vmatpush.bf16.msra.mxu0 %v2992
    %4126 = vmatpush.bf16.msra.mxu0 %v2984
    %4127 = vmatpush.bf16.msra.mxu0 %v2976
    %4128 = vmatpush.bf16.msra.mxu0 %v2968
    %4129 = vmatpush.bf16.msra.mxu0 %v2960
    %4130 = vmatpush.bf16.msra.mxu0 %v2952
    %4131 = vmatpush.bf16.msra.mxu0 %v2944
    %4132 = vmatmul.bf16.gmra.mxu0 %v675
    %v4133 = vpop.f32.mrf.mxu0
    %v4134 = vadd.f32 %v4121, %v4133
    %v4135 = vpop.f32.mrf.mxu0
    %4136 = vdwg.mxu0
    %4137 = vmatpush.bf16.msra.mxu0 %v3064
    %4138 = vmatpush.bf16.msra.mxu0 %v3056
    %4139 = vmatpush.bf16.msra.mxu0 %v3048
    %4140 = vmatpush.bf16.msra.mxu0 %v3040
    %4141 = vmatpush.bf16.msra.mxu0 %v3032
    %4142 = vmatpush.bf16.msra.mxu0 %v3024
    %4143 = vmatpush.bf16.msra.mxu0 %v3016
    %4144 = vmatpush.bf16.msra.mxu0 %v3008
    %4145 = vmatmul.bf16.gmra.mxu0 %v676
    %v4146 = vpop.f32.mrf.mxu0
    %v4147 = vadd.f32 %v4134, %v4146
    %v4148 = vpop.f32.mrf.mxu0
    %4149 = vdwg.mxu0
    %4150 = vmatpush.bf16.msra.mxu0 %v3128
    %4151 = vmatpush.bf16.msra.mxu0 %v3120
    %4152 = vmatpush.bf16.msra.mxu0 %v3112
    %4153 = vmatpush.bf16.msra.mxu0 %v3104
    %4154 = vmatpush.bf16.msra.mxu0 %v3096
    %4155 = vmatpush.bf16.msra.mxu0 %v3088
    %4156 = vmatpush.bf16.msra.mxu0 %v3080
    %4157 = vmatpush.bf16.msra.mxu0 %v3072
    %4158 = vmatmul.bf16.gmra.mxu0 %v677
    %v4159 = vpop.f32.mrf.mxu0
    %v4160 = vadd.f32 %v4147, %v4159
    %v4161 = vpop.f32.mrf.mxu0
    %4162 = vdwg.mxu0
    %4163 = vmatpush.bf16.msra.mxu0 %v3192
    %4164 = vmatpush.bf16.msra.mxu0 %v3184
    %4165 = vmatpush.bf16.msra.mxu0 %v3176
    %4166 = vmatpush.bf16.msra.mxu0 %v3168
    %4167 = vmatpush.bf16.msra.mxu0 %v3160
    %4168 = vmatpush.bf16.msra.mxu0 %v3152
    %4169 = vmatpush.bf16.msra.mxu0 %v3144
    %4170 = vmatpush.bf16.msra.mxu0 %v3136
    %4171 = vmatmul.bf16.gmra.mxu0 %v678
    %v4172 = vpop.f32.mrf.mxu0
    %v4173 = vadd.f32 %v4160, %v4172
    %v4174 = vpop.f32.mrf.mxu0
    %4175 = vdwg.mxu0
    %4176 = vmatpush.bf16.msra.mxu0 %v3256
    %4177 = vmatpush.bf16.msra.mxu0 %v3248
    %4178 = vmatpush.bf16.msra.mxu0 %v3240
    %4179 = vmatpush.bf16.msra.mxu0 %v3232
    %4180 = vmatpush.bf16.msra.mxu0 %v3224
    %4181 = vmatpush.bf16.msra.mxu0 %v3216
    %4182 = vmatpush.bf16.msra.mxu0 %v3208
    %4183 = vmatpush.bf16.msra.mxu0 %v3200
    %4184 = vmatmul.bf16.gmra.mxu0 %v679
    %v4185 = vpop.f32.mrf.mxu0
    %v4186 = vadd.f32 %v4173, %v4185
    %v4187 = vpop.f32.mrf.mxu0
    %4188 = vdwg.mxu0
    %4189 = vmatpush.bf16.msra.mxu0 %v2809
    %4190 = vmatpush.bf16.msra.mxu0 %v2801
    %4191 = vmatpush.bf16.msra.mxu0 %v2793
    %4192 = vmatpush.bf16.msra.mxu0 %v2785
    %4193 = vmatpush.bf16.msra.mxu0 %v2777
    %4194 = vmatpush.bf16.msra.mxu0 %v2769
    %4195 = vmatpush.bf16.msra.mxu0 %v2761
    %4196 = vmatpush.bf16.msra.mxu0 %v2753
    %4197 = vmatmul.bf16.gmra.mxu0 %v672
    %v4198 = vpop.f32.mrf.mxu0
    %v4199 = vadd.f32 %v1201, %v4198
    %v4200 = vpop.f32.mrf.mxu0
    %4201 = vdwg.mxu0
    %4202 = vmatpush.bf16.msra.mxu0 %v2873
    %4203 = vmatpush.bf16.msra.mxu0 %v2865
    %4204 = vmatpush.bf16.msra.mxu0 %v2857
    %4205 = vmatpush.bf16.msra.mxu0 %v2849
    %4206 = vmatpush.bf16.msra.mxu0 %v2841
    %4207 = vmatpush.bf16.msra.mxu0 %v2833
    %4208 = vmatpush.bf16.msra.mxu0 %v2825
    %4209 = vmatpush.bf16.msra.mxu0 %v2817
    %4210 = vmatmul.bf16.gmra.mxu0 %v673
    %v4211 = vpop.f32.mrf.mxu0
    %v4212 = vadd.f32 %v4199, %v4211
    %v4213 = vpop.f32.mrf.mxu0
    %4214 = vdwg.mxu0
    %4215 = vmatpush.bf16.msra.mxu0 %v2937
    %4216 = vmatpush.bf16.msra.mxu0 %v2929
    %4217 = vmatpush.bf16.msra.mxu0 %v2921
    %4218 = vmatpush.bf16.msra.mxu0 %v2913
    %4219 = vmatpush.bf16.msra.mxu0 %v2905
    %4220 = vmatpush.bf16.msra.mxu0 %v2897
    %4221 = vmatpush.bf16.msra.mxu0 %v2889
    %4222 = vmatpush.bf16.msra.mxu0 %v2881
    %4223 = vmatmul.bf16.gmra.mxu0 %v674
    %v4224 = vpop.f32.mrf.mxu0
    %v4225 = vadd.f32 %v4212, %v4224
    %v4226 = vpop.f32.mrf.mxu0
    %4227 = vdwg.mxu0
    %4228 = vmatpush.bf16.msra.mxu0 %v3001
    %4229 = vmatpush.bf16.msra.mxu0 %v2993
    %4230 = vmatpush.bf16.msra.mxu0 %v2985
    %4231 = vmatpush.bf16.msra.mxu0 %v2977
    %4232 = vmatpush.bf16.msra.mxu0 %v2969
    %4233 = vmatpush.bf16.msra.mxu0 %v2961
    %4234 = vmatpush.bf16.msra.mxu0 %v2953
    %4235 = vmatpush.bf16.msra.mxu0 %v2945
    %4236 = vmatmul.bf16.gmra.mxu0 %v675
    %v4237 = vpop.f32.mrf.mxu0
    %v4238 = vadd.f32 %v4225, %v4237
    %v4239 = vpop.f32.mrf.mxu0
    %4240 = vdwg.mxu0
    %4241 = vmatpush.bf16.msra.mxu0 %v3065
    %4242 = vmatpush.bf16.msra.mxu0 %v3057
    %4243 = vmatpush.bf16.msra.mxu0 %v3049
    %4244 = vmatpush.bf16.msra.mxu0 %v3041
    %4245 = vmatpush.bf16.msra.mxu0 %v3033
    %4246 = vmatpush.bf16.msra.mxu0 %v3025
    %4247 = vmatpush.bf16.msra.mxu0 %v3017
    %4248 = vmatpush.bf16.msra.mxu0 %v3009
    %4249 = vmatmul.bf16.gmra.mxu0 %v676
    %v4250 = vpop.f32.mrf.mxu0
    %v4251 = vadd.f32 %v4238, %v4250
    %v4252 = vpop.f32.mrf.mxu0
    %4253 = vdwg.mxu0
    %4254 = vmatpush.bf16.msra.mxu0 %v3129
    %4255 = vmatpush.bf16.msra.mxu0 %v3121
    %4256 = vmatpush.bf16.msra.mxu0 %v3113
    %4257 = vmatpush.bf16.msra.mxu0 %v3105
    %4258 = vmatpush.bf16.msra.mxu0 %v3097
    %4259 = vmatpush.bf16.msra.mxu0 %v3089
    %4260 = vmatpush.bf16.msra.mxu0 %v3081
    %4261 = vmatpush.bf16.msra.mxu0 %v3073
    %4262 = vmatmul.bf16.gmra.mxu0 %v677
    %v4263 = vpop.f32.mrf.mxu0
    %v4264 = vadd.f32 %v4251, %v4263
    %v4265 = vpop.f32.mrf.mxu0
    %4266 = vdwg.mxu0
    %4267 = vmatpush.bf16.msra.mxu0 %v3193
    %4268 = vmatpush.bf16.msra.mxu0 %v3185
    %4269 = vmatpush.bf16.msra.mxu0 %v3177
    %4270 = vmatpush.bf16.msra.mxu0 %v3169
    %4271 = vmatpush.bf16.msra.mxu0 %v3161
    %4272 = vmatpush.bf16.msra.mxu0 %v3153
    %4273 = vmatpush.bf16.msra.mxu0 %v3145
    %4274 = vmatpush.bf16.msra.mxu0 %v3137
    %4275 = vmatmul.bf16.gmra.mxu0 %v678
    %v4276 = vpop.f32.mrf.mxu0
    %v4277 = vadd.f32 %v4264, %v4276
    %v4278 = vpop.f32.mrf.mxu0
    %4279 = vdwg.mxu0
    %4280 = vmatpush.bf16.msra.mxu0 %v3257
    %4281 = vmatpush.bf16.msra.mxu0 %v3249
    %4282 = vmatpush.bf16.msra.mxu0 %v3241
    %4283 = vmatpush.bf16.msra.mxu0 %v3233
    %4284 = vmatpush.bf16.msra.mxu0 %v3225
    %4285 = vmatpush.bf16.msra.mxu0 %v3217
    %4286 = vmatpush.bf16.msra.mxu0 %v3209
    %4287 = vmatpush.bf16.msra.mxu0 %v3201
    %4288 = vmatmul.bf16.gmra.mxu0 %v679
    %v4289 = vpop.f32.mrf.mxu0
    %v4290 = vadd.f32 %v4277, %v4289
    %v4291 = vpop.f32.mrf.mxu0
    %4292 = vdwg.mxu0
    %4293 = vmatpush.bf16.msra.mxu0 %v2810
    %4294 = vmatpush.bf16.msra.mxu0 %v2802
    %4295 = vmatpush.bf16.msra.mxu0 %v2794
    %4296 = vmatpush.bf16.msra.mxu0 %v2786
    %4297 = vmatpush.bf16.msra.mxu0 %v2778
    %4298 = vmatpush.bf16.msra.mxu0 %v2770
    %4299 = vmatpush.bf16.msra.mxu0 %v2762
    %4300 = vmatpush.bf16.msra.mxu0 %v2754
    %4301 = vmatmul.bf16.gmra.mxu0 %v672
    %v4302 = vpop.f32.mrf.mxu0
    %v4303 = vadd.f32 %v1202, %v4302
    %v4304 = vpop.f32.mrf.mxu0
    %4305 = vdwg.mxu0
    %4306 = vmatpush.bf16.msra.mxu0 %v2874
    %4307 = vmatpush.bf16.msra.mxu0 %v2866
    %4308 = vmatpush.bf16.msra.mxu0 %v2858
    %4309 = vmatpush.bf16.msra.mxu0 %v2850
    %4310 = vmatpush.bf16.msra.mxu0 %v2842
    %4311 = vmatpush.bf16.msra.mxu0 %v2834
    %4312 = vmatpush.bf16.msra.mxu0 %v2826
    %4313 = vmatpush.bf16.msra.mxu0 %v2818
    %4314 = vmatmul.bf16.gmra.mxu0 %v673
    %v4315 = vpop.f32.mrf.mxu0
    %v4316 = vadd.f32 %v4303, %v4315
    %v4317 = vpop.f32.mrf.mxu0
    %4318 = vdwg.mxu0
    %4319 = vmatpush.bf16.msra.mxu0 %v2938
    %4320 = vmatpush.bf16.msra.mxu0 %v2930
    %4321 = vmatpush.bf16.msra.mxu0 %v2922
    %4322 = vmatpush.bf16.msra.mxu0 %v2914
    %4323 = vmatpush.bf16.msra.mxu0 %v2906
    %4324 = vmatpush.bf16.msra.mxu0 %v2898
    %4325 = vmatpush.bf16.msra.mxu0 %v2890
    %4326 = vmatpush.bf16.msra.mxu0 %v2882
    %4327 = vmatmul.bf16.gmra.mxu0 %v674
    %v4328 = vpop.f32.mrf.mxu0
    %v4329 = vadd.f32 %v4316, %v4328
    %v4330 = vpop.f32.mrf.mxu0
    %4331 = vdwg.mxu0
    %4332 = vmatpush.bf16.msra.mxu0 %v3002
    %4333 = vmatpush.bf16.msra.mxu0 %v2994
    %4334 = vmatpush.bf16.msra.mxu0 %v2986
    %4335 = vmatpush.bf16.msra.mxu0 %v2978
    %4336 = vmatpush.bf16.msra.mxu0 %v2970
    %4337 = vmatpush.bf16.msra.mxu0 %v2962
    %4338 = vmatpush.bf16.msra.mxu0 %v2954
    %4339 = vmatpush.bf16.msra.mxu0 %v2946
    %4340 = vmatmul.bf16.gmra.mxu0 %v675
    %v4341 = vpop.f32.mrf.mxu0
    %v4342 = vadd.f32 %v4329, %v4341
    %v4343 = vpop.f32.mrf.mxu0
    %4344 = vdwg.mxu0
    %4345 = vmatpush.bf16.msra.mxu0 %v3066
    %4346 = vmatpush.bf16.msra.mxu0 %v3058
    %4347 = vmatpush.bf16.msra.mxu0 %v3050
    %4348 = vmatpush.bf16.msra.mxu0 %v3042
    %4349 = vmatpush.bf16.msra.mxu0 %v3034
    %4350 = vmatpush.bf16.msra.mxu0 %v3026
    %4351 = vmatpush.bf16.msra.mxu0 %v3018
    %4352 = vmatpush.bf16.msra.mxu0 %v3010
    %4353 = vmatmul.bf16.gmra.mxu0 %v676
    %v4354 = vpop.f32.mrf.mxu0
    %v4355 = vadd.f32 %v4342, %v4354
    %v4356 = vpop.f32.mrf.mxu0
    %4357 = vdwg.mxu0
    %4358 = vmatpush.bf16.msra.mxu0 %v3130
    %4359 = vmatpush.bf16.msra.mxu0 %v3122
    %4360 = vmatpush.bf16.msra.mxu0 %v3114
    %4361 = vmatpush.bf16.msra.mxu0 %v3106
    %4362 = vmatpush.bf16.msra.mxu0 %v3098
    %4363 = vmatpush.bf16.msra.mxu0 %v3090
    %4364 = vmatpush.bf16.msra.mxu0 %v3082
    %4365 = vmatpush.bf16.msra.mxu0 %v3074
    %4366 = vmatmul.bf16.gmra.mxu0 %v677
    %v4367 = vpop.f32.mrf.mxu0
    %v4368 = vadd.f32 %v4355, %v4367
    %v4369 = vpop.f32.mrf.mxu0
    %4370 = vdwg.mxu0
    %4371 = vmatpush.bf16.msra.mxu0 %v3194
    %4372 = vmatpush.bf16.msra.mxu0 %v3186
    %4373 = vmatpush.bf16.msra.mxu0 %v3178
    %4374 = vmatpush.bf16.msra.mxu0 %v3170
    %4375 = vmatpush.bf16.msra.mxu0 %v3162
    %4376 = vmatpush.bf16.msra.mxu0 %v3154
    %4377 = vmatpush.bf16.msra.mxu0 %v3146
    %4378 = vmatpush.bf16.msra.mxu0 %v3138
    %4379 = vmatmul.bf16.gmra.mxu0 %v678
    %v4380 = vpop.f32.mrf.mxu0
    %v4381 = vadd.f32 %v4368, %v4380
    %v4382 = vpop.f32.mrf.mxu0
    %4383 = vdwg.mxu0
    %4384 = vmatpush.bf16.msra.mxu0 %v3258
    %4385 = vmatpush.bf16.msra.mxu0 %v3250
    %4386 = vmatpush.bf16.msra.mxu0 %v3242
    %4387 = vmatpush.bf16.msra.mxu0 %v3234
    %4388 = vmatpush.bf16.msra.mxu0 %v3226
    %4389 = vmatpush.bf16.msra.mxu0 %v3218
    %4390 = vmatpush.bf16.msra.mxu0 %v3210
    %4391 = vmatpush.bf16.msra.mxu0 %v3202
    %4392 = vmatmul.bf16.gmra.mxu0 %v679
    %v4393 = vpop.f32.mrf.mxu0
    %v4394 = vadd.f32 %v4381, %v4393
    %v4395 = vpop.f32.mrf.mxu0
    %4396 = vdwg.mxu0
    %4397 = vmatpush.bf16.msra.mxu0 %v2811
    %4398 = vmatpush.bf16.msra.mxu0 %v2803
    %4399 = vmatpush.bf16.msra.mxu0 %v2795
    %4400 = vmatpush.bf16.msra.mxu0 %v2787
    %4401 = vmatpush.bf16.msra.mxu0 %v2779
    %4402 = vmatpush.bf16.msra.mxu0 %v2771
    %4403 = vmatpush.bf16.msra.mxu0 %v2763
    %4404 = vmatpush.bf16.msra.mxu0 %v2755
    %4405 = vmatmul.bf16.gmra.mxu0 %v672
    %v4406 = vpop.f32.mrf.mxu0
    %v4407 = vadd.f32 %v1203, %v4406
    %v4408 = vpop.f32.mrf.mxu0
    %4409 = vdwg.mxu0
    %4410 = vmatpush.bf16.msra.mxu0 %v2875
    %4411 = vmatpush.bf16.msra.mxu0 %v2867
    %4412 = vmatpush.bf16.msra.mxu0 %v2859
    %4413 = vmatpush.bf16.msra.mxu0 %v2851
    %4414 = vmatpush.bf16.msra.mxu0 %v2843
    %4415 = vmatpush.bf16.msra.mxu0 %v2835
    %4416 = vmatpush.bf16.msra.mxu0 %v2827
    %4417 = vmatpush.bf16.msra.mxu0 %v2819
    %4418 = vmatmul.bf16.gmra.mxu0 %v673
    %v4419 = vpop.f32.mrf.mxu0
    %v4420 = vadd.f32 %v4407, %v4419
    %v4421 = vpop.f32.mrf.mxu0
    %4422 = vdwg.mxu0
    %4423 = vmatpush.bf16.msra.mxu0 %v2939
    %4424 = vmatpush.bf16.msra.mxu0 %v2931
    %4425 = vmatpush.bf16.msra.mxu0 %v2923
    %4426 = vmatpush.bf16.msra.mxu0 %v2915
    %4427 = vmatpush.bf16.msra.mxu0 %v2907
    %4428 = vmatpush.bf16.msra.mxu0 %v2899
    %4429 = vmatpush.bf16.msra.mxu0 %v2891
    %4430 = vmatpush.bf16.msra.mxu0 %v2883
    %4431 = vmatmul.bf16.gmra.mxu0 %v674
    %v4432 = vpop.f32.mrf.mxu0
    %v4433 = vadd.f32 %v4420, %v4432
    %v4434 = vpop.f32.mrf.mxu0
    %4435 = vdwg.mxu0
    %4436 = vmatpush.bf16.msra.mxu0 %v3003
    %4437 = vmatpush.bf16.msra.mxu0 %v2995
    %4438 = vmatpush.bf16.msra.mxu0 %v2987
    %4439 = vmatpush.bf16.msra.mxu0 %v2979
    %4440 = vmatpush.bf16.msra.mxu0 %v2971
    %4441 = vmatpush.bf16.msra.mxu0 %v2963
    %4442 = vmatpush.bf16.msra.mxu0 %v2955
    %4443 = vmatpush.bf16.msra.mxu0 %v2947
    %4444 = vmatmul.bf16.gmra.mxu0 %v675
    %v4445 = vpop.f32.mrf.mxu0
    %v4446 = vadd.f32 %v4433, %v4445
    %v4447 = vpop.f32.mrf.mxu0
    %4448 = vdwg.mxu0
    %4449 = vmatpush.bf16.msra.mxu0 %v3067
    %4450 = vmatpush.bf16.msra.mxu0 %v3059
    %4451 = vmatpush.bf16.msra.mxu0 %v3051
    %4452 = vmatpush.bf16.msra.mxu0 %v3043
    %4453 = vmatpush.bf16.msra.mxu0 %v3035
    %4454 = vmatpush.bf16.msra.mxu0 %v3027
    %4455 = vmatpush.bf16.msra.mxu0 %v3019
    %4456 = vmatpush.bf16.msra.mxu0 %v3011
    %4457 = vmatmul.bf16.gmra.mxu0 %v676
    %v4458 = vpop.f32.mrf.mxu0
    %v4459 = vadd.f32 %v4446, %v4458
    %v4460 = vpop.f32.mrf.mxu0
    %4461 = vdwg.mxu0
    %4462 = vmatpush.bf16.msra.mxu0 %v3131
    %4463 = vmatpush.bf16.msra.mxu0 %v3123
    %4464 = vmatpush.bf16.msra.mxu0 %v3115
    %4465 = vmatpush.bf16.msra.mxu0 %v3107
    %4466 = vmatpush.bf16.msra.mxu0 %v3099
    %4467 = vmatpush.bf16.msra.mxu0 %v3091
    %4468 = vmatpush.bf16.msra.mxu0 %v3083
    %4469 = vmatpush.bf16.msra.mxu0 %v3075
    %4470 = vmatmul.bf16.gmra.mxu0 %v677
    %v4471 = vpop.f32.mrf.mxu0
    %v4472 = vadd.f32 %v4459, %v4471
    %v4473 = vpop.f32.mrf.mxu0
    %4474 = vdwg.mxu0
    %4475 = vmatpush.bf16.msra.mxu0 %v3195
    %4476 = vmatpush.bf16.msra.mxu0 %v3187
    %4477 = vmatpush.bf16.msra.mxu0 %v3179
    %4478 = vmatpush.bf16.msra.mxu0 %v3171
    %4479 = vmatpush.bf16.msra.mxu0 %v3163
    %4480 = vmatpush.bf16.msra.mxu0 %v3155
    %4481 = vmatpush.bf16.msra.mxu0 %v3147
    %4482 = vmatpush.bf16.msra.mxu0 %v3139
    %4483 = vmatmul.bf16.gmra.mxu0 %v678
    %v4484 = vpop.f32.mrf.mxu0
    %v4485 = vadd.f32 %v4472, %v4484
    %v4486 = vpop.f32.mrf.mxu0
    %4487 = vdwg.mxu0
    %4488 = vmatpush.bf16.msra.mxu0 %v3259
    %4489 = vmatpush.bf16.msra.mxu0 %v3251
    %4490 = vmatpush.bf16.msra.mxu0 %v3243
    %4491 = vmatpush.bf16.msra.mxu0 %v3235
    %4492 = vmatpush.bf16.msra.mxu0 %v3227
    %4493 = vmatpush.bf16.msra.mxu0 %v3219
    %4494 = vmatpush.bf16.msra.mxu0 %v3211
    %4495 = vmatpush.bf16.msra.mxu0 %v3203
    %4496 = vmatmul.bf16.gmra.mxu0 %v679
    %v4497 = vpop.f32.mrf.mxu0
    %v4498 = vadd.f32 %v4485, %v4497
    %v4499 = vpop.f32.mrf.mxu0
    %4500 = vdwg.mxu0
    %4501 = vmatpush.bf16.msra.mxu0 %v2812
    %4502 = vmatpush.bf16.msra.mxu0 %v2804
    %4503 = vmatpush.bf16.msra.mxu0 %v2796
    %4504 = vmatpush.bf16.msra.mxu0 %v2788
    %4505 = vmatpush.bf16.msra.mxu0 %v2780
    %4506 = vmatpush.bf16.msra.mxu0 %v2772
    %4507 = vmatpush.bf16.msra.mxu0 %v2764
    %4508 = vmatpush.bf16.msra.mxu0 %v2756
    %4509 = vmatmul.bf16.gmra.mxu0 %v672
    %v4510 = vpop.f32.mrf.mxu0
    %v4511 = vadd.f32 %v1204, %v4510
    %v4512 = vpop.f32.mrf.mxu0
    %4513 = vdwg.mxu0
    %4514 = vmatpush.bf16.msra.mxu0 %v2876
    %4515 = vmatpush.bf16.msra.mxu0 %v2868
    %4516 = vmatpush.bf16.msra.mxu0 %v2860
    %4517 = vmatpush.bf16.msra.mxu0 %v2852
    %4518 = vmatpush.bf16.msra.mxu0 %v2844
    %4519 = vmatpush.bf16.msra.mxu0 %v2836
    %4520 = vmatpush.bf16.msra.mxu0 %v2828
    %4521 = vmatpush.bf16.msra.mxu0 %v2820
    %4522 = vmatmul.bf16.gmra.mxu0 %v673
    %v4523 = vpop.f32.mrf.mxu0
    %v4524 = vadd.f32 %v4511, %v4523
    %v4525 = vpop.f32.mrf.mxu0
    %4526 = vdwg.mxu0
    %4527 = vmatpush.bf16.msra.mxu0 %v2940
    %4528 = vmatpush.bf16.msra.mxu0 %v2932
    %4529 = vmatpush.bf16.msra.mxu0 %v2924
    %4530 = vmatpush.bf16.msra.mxu0 %v2916
    %4531 = vmatpush.bf16.msra.mxu0 %v2908
    %4532 = vmatpush.bf16.msra.mxu0 %v2900
    %4533 = vmatpush.bf16.msra.mxu0 %v2892
    %4534 = vmatpush.bf16.msra.mxu0 %v2884
    %4535 = vmatmul.bf16.gmra.mxu0 %v674
    %v4536 = vpop.f32.mrf.mxu0
    %v4537 = vadd.f32 %v4524, %v4536
    %v4538 = vpop.f32.mrf.mxu0
    %4539 = vdwg.mxu0
    %4540 = vmatpush.bf16.msra.mxu0 %v3004
    %4541 = vmatpush.bf16.msra.mxu0 %v2996
    %4542 = vmatpush.bf16.msra.mxu0 %v2988
    %4543 = vmatpush.bf16.msra.mxu0 %v2980
    %4544 = vmatpush.bf16.msra.mxu0 %v2972
    %4545 = vmatpush.bf16.msra.mxu0 %v2964
    %4546 = vmatpush.bf16.msra.mxu0 %v2956
    %4547 = vmatpush.bf16.msra.mxu0 %v2948
    %4548 = vmatmul.bf16.gmra.mxu0 %v675
    %v4549 = vpop.f32.mrf.mxu0
    %v4550 = vadd.f32 %v4537, %v4549
    %v4551 = vpop.f32.mrf.mxu0
    %4552 = vdwg.mxu0
    %4553 = vmatpush.bf16.msra.mxu0 %v3068
    %4554 = vmatpush.bf16.msra.mxu0 %v3060
    %4555 = vmatpush.bf16.msra.mxu0 %v3052
    %4556 = vmatpush.bf16.msra.mxu0 %v3044
    %4557 = vmatpush.bf16.msra.mxu0 %v3036
    %4558 = vmatpush.bf16.msra.mxu0 %v3028
    %4559 = vmatpush.bf16.msra.mxu0 %v3020
    %4560 = vmatpush.bf16.msra.mxu0 %v3012
    %4561 = vmatmul.bf16.gmra.mxu0 %v676
    %v4562 = vpop.f32.mrf.mxu0
    %v4563 = vadd.f32 %v4550, %v4562
    %v4564 = vpop.f32.mrf.mxu0
    %4565 = vdwg.mxu0
    %4566 = vmatpush.bf16.msra.mxu0 %v3132
    %4567 = vmatpush.bf16.msra.mxu0 %v3124
    %4568 = vmatpush.bf16.msra.mxu0 %v3116
    %4569 = vmatpush.bf16.msra.mxu0 %v3108
    %4570 = vmatpush.bf16.msra.mxu0 %v3100
    %4571 = vmatpush.bf16.msra.mxu0 %v3092
    %4572 = vmatpush.bf16.msra.mxu0 %v3084
    %4573 = vmatpush.bf16.msra.mxu0 %v3076
    %4574 = vmatmul.bf16.gmra.mxu0 %v677
    %v4575 = vpop.f32.mrf.mxu0
    %v4576 = vadd.f32 %v4563, %v4575
    %v4577 = vpop.f32.mrf.mxu0
    %4578 = vdwg.mxu0
    %4579 = vmatpush.bf16.msra.mxu0 %v3196
    %4580 = vmatpush.bf16.msra.mxu0 %v3188
    %4581 = vmatpush.bf16.msra.mxu0 %v3180
    %4582 = vmatpush.bf16.msra.mxu0 %v3172
    %4583 = vmatpush.bf16.msra.mxu0 %v3164
    %4584 = vmatpush.bf16.msra.mxu0 %v3156
    %4585 = vmatpush.bf16.msra.mxu0 %v3148
    %4586 = vmatpush.bf16.msra.mxu0 %v3140
    %4587 = vmatmul.bf16.gmra.mxu0 %v678
    %v4588 = vpop.f32.mrf.mxu0
    %v4589 = vadd.f32 %v4576, %v4588
    %v4590 = vpop.f32.mrf.mxu0
    %4591 = vdwg.mxu0
    %4592 = vmatpush.bf16.msra.mxu0 %v3260
    %4593 = vmatpush.bf16.msra.mxu0 %v3252
    %4594 = vmatpush.bf16.msra.mxu0 %v3244
    %4595 = vmatpush.bf16.msra.mxu0 %v3236
    %4596 = vmatpush.bf16.msra.mxu0 %v3228
    %4597 = vmatpush.bf16.msra.mxu0 %v3220
    %4598 = vmatpush.bf16.msra.mxu0 %v3212
    %4599 = vmatpush.bf16.msra.mxu0 %v3204
    %4600 = vmatmul.bf16.gmra.mxu0 %v679
    %v4601 = vpop.f32.mrf.mxu0
    %v4602 = vadd.f32 %v4589, %v4601
    %v4603 = vpop.f32.mrf.mxu0
    %4604 = vdwg.mxu0
    %v4605 = vmax.f32 %v3874, 0.0
    %v4606 = vmax.f32 %v3978, 0.0
    %v4607 = vmax.f32 %v4082, 0.0
    %v4608 = vmax.f32 %v4186, 0.0
    %v4609 = vmax.f32 %v4290, 0.0
    %v4610 = vmax.f32 %v4394, 0.0
    %v4611 = vmax.f32 %v4498, 0.0
    %v4612 = vmax.f32 %v4602, 0.0
    %v4613 = vpack.c.bf16 %v4605, %v4605
    %v4614 = vpack.c.bf16 %v4606, %v4606
    %v4615 = vpack.c.bf16 %v4607, %v4607
    %v4616 = vpack.c.bf16 %v4608, %v4608
    %v4617 = vpack.c.bf16 %v4609, %v4609
    %v4618 = vpack.c.bf16 %v4610, %v4610
    %v4619 = vpack.c.bf16 %v4611, %v4611
    %v4620 = vpack.c.bf16 %v4612, %v4612
    %v4621 = vld [vmem:[#allocation8] sm:$0xff]
    %v4622 = vld [vmem:[#allocation8 + $0x8] sm:$0xff]
    %v4623 = vld [vmem:[#allocation8 + $0x10] sm:$0xff]
    %v4624 = vld [vmem:[#allocation8 + $0x18] sm:$0xff]
    %v4625 = vld [vmem:[#allocation8 + $0x20] sm:$0xff]
    %v4626 = vld [vmem:[#allocation8 + $0x28] sm:$0xff]
    %v4627 = vld [vmem:[#allocation8 + $0x30] sm:$0xff]
    %v4628 = vld [vmem:[#allocation8 + $0x38] sm:$0xff]
    %v4629 = vld [vmem:[#allocation8 + $0x40] sm:$0xff]
    %v4630 = vld [vmem:[#allocation8 + $0x48] sm:$0xff]
    %v4631 = vld [vmem:[#allocation8 + $0x50] sm:$0xff]
    %v4632 = vld [vmem:[#allocation8 + $0x58] sm:$0xff]
    %v4633 = vld [vmem:[#allocation8 + $0x60] sm:$0xff]
    %v4634 = vld [vmem:[#allocation8 + $0x68] sm:$0xff]
    %v4635 = vld [vmem:[#allocation8 + $0x70] sm:$0xff]
    %v4636 = vld [vmem:[#allocation8 + $0x78] sm:$0xff]
    %v4637 = vld [vmem:[#allocation8 + $0x80] sm:$0xff]
    %v4638 = vld [vmem:[#allocation8 + $0x88] sm:$0xff]
    %v4639 = vld [vmem:[#allocation8 + $0x90] sm:$0xff]
    %v4640 = vld [vmem:[#allocation8 + $0x98] sm:$0xff]
    %v4641 = vld [vmem:[#allocation8 + $0xa0] sm:$0xff]
    %v4642 = vld [vmem:[#allocation8 + $0xa8] sm:$0xff]
    %v4643 = vld [vmem:[#allocation8 + $0xb0] sm:$0xff]
    %v4644 = vld [vmem:[#allocation8 + $0xb8] sm:$0xff]
    %v4645 = vld [vmem:[#allocation8 + $0xc0] sm:$0xff]
    %v4646 = vld [vmem:[#allocation8 + $0xc8] sm:$0xff]
    %v4647 = vld [vmem:[#allocation8 + $0xd0] sm:$0xff]
    %v4648 = vld [vmem:[#allocation8 + $0xd8] sm:$0xff]
    %v4649 = vld [vmem:[#allocation8 + $0xe0] sm:$0xff]
    %v4650 = vld [vmem:[#allocation8 + $0xe8] sm:$0xff]
    %v4651 = vld [vmem:[#allocation8 + $0xf0] sm:$0xff]
    %v4652 = vld [vmem:[#allocation8 + $0xf8] sm:$0xff]
    %v4653 = vld [vmem:[#allocation8 + $0x100] sm:$0xff]
    %v4654 = vld [vmem:[#allocation8 + $0x108] sm:$0xff]
    %v4655 = vld [vmem:[#allocation8 + $0x110] sm:$0xff]
    %v4656 = vld [vmem:[#allocation8 + $0x118] sm:$0xff]
    %v4657 = vld [vmem:[#allocation8 + $0x120] sm:$0xff]
    %v4658 = vld [vmem:[#allocation8 + $0x128] sm:$0xff]
    %v4659 = vld [vmem:[#allocation8 + $0x130] sm:$0xff]
    %v4660 = vld [vmem:[#allocation8 + $0x138] sm:$0xff]
    %v4661 = vld [vmem:[#allocation8 + $0x140] sm:$0xff]
    %v4662 = vld [vmem:[#allocation8 + $0x148] sm:$0xff]
    %v4663 = vld [vmem:[#allocation8 + $0x150] sm:$0xff]
    %v4664 = vld [vmem:[#allocation8 + $0x158] sm:$0xff]
    %v4665 = vld [vmem:[#allocation8 + $0x160] sm:$0xff]
    %v4666 = vld [vmem:[#allocation8 + $0x168] sm:$0xff]
    %v4667 = vld [vmem:[#allocation8 + $0x170] sm:$0xff]
    %v4668 = vld [vmem:[#allocation8 + $0x178] sm:$0xff]
    %v4669 = vld [vmem:[#allocation8 + $0x180] sm:$0xff]
    %v4670 = vld [vmem:[#allocation8 + $0x188] sm:$0xff]
    %v4671 = vld [vmem:[#allocation8 + $0x190] sm:$0xff]
    %v4672 = vld [vmem:[#allocation8 + $0x198] sm:$0xff]
    %v4673 = vld [vmem:[#allocation8 + $0x1a0] sm:$0xff]
    %v4674 = vld [vmem:[#allocation8 + $0x1a8] sm:$0xff]
    %v4675 = vld [vmem:[#allocation8 + $0x1b0] sm:$0xff]
    %v4676 = vld [vmem:[#allocation8 + $0x1b8] sm:$0xff]
    %v4677 = vld [vmem:[#allocation8 + $0x1c0] sm:$0xff]
    %v4678 = vld [vmem:[#allocation8 + $0x1c8] sm:$0xff]
    %v4679 = vld [vmem:[#allocation8 + $0x1d0] sm:$0xff]
    %v4680 = vld [vmem:[#allocation8 + $0x1d8] sm:$0xff]
    %v4681 = vld [vmem:[#allocation8 + $0x1e0] sm:$0xff]
    %v4682 = vld [vmem:[#allocation8 + $0x1e8] sm:$0xff]
    %v4683 = vld [vmem:[#allocation8 + $0x1f0] sm:$0xff]
    %v4684 = vld [vmem:[#allocation8 + $0x1f8] sm:$0xff]
    %v4685 = vld [vmem:[#allocation8 + $0x200] sm:$0xff]
    %v4686 = vld [vmem:[#allocation8 + $0x208] sm:$0xff]
    %v4687 = vld [vmem:[#allocation8 + $0x210] sm:$0xff]
    %v4688 = vld [vmem:[#allocation8 + $0x218] sm:$0xff]
    %v4689 = vld [vmem:[#allocation8 + $0x220] sm:$0xff]
    %v4690 = vld [vmem:[#allocation8 + $0x228] sm:$0xff]
    %v4691 = vld [vmem:[#allocation8 + $0x230] sm:$0xff]
    %v4692 = vld [vmem:[#allocation8 + $0x238] sm:$0xff]
    %v4693 = vld [vmem:[#allocation8 + $0x240] sm:$0xff]
    %v4694 = vld [vmem:[#allocation8 + $0x248] sm:$0xff]
    %v4695 = vld [vmem:[#allocation8 + $0x250] sm:$0xff]
    %v4696 = vld [vmem:[#allocation8 + $0x258] sm:$0xff]
    %v4697 = vld [vmem:[#allocation8 + $0x260] sm:$0xff]
    %v4698 = vld [vmem:[#allocation8 + $0x268] sm:$0xff]
    %v4699 = vld [vmem:[#allocation8 + $0x270] sm:$0xff]
    %v4700 = vld [vmem:[#allocation8 + $0x278] sm:$0xff]
    %v4701 = vld [vmem:[#allocation8 + $0x280] sm:$0xff]
    %v4702 = vld [vmem:[#allocation8 + $0x288] sm:$0xff]
    %v4703 = vld [vmem:[#allocation8 + $0x290] sm:$0xff]
    %v4704 = vld [vmem:[#allocation8 + $0x298] sm:$0xff]
    %v4705 = vld [vmem:[#allocation8 + $0x2a0] sm:$0xff]
    %v4706 = vld [vmem:[#allocation8 + $0x2a8] sm:$0xff]
    %v4707 = vld [vmem:[#allocation8 + $0x2b0] sm:$0xff]
    %v4708 = vld [vmem:[#allocation8 + $0x2b8] sm:$0xff]
    %v4709 = vld [vmem:[#allocation8 + $0x2c0] sm:$0xff]
    %v4710 = vld [vmem:[#allocation8 + $0x2c8] sm:$0xff]
    %v4711 = vld [vmem:[#allocation8 + $0x2d0] sm:$0xff]
    %v4712 = vld [vmem:[#allocation8 + $0x2d8] sm:$0xff]
    %v4713 = vld [vmem:[#allocation8 + $0x2e0] sm:$0xff]
    %v4714 = vld [vmem:[#allocation8 + $0x2e8] sm:$0xff]
    %v4715 = vld [vmem:[#allocation8 + $0x2f0] sm:$0xff]
    %v4716 = vld [vmem:[#allocation8 + $0x2f8] sm:$0xff]
    %v4717 = vld [vmem:[#allocation8 + $0x300] sm:$0xff]
    %v4718 = vld [vmem:[#allocation8 + $0x308] sm:$0xff]
    %v4719 = vld [vmem:[#allocation8 + $0x310] sm:$0xff]
    %v4720 = vld [vmem:[#allocation8 + $0x318] sm:$0xff]
    %v4721 = vld [vmem:[#allocation8 + $0x320] sm:$0xff]
    %v4722 = vld [vmem:[#allocation8 + $0x328] sm:$0xff]
    %v4723 = vld [vmem:[#allocation8 + $0x330] sm:$0xff]
    %v4724 = vld [vmem:[#allocation8 + $0x338] sm:$0xff]
    %v4725 = vld [vmem:[#allocation8 + $0x340] sm:$0xff]
    %v4726 = vld [vmem:[#allocation8 + $0x348] sm:$0xff]
    %v4727 = vld [vmem:[#allocation8 + $0x350] sm:$0xff]
    %v4728 = vld [vmem:[#allocation8 + $0x358] sm:$0xff]
    %v4729 = vld [vmem:[#allocation8 + $0x360] sm:$0xff]
    %v4730 = vld [vmem:[#allocation8 + $0x368] sm:$0xff]
    %v4731 = vld [vmem:[#allocation8 + $0x370] sm:$0xff]
    %v4732 = vld [vmem:[#allocation8 + $0x378] sm:$0xff]
    %v4733 = vld [vmem:[#allocation8 + $0x380] sm:$0xff]
    %v4734 = vld [vmem:[#allocation8 + $0x388] sm:$0xff]
    %v4735 = vld [vmem:[#allocation8 + $0x390] sm:$0xff]
    %v4736 = vld [vmem:[#allocation8 + $0x398] sm:$0xff]
    %v4737 = vld [vmem:[#allocation8 + $0x3a0] sm:$0xff]
    %v4738 = vld [vmem:[#allocation8 + $0x3a8] sm:$0xff]
    %v4739 = vld [vmem:[#allocation8 + $0x3b0] sm:$0xff]
    %v4740 = vld [vmem:[#allocation8 + $0x3b8] sm:$0xff]
    %v4741 = vld [vmem:[#allocation8 + $0x3c0] sm:$0xff]
    %v4742 = vld [vmem:[#allocation8 + $0x3c8] sm:$0xff]
    %v4743 = vld [vmem:[#allocation8 + $0x3d0] sm:$0xff]
    %v4744 = vld [vmem:[#allocation8 + $0x3d8] sm:$0xff]
    %v4745 = vld [vmem:[#allocation8 + $0x3e0] sm:$0xff]
    %v4746 = vld [vmem:[#allocation8 + $0x3e8] sm:$0xff]
    %v4747 = vld [vmem:[#allocation8 + $0x3f0] sm:$0xff]
    %v4748 = vld [vmem:[#allocation8 + $0x3f8] sm:$0xff]
    %v4749 = vld [vmem:[#allocation8 + $0x400] sm:$0xff]
    %v4750 = vld [vmem:[#allocation8 + $0x408] sm:$0xff]
    %v4751 = vld [vmem:[#allocation8 + $0x410] sm:$0xff]
    %v4752 = vld [vmem:[#allocation8 + $0x418] sm:$0xff]
    %v4753 = vld [vmem:[#allocation8 + $0x420] sm:$0xff]
    %v4754 = vld [vmem:[#allocation8 + $0x428] sm:$0xff]
    %v4755 = vld [vmem:[#allocation8 + $0x430] sm:$0xff]
    %v4756 = vld [vmem:[#allocation8 + $0x438] sm:$0xff]
    %v4757 = vld [vmem:[#allocation8 + $0x440] sm:$0xff]
    %v4758 = vld [vmem:[#allocation8 + $0x448] sm:$0xff]
    %v4759 = vld [vmem:[#allocation8 + $0x450] sm:$0xff]
    %v4760 = vld [vmem:[#allocation8 + $0x458] sm:$0xff]
    %v4761 = vld [vmem:[#allocation8 + $0x460] sm:$0xff]
    %v4762 = vld [vmem:[#allocation8 + $0x468] sm:$0xff]
    %v4763 = vld [vmem:[#allocation8 + $0x470] sm:$0xff]
    %v4764 = vld [vmem:[#allocation8 + $0x478] sm:$0xff]
    %v4765 = vld [vmem:[#allocation8 + $0x480] sm:$0xff]
    %v4766 = vld [vmem:[#allocation8 + $0x488] sm:$0xff]
    %v4767 = vld [vmem:[#allocation8 + $0x490] sm:$0xff]
    %v4768 = vld [vmem:[#allocation8 + $0x498] sm:$0xff]
    %v4769 = vld [vmem:[#allocation8 + $0x4a0] sm:$0xff]
    %v4770 = vld [vmem:[#allocation8 + $0x4a8] sm:$0xff]
    %v4771 = vld [vmem:[#allocation8 + $0x4b0] sm:$0xff]
    %v4772 = vld [vmem:[#allocation8 + $0x4b8] sm:$0xff]
    %v4773 = vld [vmem:[#allocation8 + $0x4c0] sm:$0xff]
    %v4774 = vld [vmem:[#allocation8 + $0x4c8] sm:$0xff]
    %v4775 = vld [vmem:[#allocation8 + $0x4d0] sm:$0xff]
    %v4776 = vld [vmem:[#allocation8 + $0x4d8] sm:$0xff]
    %v4777 = vld [vmem:[#allocation8 + $0x4e0] sm:$0xff]
    %v4778 = vld [vmem:[#allocation8 + $0x4e8] sm:$0xff]
    %v4779 = vld [vmem:[#allocation8 + $0x4f0] sm:$0xff]
    %v4780 = vld [vmem:[#allocation8 + $0x4f8] sm:$0xff]
    %v4781 = vld [vmem:[#allocation8 + $0x500] sm:$0xff]
    %v4782 = vld [vmem:[#allocation8 + $0x508] sm:$0xff]
    %v4783 = vld [vmem:[#allocation8 + $0x510] sm:$0xff]
    %v4784 = vld [vmem:[#allocation8 + $0x518] sm:$0xff]
    %v4785 = vld [vmem:[#allocation8 + $0x520] sm:$0xff]
    %v4786 = vld [vmem:[#allocation8 + $0x528] sm:$0xff]
    %v4787 = vld [vmem:[#allocation8 + $0x530] sm:$0xff]
    %v4788 = vld [vmem:[#allocation8 + $0x538] sm:$0xff]
    %v4789 = vld [vmem:[#allocation8 + $0x540] sm:$0xff]
    %v4790 = vld [vmem:[#allocation8 + $0x548] sm:$0xff]
    %v4791 = vld [vmem:[#allocation8 + $0x550] sm:$0xff]
    %v4792 = vld [vmem:[#allocation8 + $0x558] sm:$0xff]
    %v4793 = vld [vmem:[#allocation8 + $0x560] sm:$0xff]
    %v4794 = vld [vmem:[#allocation8 + $0x568] sm:$0xff]
    %v4795 = vld [vmem:[#allocation8 + $0x570] sm:$0xff]
    %v4796 = vld [vmem:[#allocation8 + $0x578] sm:$0xff]
    %v4797 = vld [vmem:[#allocation8 + $0x580] sm:$0xff]
    %v4798 = vld [vmem:[#allocation8 + $0x588] sm:$0xff]
    %v4799 = vld [vmem:[#allocation8 + $0x590] sm:$0xff]
    %v4800 = vld [vmem:[#allocation8 + $0x598] sm:$0xff]
    %v4801 = vld [vmem:[#allocation8 + $0x5a0] sm:$0xff]
    %v4802 = vld [vmem:[#allocation8 + $0x5a8] sm:$0xff]
    %v4803 = vld [vmem:[#allocation8 + $0x5b0] sm:$0xff]
    %v4804 = vld [vmem:[#allocation8 + $0x5b8] sm:$0xff]
    %v4805 = vld [vmem:[#allocation8 + $0x5c0] sm:$0xff]
    %v4806 = vld [vmem:[#allocation8 + $0x5c8] sm:$0xff]
    %v4807 = vld [vmem:[#allocation8 + $0x5d0] sm:$0xff]
    %v4808 = vld [vmem:[#allocation8 + $0x5d8] sm:$0xff]
    %v4809 = vld [vmem:[#allocation8 + $0x5e0] sm:$0xff]
    %v4810 = vld [vmem:[#allocation8 + $0x5e8] sm:$0xff]
    %v4811 = vld [vmem:[#allocation8 + $0x5f0] sm:$0xff]
    %v4812 = vld [vmem:[#allocation8 + $0x5f8] sm:$0xff]
    %v4813 = vld [vmem:[#allocation8 + $0x600] sm:$0xff]
    %v4814 = vld [vmem:[#allocation8 + $0x608] sm:$0xff]
    %v4815 = vld [vmem:[#allocation8 + $0x610] sm:$0xff]
    %v4816 = vld [vmem:[#allocation8 + $0x618] sm:$0xff]
    %v4817 = vld [vmem:[#allocation8 + $0x620] sm:$0xff]
    %v4818 = vld [vmem:[#allocation8 + $0x628] sm:$0xff]
    %v4819 = vld [vmem:[#allocation8 + $0x630] sm:$0xff]
    %v4820 = vld [vmem:[#allocation8 + $0x638] sm:$0xff]
    %v4821 = vld [vmem:[#allocation8 + $0x640] sm:$0xff]
    %v4822 = vld [vmem:[#allocation8 + $0x648] sm:$0xff]
    %v4823 = vld [vmem:[#allocation8 + $0x650] sm:$0xff]
    %v4824 = vld [vmem:[#allocation8 + $0x658] sm:$0xff]
    %v4825 = vld [vmem:[#allocation8 + $0x660] sm:$0xff]
    %v4826 = vld [vmem:[#allocation8 + $0x668] sm:$0xff]
    %v4827 = vld [vmem:[#allocation8 + $0x670] sm:$0xff]
    %v4828 = vld [vmem:[#allocation8 + $0x678] sm:$0xff]
    %v4829 = vld [vmem:[#allocation8 + $0x680] sm:$0xff]
    %v4830 = vld [vmem:[#allocation8 + $0x688] sm:$0xff]
    %v4831 = vld [vmem:[#allocation8 + $0x690] sm:$0xff]
    %v4832 = vld [vmem:[#allocation8 + $0x698] sm:$0xff]
    %v4833 = vld [vmem:[#allocation8 + $0x6a0] sm:$0xff]
    %v4834 = vld [vmem:[#allocation8 + $0x6a8] sm:$0xff]
    %v4835 = vld [vmem:[#allocation8 + $0x6b0] sm:$0xff]
    %v4836 = vld [vmem:[#allocation8 + $0x6b8] sm:$0xff]
    %v4837 = vld [vmem:[#allocation8 + $0x6c0] sm:$0xff]
    %v4838 = vld [vmem:[#allocation8 + $0x6c8] sm:$0xff]
    %v4839 = vld [vmem:[#allocation8 + $0x6d0] sm:$0xff]
    %v4840 = vld [vmem:[#allocation8 + $0x6d8] sm:$0xff]
    %v4841 = vld [vmem:[#allocation8 + $0x6e0] sm:$0xff]
    %v4842 = vld [vmem:[#allocation8 + $0x6e8] sm:$0xff]
    %v4843 = vld [vmem:[#allocation8 + $0x6f0] sm:$0xff]
    %v4844 = vld [vmem:[#allocation8 + $0x6f8] sm:$0xff]
    %v4845 = vld [vmem:[#allocation8 + $0x700] sm:$0xff]
    %v4846 = vld [vmem:[#allocation8 + $0x708] sm:$0xff]
    %v4847 = vld [vmem:[#allocation8 + $0x710] sm:$0xff]
    %v4848 = vld [vmem:[#allocation8 + $0x718] sm:$0xff]
    %v4849 = vld [vmem:[#allocation8 + $0x720] sm:$0xff]
    %v4850 = vld [vmem:[#allocation8 + $0x728] sm:$0xff]
    %v4851 = vld [vmem:[#allocation8 + $0x730] sm:$0xff]
    %v4852 = vld [vmem:[#allocation8 + $0x738] sm:$0xff]
    %v4853 = vld [vmem:[#allocation8 + $0x740] sm:$0xff]
    %v4854 = vld [vmem:[#allocation8 + $0x748] sm:$0xff]
    %v4855 = vld [vmem:[#allocation8 + $0x750] sm:$0xff]
    %v4856 = vld [vmem:[#allocation8 + $0x758] sm:$0xff]
    %v4857 = vld [vmem:[#allocation8 + $0x760] sm:$0xff]
    %v4858 = vld [vmem:[#allocation8 + $0x768] sm:$0xff]
    %v4859 = vld [vmem:[#allocation8 + $0x770] sm:$0xff]
    %v4860 = vld [vmem:[#allocation8 + $0x778] sm:$0xff]
    %v4861 = vld [vmem:[#allocation8 + $0x780] sm:$0xff]
    %v4862 = vld [vmem:[#allocation8 + $0x788] sm:$0xff]
    %v4863 = vld [vmem:[#allocation8 + $0x790] sm:$0xff]
    %v4864 = vld [vmem:[#allocation8 + $0x798] sm:$0xff]
    %v4865 = vld [vmem:[#allocation8 + $0x7a0] sm:$0xff]
    %v4866 = vld [vmem:[#allocation8 + $0x7a8] sm:$0xff]
    %v4867 = vld [vmem:[#allocation8 + $0x7b0] sm:$0xff]
    %v4868 = vld [vmem:[#allocation8 + $0x7b8] sm:$0xff]
    %v4869 = vld [vmem:[#allocation8 + $0x7c0] sm:$0xff]
    %v4870 = vld [vmem:[#allocation8 + $0x7c8] sm:$0xff]
    %v4871 = vld [vmem:[#allocation8 + $0x7d0] sm:$0xff]
    %v4872 = vld [vmem:[#allocation8 + $0x7d8] sm:$0xff]
    %v4873 = vld [vmem:[#allocation8 + $0x7e0] sm:$0xff]
    %v4874 = vld [vmem:[#allocation8 + $0x7e8] sm:$0xff]
    %v4875 = vld [vmem:[#allocation8 + $0x7f0] sm:$0xff]
    %v4876 = vld [vmem:[#allocation8 + $0x7f8] sm:$0xff]
    %s4877 = scalar_lea.vmem [#allocation14], 2
    %v4878 = vld [vmem:[%s4877] ss:$8 sm:$0xf]
    %v4880 = vperm.slane %v4878, 0
    %v4881 = vperm.slane %v4878, 1
    %v4882 = vperm.slane %v4878, 2
    %v4883 = vperm.slane %v4878, 3
    %v5144 = vunpack.c.l.b16 %v4621
    %v5145 = vunpack.c.h.b16 %v4621
    %v5146 = vunpack.c.l.b16 %v4622
    %v5147 = vunpack.c.h.b16 %v4622
    %v5148 = vunpack.c.l.b16 %v4623
    %v5149 = vunpack.c.h.b16 %v4623
    %v5150 = vunpack.c.l.b16 %v4624
    %v5151 = vunpack.c.h.b16 %v4624
    %v5152 = vunpack.c.l.b16 %v4625
    %v5153 = vunpack.c.h.b16 %v4625
    %v5154 = vunpack.c.l.b16 %v4626
    %v5155 = vunpack.c.h.b16 %v4626
    %v5156 = vunpack.c.l.b16 %v4627
    %v5157 = vunpack.c.h.b16 %v4627
    %v5158 = vunpack.c.l.b16 %v4628
    %v5159 = vunpack.c.h.b16 %v4628
    %v5160 = vunpack.c.l.b16 %v4629
    %v5161 = vunpack.c.h.b16 %v4629
    %v5162 = vunpack.c.l.b16 %v4630
    %v5163 = vunpack.c.h.b16 %v4630
    %v5164 = vunpack.c.l.b16 %v4631
    %v5165 = vunpack.c.h.b16 %v4631
    %v5166 = vunpack.c.l.b16 %v4632
    %v5167 = vunpack.c.h.b16 %v4632
    %v5168 = vunpack.c.l.b16 %v4633
    %v5169 = vunpack.c.h.b16 %v4633
    %v5170 = vunpack.c.l.b16 %v4634
    %v5171 = vunpack.c.h.b16 %v4634
    %v5172 = vunpack.c.l.b16 %v4635
    %v5173 = vunpack.c.h.b16 %v4635
    %v5174 = vunpack.c.l.b16 %v4636
    %v5175 = vunpack.c.h.b16 %v4636
    %v5176 = vunpack.c.l.b16 %v4637
    %v5177 = vunpack.c.h.b16 %v4637
    %v5178 = vunpack.c.l.b16 %v4638
    %v5179 = vunpack.c.h.b16 %v4638
    %v5180 = vunpack.c.l.b16 %v4639
    %v5181 = vunpack.c.h.b16 %v4639
    %v5182 = vunpack.c.l.b16 %v4640
    %v5183 = vunpack.c.h.b16 %v4640
    %v5184 = vunpack.c.l.b16 %v4641
    %v5185 = vunpack.c.h.b16 %v4641
    %v5186 = vunpack.c.l.b16 %v4642
    %v5187 = vunpack.c.h.b16 %v4642
    %v5188 = vunpack.c.l.b16 %v4643
    %v5189 = vunpack.c.h.b16 %v4643
    %v5190 = vunpack.c.l.b16 %v4644
    %v5191 = vunpack.c.h.b16 %v4644
    %v5192 = vunpack.c.l.b16 %v4645
    %v5193 = vunpack.c.h.b16 %v4645
    %v5194 = vunpack.c.l.b16 %v4646
    %v5195 = vunpack.c.h.b16 %v4646
    %v5196 = vunpack.c.l.b16 %v4647
    %v5197 = vunpack.c.h.b16 %v4647
    %v5198 = vunpack.c.l.b16 %v4648
    %v5199 = vunpack.c.h.b16 %v4648
    %v5200 = vunpack.c.l.b16 %v4649
    %v5201 = vunpack.c.h.b16 %v4649
    %v5202 = vunpack.c.l.b16 %v4650
    %v5203 = vunpack.c.h.b16 %v4650
    %v5204 = vunpack.c.l.b16 %v4651
    %v5205 = vunpack.c.h.b16 %v4651
    %v5206 = vunpack.c.l.b16 %v4652
    %v5207 = vunpack.c.h.b16 %v4652
    %v5208 = vunpack.c.l.b16 %v4653
    %v5209 = vunpack.c.h.b16 %v4653
    %v5210 = vunpack.c.l.b16 %v4654
    %v5211 = vunpack.c.h.b16 %v4654
    %v5212 = vunpack.c.l.b16 %v4655
    %v5213 = vunpack.c.h.b16 %v4655
    %v5214 = vunpack.c.l.b16 %v4656
    %v5215 = vunpack.c.h.b16 %v4656
    %v5216 = vunpack.c.l.b16 %v4657
    %v5217 = vunpack.c.h.b16 %v4657
    %v5218 = vunpack.c.l.b16 %v4658
    %v5219 = vunpack.c.h.b16 %v4658
    %v5220 = vunpack.c.l.b16 %v4659
    %v5221 = vunpack.c.h.b16 %v4659
    %v5222 = vunpack.c.l.b16 %v4660
    %v5223 = vunpack.c.h.b16 %v4660
    %v5224 = vunpack.c.l.b16 %v4661
    %v5225 = vunpack.c.h.b16 %v4661
    %v5226 = vunpack.c.l.b16 %v4662
    %v5227 = vunpack.c.h.b16 %v4662
    %v5228 = vunpack.c.l.b16 %v4663
    %v5229 = vunpack.c.h.b16 %v4663
    %v5230 = vunpack.c.l.b16 %v4664
    %v5231 = vunpack.c.h.b16 %v4664
    %v5232 = vunpack.c.l.b16 %v4665
    %v5233 = vunpack.c.h.b16 %v4665
    %v5234 = vunpack.c.l.b16 %v4666
    %v5235 = vunpack.c.h.b16 %v4666
    %v5236 = vunpack.c.l.b16 %v4667
    %v5237 = vunpack.c.h.b16 %v4667
    %v5238 = vunpack.c.l.b16 %v4668
    %v5239 = vunpack.c.h.b16 %v4668
    %v5240 = vunpack.c.l.b16 %v4669
    %v5241 = vunpack.c.h.b16 %v4669
    %v5242 = vunpack.c.l.b16 %v4670
    %v5243 = vunpack.c.h.b16 %v4670
    %v5244 = vunpack.c.l.b16 %v4671
    %v5245 = vunpack.c.h.b16 %v4671
    %v5246 = vunpack.c.l.b16 %v4672
    %v5247 = vunpack.c.h.b16 %v4672
    %v5248 = vunpack.c.l.b16 %v4673
    %v5249 = vunpack.c.h.b16 %v4673
    %v5250 = vunpack.c.l.b16 %v4674
    %v5251 = vunpack.c.h.b16 %v4674
    %v5252 = vunpack.c.l.b16 %v4675
    %v5253 = vunpack.c.h.b16 %v4675
    %v5254 = vunpack.c.l.b16 %v4676
    %v5255 = vunpack.c.h.b16 %v4676
    %v5256 = vunpack.c.l.b16 %v4677
    %v5257 = vunpack.c.h.b16 %v4677
    %v5258 = vunpack.c.l.b16 %v4678
    %v5259 = vunpack.c.h.b16 %v4678
    %v5260 = vunpack.c.l.b16 %v4679
    %v5261 = vunpack.c.h.b16 %v4679
    %v5262 = vunpack.c.l.b16 %v4680
    %v5263 = vunpack.c.h.b16 %v4680
    %v5264 = vunpack.c.l.b16 %v4681
    %v5265 = vunpack.c.h.b16 %v4681
    %v5266 = vunpack.c.l.b16 %v4682
    %v5267 = vunpack.c.h.b16 %v4682
    %v5268 = vunpack.c.l.b16 %v4683
    %v5269 = vunpack.c.h.b16 %v4683
    %v5270 = vunpack.c.l.b16 %v4684
    %v5271 = vunpack.c.h.b16 %v4684
    %v5272 = vunpack.c.l.b16 %v4685
    %v5273 = vunpack.c.h.b16 %v4685
    %v5274 = vunpack.c.l.b16 %v4686
    %v5275 = vunpack.c.h.b16 %v4686
    %v5276 = vunpack.c.l.b16 %v4687
    %v5277 = vunpack.c.h.b16 %v4687
    %v5278 = vunpack.c.l.b16 %v4688
    %v5279 = vunpack.c.h.b16 %v4688
    %v5280 = vunpack.c.l.b16 %v4689
    %v5281 = vunpack.c.h.b16 %v4689
    %v5282 = vunpack.c.l.b16 %v4690
    %v5283 = vunpack.c.h.b16 %v4690
    %v5284 = vunpack.c.l.b16 %v4691
    %v5285 = vunpack.c.h.b16 %v4691
    %v5286 = vunpack.c.l.b16 %v4692
    %v5287 = vunpack.c.h.b16 %v4692
    %v5288 = vunpack.c.l.b16 %v4693
    %v5289 = vunpack.c.h.b16 %v4693
    %v5290 = vunpack.c.l.b16 %v4694
    %v5291 = vunpack.c.h.b16 %v4694
    %v5292 = vunpack.c.l.b16 %v4695
    %v5293 = vunpack.c.h.b16 %v4695
    %v5294 = vunpack.c.l.b16 %v4696
    %v5295 = vunpack.c.h.b16 %v4696
    %v5296 = vunpack.c.l.b16 %v4697
    %v5297 = vunpack.c.h.b16 %v4697
    %v5298 = vunpack.c.l.b16 %v4698
    %v5299 = vunpack.c.h.b16 %v4698
    %v5300 = vunpack.c.l.b16 %v4699
    %v5301 = vunpack.c.h.b16 %v4699
    %v5302 = vunpack.c.l.b16 %v4700
    %v5303 = vunpack.c.h.b16 %v4700
    %v5304 = vunpack.c.l.b16 %v4701
    %v5305 = vunpack.c.h.b16 %v4701
    %v5306 = vunpack.c.l.b16 %v4702
    %v5307 = vunpack.c.h.b16 %v4702
    %v5308 = vunpack.c.l.b16 %v4703
    %v5309 = vunpack.c.h.b16 %v4703
    %v5310 = vunpack.c.l.b16 %v4704
    %v5311 = vunpack.c.h.b16 %v4704
    %v5312 = vunpack.c.l.b16 %v4705
    %v5313 = vunpack.c.h.b16 %v4705
    %v5314 = vunpack.c.l.b16 %v4706
    %v5315 = vunpack.c.h.b16 %v4706
    %v5316 = vunpack.c.l.b16 %v4707
    %v5317 = vunpack.c.h.b16 %v4707
    %v5318 = vunpack.c.l.b16 %v4708
    %v5319 = vunpack.c.h.b16 %v4708
    %v5320 = vunpack.c.l.b16 %v4709
    %v5321 = vunpack.c.h.b16 %v4709
    %v5322 = vunpack.c.l.b16 %v4710
    %v5323 = vunpack.c.h.b16 %v4710
    %v5324 = vunpack.c.l.b16 %v4711
    %v5325 = vunpack.c.h.b16 %v4711
    %v5326 = vunpack.c.l.b16 %v4712
    %v5327 = vunpack.c.h.b16 %v4712
    %v5328 = vunpack.c.l.b16 %v4713
    %v5329 = vunpack.c.h.b16 %v4713
    %v5330 = vunpack.c.l.b16 %v4714
    %v5331 = vunpack.c.h.b16 %v4714
    %v5332 = vunpack.c.l.b16 %v4715
    %v5333 = vunpack.c.h.b16 %v4715
    %v5334 = vunpack.c.l.b16 %v4716
    %v5335 = vunpack.c.h.b16 %v4716
    %v5336 = vunpack.c.l.b16 %v4717
    %v5337 = vunpack.c.h.b16 %v4717
    %v5338 = vunpack.c.l.b16 %v4718
    %v5339 = vunpack.c.h.b16 %v4718
    %v5340 = vunpack.c.l.b16 %v4719
    %v5341 = vunpack.c.h.b16 %v4719
    %v5342 = vunpack.c.l.b16 %v4720
    %v5343 = vunpack.c.h.b16 %v4720
    %v5344 = vunpack.c.l.b16 %v4721
    %v5345 = vunpack.c.h.b16 %v4721
    %v5346 = vunpack.c.l.b16 %v4722
    %v5347 = vunpack.c.h.b16 %v4722
    %v5348 = vunpack.c.l.b16 %v4723
    %v5349 = vunpack.c.h.b16 %v4723
    %v5350 = vunpack.c.l.b16 %v4724
    %v5351 = vunpack.c.h.b16 %v4724
    %v5352 = vunpack.c.l.b16 %v4725
    %v5353 = vunpack.c.h.b16 %v4725
    %v5354 = vunpack.c.l.b16 %v4726
    %v5355 = vunpack.c.h.b16 %v4726
    %v5356 = vunpack.c.l.b16 %v4727
    %v5357 = vunpack.c.h.b16 %v4727
    %v5358 = vunpack.c.l.b16 %v4728
    %v5359 = vunpack.c.h.b16 %v4728
    %v5360 = vunpack.c.l.b16 %v4729
    %v5361 = vunpack.c.h.b16 %v4729
    %v5362 = vunpack.c.l.b16 %v4730
    %v5363 = vunpack.c.h.b16 %v4730
    %v5364 = vunpack.c.l.b16 %v4731
    %v5365 = vunpack.c.h.b16 %v4731
    %v5366 = vunpack.c.l.b16 %v4732
    %v5367 = vunpack.c.h.b16 %v4732
    %v5368 = vunpack.c.l.b16 %v4733
    %v5369 = vunpack.c.h.b16 %v4733
    %v5370 = vunpack.c.l.b16 %v4734
    %v5371 = vunpack.c.h.b16 %v4734
    %v5372 = vunpack.c.l.b16 %v4735
    %v5373 = vunpack.c.h.b16 %v4735
    %v5374 = vunpack.c.l.b16 %v4736
    %v5375 = vunpack.c.h.b16 %v4736
    %v5376 = vunpack.c.l.b16 %v4737
    %v5377 = vunpack.c.h.b16 %v4737
    %v5378 = vunpack.c.l.b16 %v4738
    %v5379 = vunpack.c.h.b16 %v4738
    %v5380 = vunpack.c.l.b16 %v4739
    %v5381 = vunpack.c.h.b16 %v4739
    %v5382 = vunpack.c.l.b16 %v4740
    %v5383 = vunpack.c.h.b16 %v4740
    %v5384 = vunpack.c.l.b16 %v4741
    %v5385 = vunpack.c.h.b16 %v4741
    %v5386 = vunpack.c.l.b16 %v4742
    %v5387 = vunpack.c.h.b16 %v4742
    %v5388 = vunpack.c.l.b16 %v4743
    %v5389 = vunpack.c.h.b16 %v4743
    %v5390 = vunpack.c.l.b16 %v4744
    %v5391 = vunpack.c.h.b16 %v4744
    %v5392 = vunpack.c.l.b16 %v4745
    %v5393 = vunpack.c.h.b16 %v4745
    %v5394 = vunpack.c.l.b16 %v4746
    %v5395 = vunpack.c.h.b16 %v4746
    %v5396 = vunpack.c.l.b16 %v4747
    %v5397 = vunpack.c.h.b16 %v4747
    %v5398 = vunpack.c.l.b16 %v4748
    %v5399 = vunpack.c.h.b16 %v4748
    %v5400 = vunpack.c.l.b16 %v4749
    %v5401 = vunpack.c.h.b16 %v4749
    %v5402 = vunpack.c.l.b16 %v4750
    %v5403 = vunpack.c.h.b16 %v4750
    %v5404 = vunpack.c.l.b16 %v4751
    %v5405 = vunpack.c.h.b16 %v4751
    %v5406 = vunpack.c.l.b16 %v4752
    %v5407 = vunpack.c.h.b16 %v4752
    %v5408 = vunpack.c.l.b16 %v4753
    %v5409 = vunpack.c.h.b16 %v4753
    %v5410 = vunpack.c.l.b16 %v4754
    %v5411 = vunpack.c.h.b16 %v4754
    %v5412 = vunpack.c.l.b16 %v4755
    %v5413 = vunpack.c.h.b16 %v4755
    %v5414 = vunpack.c.l.b16 %v4756
    %v5415 = vunpack.c.h.b16 %v4756
    %v5416 = vunpack.c.l.b16 %v4757
    %v5417 = vunpack.c.h.b16 %v4757
    %v5418 = vunpack.c.l.b16 %v4758
    %v5419 = vunpack.c.h.b16 %v4758
    %v5420 = vunpack.c.l.b16 %v4759
    %v5421 = vunpack.c.h.b16 %v4759
    %v5422 = vunpack.c.l.b16 %v4760
    %v5423 = vunpack.c.h.b16 %v4760
    %v5424 = vunpack.c.l.b16 %v4761
    %v5425 = vunpack.c.h.b16 %v4761
    %v5426 = vunpack.c.l.b16 %v4762
    %v5427 = vunpack.c.h.b16 %v4762
    %v5428 = vunpack.c.l.b16 %v4763
    %v5429 = vunpack.c.h.b16 %v4763
    %v5430 = vunpack.c.l.b16 %v4764
    %v5431 = vunpack.c.h.b16 %v4764
    %v5432 = vunpack.c.l.b16 %v4765
    %v5433 = vunpack.c.h.b16 %v4765
    %v5434 = vunpack.c.l.b16 %v4766
    %v5435 = vunpack.c.h.b16 %v4766
    %v5436 = vunpack.c.l.b16 %v4767
    %v5437 = vunpack.c.h.b16 %v4767
    %v5438 = vunpack.c.l.b16 %v4768
    %v5439 = vunpack.c.h.b16 %v4768
    %v5440 = vunpack.c.l.b16 %v4769
    %v5441 = vunpack.c.h.b16 %v4769
    %v5442 = vunpack.c.l.b16 %v4770
    %v5443 = vunpack.c.h.b16 %v4770
    %v5444 = vunpack.c.l.b16 %v4771
    %v5445 = vunpack.c.h.b16 %v4771
    %v5446 = vunpack.c.l.b16 %v4772
    %v5447 = vunpack.c.h.b16 %v4772
    %v5448 = vunpack.c.l.b16 %v4773
    %v5449 = vunpack.c.h.b16 %v4773
    %v5450 = vunpack.c.l.b16 %v4774
    %v5451 = vunpack.c.h.b16 %v4774
    %v5452 = vunpack.c.l.b16 %v4775
    %v5453 = vunpack.c.h.b16 %v4775
    %v5454 = vunpack.c.l.b16 %v4776
    %v5455 = vunpack.c.h.b16 %v4776
    %v5456 = vunpack.c.l.b16 %v4777
    %v5457 = vunpack.c.h.b16 %v4777
    %v5458 = vunpack.c.l.b16 %v4778
    %v5459 = vunpack.c.h.b16 %v4778
    %v5460 = vunpack.c.l.b16 %v4779
    %v5461 = vunpack.c.h.b16 %v4779
    %v5462 = vunpack.c.l.b16 %v4780
    %v5463 = vunpack.c.h.b16 %v4780
    %v5464 = vunpack.c.l.b16 %v4781
    %v5465 = vunpack.c.h.b16 %v4781
    %v5466 = vunpack.c.l.b16 %v4782
    %v5467 = vunpack.c.h.b16 %v4782
    %v5468 = vunpack.c.l.b16 %v4783
    %v5469 = vunpack.c.h.b16 %v4783
    %v5470 = vunpack.c.l.b16 %v4784
    %v5471 = vunpack.c.h.b16 %v4784
    %v5472 = vunpack.c.l.b16 %v4785
    %v5473 = vunpack.c.h.b16 %v4785
    %v5474 = vunpack.c.l.b16 %v4786
    %v5475 = vunpack.c.h.b16 %v4786
    %v5476 = vunpack.c.l.b16 %v4787
    %v5477 = vunpack.c.h.b16 %v4787
    %v5478 = vunpack.c.l.b16 %v4788
    %v5479 = vunpack.c.h.b16 %v4788
    %v5480 = vunpack.c.l.b16 %v4789
    %v5481 = vunpack.c.h.b16 %v4789
    %v5482 = vunpack.c.l.b16 %v4790
    %v5483 = vunpack.c.h.b16 %v4790
    %v5484 = vunpack.c.l.b16 %v4791
    %v5485 = vunpack.c.h.b16 %v4791
    %v5486 = vunpack.c.l.b16 %v4792
    %v5487 = vunpack.c.h.b16 %v4792
    %v5488 = vunpack.c.l.b16 %v4793
    %v5489 = vunpack.c.h.b16 %v4793
    %v5490 = vunpack.c.l.b16 %v4794
    %v5491 = vunpack.c.h.b16 %v4794
    %v5492 = vunpack.c.l.b16 %v4795
    %v5493 = vunpack.c.h.b16 %v4795
    %v5494 = vunpack.c.l.b16 %v4796
    %v5495 = vunpack.c.h.b16 %v4796
    %v5496 = vunpack.c.l.b16 %v4797
    %v5497 = vunpack.c.h.b16 %v4797
    %v5498 = vunpack.c.l.b16 %v4798
    %v5499 = vunpack.c.h.b16 %v4798
    %v5500 = vunpack.c.l.b16 %v4799
    %v5501 = vunpack.c.h.b16 %v4799
    %v5502 = vunpack.c.l.b16 %v4800
    %v5503 = vunpack.c.h.b16 %v4800
    %v5504 = vunpack.c.l.b16 %v4801
    %v5505 = vunpack.c.h.b16 %v4801
    %v5506 = vunpack.c.l.b16 %v4802
    %v5507 = vunpack.c.h.b16 %v4802
    %v5508 = vunpack.c.l.b16 %v4803
    %v5509 = vunpack.c.h.b16 %v4803
    %v5510 = vunpack.c.l.b16 %v4804
    %v5511 = vunpack.c.h.b16 %v4804
    %v5512 = vunpack.c.l.b16 %v4805
    %v5513 = vunpack.c.h.b16 %v4805
    %v5514 = vunpack.c.l.b16 %v4806
    %v5515 = vunpack.c.h.b16 %v4806
    %v5516 = vunpack.c.l.b16 %v4807
    %v5517 = vunpack.c.h.b16 %v4807
    %v5518 = vunpack.c.l.b16 %v4808
    %v5519 = vunpack.c.h.b16 %v4808
    %v5520 = vunpack.c.l.b16 %v4809
    %v5521 = vunpack.c.h.b16 %v4809
    %v5522 = vunpack.c.l.b16 %v4810
    %v5523 = vunpack.c.h.b16 %v4810
    %v5524 = vunpack.c.l.b16 %v4811
    %v5525 = vunpack.c.h.b16 %v4811
    %v5526 = vunpack.c.l.b16 %v4812
    %v5527 = vunpack.c.h.b16 %v4812
    %v5528 = vunpack.c.l.b16 %v4813
    %v5529 = vunpack.c.h.b16 %v4813
    %v5530 = vunpack.c.l.b16 %v4814
    %v5531 = vunpack.c.h.b16 %v4814
    %v5532 = vunpack.c.l.b16 %v4815
    %v5533 = vunpack.c.h.b16 %v4815
    %v5534 = vunpack.c.l.b16 %v4816
    %v5535 = vunpack.c.h.b16 %v4816
    %v5536 = vunpack.c.l.b16 %v4817
    %v5537 = vunpack.c.h.b16 %v4817
    %v5538 = vunpack.c.l.b16 %v4818
    %v5539 = vunpack.c.h.b16 %v4818
    %v5540 = vunpack.c.l.b16 %v4819
    %v5541 = vunpack.c.h.b16 %v4819
    %v5542 = vunpack.c.l.b16 %v4820
    %v5543 = vunpack.c.h.b16 %v4820
    %v5544 = vunpack.c.l.b16 %v4821
    %v5545 = vunpack.c.h.b16 %v4821
    %v5546 = vunpack.c.l.b16 %v4822
    %v5547 = vunpack.c.h.b16 %v4822
    %v5548 = vunpack.c.l.b16 %v4823
    %v5549 = vunpack.c.h.b16 %v4823
    %v5550 = vunpack.c.l.b16 %v4824
    %v5551 = vunpack.c.h.b16 %v4824
    %v5552 = vunpack.c.l.b16 %v4825
    %v5553 = vunpack.c.h.b16 %v4825
    %v5554 = vunpack.c.l.b16 %v4826
    %v5555 = vunpack.c.h.b16 %v4826
    %v5556 = vunpack.c.l.b16 %v4827
    %v5557 = vunpack.c.h.b16 %v4827
    %v5558 = vunpack.c.l.b16 %v4828
    %v5559 = vunpack.c.h.b16 %v4828
    %v5560 = vunpack.c.l.b16 %v4829
    %v5561 = vunpack.c.h.b16 %v4829
    %v5562 = vunpack.c.l.b16 %v4830
    %v5563 = vunpack.c.h.b16 %v4830
    %v5564 = vunpack.c.l.b16 %v4831
    %v5565 = vunpack.c.h.b16 %v4831
    %v5566 = vunpack.c.l.b16 %v4832
    %v5567 = vunpack.c.h.b16 %v4832
    %v5568 = vunpack.c.l.b16 %v4833
    %v5569 = vunpack.c.h.b16 %v4833
    %v5570 = vunpack.c.l.b16 %v4834
    %v5571 = vunpack.c.h.b16 %v4834
    %v5572 = vunpack.c.l.b16 %v4835
    %v5573 = vunpack.c.h.b16 %v4835
    %v5574 = vunpack.c.l.b16 %v4836
    %v5575 = vunpack.c.h.b16 %v4836
    %v5576 = vunpack.c.l.b16 %v4837
    %v5577 = vunpack.c.h.b16 %v4837
    %v5578 = vunpack.c.l.b16 %v4838
    %v5579 = vunpack.c.h.b16 %v4838
    %v5580 = vunpack.c.l.b16 %v4839
    %v5581 = vunpack.c.h.b16 %v4839
    %v5582 = vunpack.c.l.b16 %v4840
    %v5583 = vunpack.c.h.b16 %v4840
    %v5584 = vunpack.c.l.b16 %v4841
    %v5585 = vunpack.c.h.b16 %v4841
    %v5586 = vunpack.c.l.b16 %v4842
    %v5587 = vunpack.c.h.b16 %v4842
    %v5588 = vunpack.c.l.b16 %v4843
    %v5589 = vunpack.c.h.b16 %v4843
    %v5590 = vunpack.c.l.b16 %v4844
    %v5591 = vunpack.c.h.b16 %v4844
    %v5592 = vunpack.c.l.b16 %v4845
    %v5593 = vunpack.c.h.b16 %v4845
    %v5594 = vunpack.c.l.b16 %v4846
    %v5595 = vunpack.c.h.b16 %v4846
    %v5596 = vunpack.c.l.b16 %v4847
    %v5597 = vunpack.c.h.b16 %v4847
    %v5598 = vunpack.c.l.b16 %v4848
    %v5599 = vunpack.c.h.b16 %v4848
    %v5600 = vunpack.c.l.b16 %v4849
    %v5601 = vunpack.c.h.b16 %v4849
    %v5602 = vunpack.c.l.b16 %v4850
    %v5603 = vunpack.c.h.b16 %v4850
    %v5604 = vunpack.c.l.b16 %v4851
    %v5605 = vunpack.c.h.b16 %v4851
    %v5606 = vunpack.c.l.b16 %v4852
    %v5607 = vunpack.c.h.b16 %v4852
    %v5608 = vunpack.c.l.b16 %v4853
    %v5609 = vunpack.c.h.b16 %v4853
    %v5610 = vunpack.c.l.b16 %v4854
    %v5611 = vunpack.c.h.b16 %v4854
    %v5612 = vunpack.c.l.b16 %v4855
    %v5613 = vunpack.c.h.b16 %v4855
    %v5614 = vunpack.c.l.b16 %v4856
    %v5615 = vunpack.c.h.b16 %v4856
    %v5616 = vunpack.c.l.b16 %v4857
    %v5617 = vunpack.c.h.b16 %v4857
    %v5618 = vunpack.c.l.b16 %v4858
    %v5619 = vunpack.c.h.b16 %v4858
    %v5620 = vunpack.c.l.b16 %v4859
    %v5621 = vunpack.c.h.b16 %v4859
    %v5622 = vunpack.c.l.b16 %v4860
    %v5623 = vunpack.c.h.b16 %v4860
    %v5624 = vunpack.c.l.b16 %v4861
    %v5625 = vunpack.c.h.b16 %v4861
    %v5626 = vunpack.c.l.b16 %v4862
    %v5627 = vunpack.c.h.b16 %v4862
    %v5628 = vunpack.c.l.b16 %v4863
    %v5629 = vunpack.c.h.b16 %v4863
    %v5630 = vunpack.c.l.b16 %v4864
    %v5631 = vunpack.c.h.b16 %v4864
    %v5632 = vunpack.c.l.b16 %v4865
    %v5633 = vunpack.c.h.b16 %v4865
    %v5634 = vunpack.c.l.b16 %v4866
    %v5635 = vunpack.c.h.b16 %v4866
    %v5636 = vunpack.c.l.b16 %v4867
    %v5637 = vunpack.c.h.b16 %v4867
    %v5638 = vunpack.c.l.b16 %v4868
    %v5639 = vunpack.c.h.b16 %v4868
    %v5640 = vunpack.c.l.b16 %v4869
    %v5641 = vunpack.c.h.b16 %v4869
    %v5642 = vunpack.c.l.b16 %v4870
    %v5643 = vunpack.c.h.b16 %v4870
    %v5644 = vunpack.c.l.b16 %v4871
    %v5645 = vunpack.c.h.b16 %v4871
    %v5646 = vunpack.c.l.b16 %v4872
    %v5647 = vunpack.c.h.b16 %v4872
    %v5648 = vunpack.c.l.b16 %v4873
    %v5649 = vunpack.c.h.b16 %v4873
    %v5650 = vunpack.c.l.b16 %v4874
    %v5651 = vunpack.c.h.b16 %v4874
    %v5652 = vunpack.c.l.b16 %v4875
    %v5653 = vunpack.c.h.b16 %v4875
    %v5654 = vunpack.c.l.b16 %v4876
    %v5655 = vunpack.c.h.b16 %v4876
    %v5656 = vpack.c.b16 %v5148, %v5144
    %v5657 = vpack.c.b16 %v5149, %v5145
    %v5658 = vpack.c.b16 %v5150, %v5146
    %v5659 = vpack.c.b16 %v5151, %v5147
    %v5660 = vpack.c.b16 %v5156, %v5152
    %v5661 = vpack.c.b16 %v5157, %v5153
    %v5662 = vpack.c.b16 %v5158, %v5154
    %v5663 = vpack.c.b16 %v5159, %v5155
    %v5664 = vpack.c.b16 %v5164, %v5160
    %v5665 = vpack.c.b16 %v5165, %v5161
    %v5666 = vpack.c.b16 %v5166, %v5162
    %v5667 = vpack.c.b16 %v5167, %v5163
    %v5668 = vpack.c.b16 %v5172, %v5168
    %v5669 = vpack.c.b16 %v5173, %v5169
    %v5670 = vpack.c.b16 %v5174, %v5170
    %v5671 = vpack.c.b16 %v5175, %v5171
    %v5672 = vpack.c.b16 %v5180, %v5176
    %v5673 = vpack.c.b16 %v5181, %v5177
    %v5674 = vpack.c.b16 %v5182, %v5178
    %v5675 = vpack.c.b16 %v5183, %v5179
    %v5676 = vpack.c.b16 %v5188, %v5184
    %v5677 = vpack.c.b16 %v5189, %v5185
    %v5678 = vpack.c.b16 %v5190, %v5186
    %v5679 = vpack.c.b16 %v5191, %v5187
    %v5680 = vpack.c.b16 %v5196, %v5192
    %v5681 = vpack.c.b16 %v5197, %v5193
    %v5682 = vpack.c.b16 %v5198, %v5194
    %v5683 = vpack.c.b16 %v5199, %v5195
    %v5684 = vpack.c.b16 %v5204, %v5200
    %v5685 = vpack.c.b16 %v5205, %v5201
    %v5686 = vpack.c.b16 %v5206, %v5202
    %v5687 = vpack.c.b16 %v5207, %v5203
    %v5688 = vpack.c.b16 %v5212, %v5208
    %v5689 = vpack.c.b16 %v5213, %v5209
    %v5690 = vpack.c.b16 %v5214, %v5210
    %v5691 = vpack.c.b16 %v5215, %v5211
    %v5692 = vpack.c.b16 %v5220, %v5216
    %v5693 = vpack.c.b16 %v5221, %v5217
    %v5694 = vpack.c.b16 %v5222, %v5218
    %v5695 = vpack.c.b16 %v5223, %v5219
    %v5696 = vpack.c.b16 %v5228, %v5224
    %v5697 = vpack.c.b16 %v5229, %v5225
    %v5698 = vpack.c.b16 %v5230, %v5226
    %v5699 = vpack.c.b16 %v5231, %v5227
    %v5700 = vpack.c.b16 %v5236, %v5232
    %v5701 = vpack.c.b16 %v5237, %v5233
    %v5702 = vpack.c.b16 %v5238, %v5234
    %v5703 = vpack.c.b16 %v5239, %v5235
    %v5704 = vpack.c.b16 %v5244, %v5240
    %v5705 = vpack.c.b16 %v5245, %v5241
    %v5706 = vpack.c.b16 %v5246, %v5242
    %v5707 = vpack.c.b16 %v5247, %v5243
    %v5708 = vpack.c.b16 %v5252, %v5248
    %v5709 = vpack.c.b16 %v5253, %v5249
    %v5710 = vpack.c.b16 %v5254, %v5250
    %v5711 = vpack.c.b16 %v5255, %v5251
    %v5712 = vpack.c.b16 %v5260, %v5256
    %v5713 = vpack.c.b16 %v5261, %v5257
    %v5714 = vpack.c.b16 %v5262, %v5258
    %v5715 = vpack.c.b16 %v5263, %v5259
    %v5716 = vpack.c.b16 %v5268, %v5264
    %v5717 = vpack.c.b16 %v5269, %v5265
    %v5718 = vpack.c.b16 %v5270, %v5266
    %v5719 = vpack.c.b16 %v5271, %v5267
    %v5720 = vpack.c.b16 %v5276, %v5272
    %v5721 = vpack.c.b16 %v5277, %v5273
    %v5722 = vpack.c.b16 %v5278, %v5274
    %v5723 = vpack.c.b16 %v5279, %v5275
    %v5724 = vpack.c.b16 %v5284, %v5280
    %v5725 = vpack.c.b16 %v5285, %v5281
    %v5726 = vpack.c.b16 %v5286, %v5282
    %v5727 = vpack.c.b16 %v5287, %v5283
    %v5728 = vpack.c.b16 %v5292, %v5288
    %v5729 = vpack.c.b16 %v5293, %v5289
    %v5730 = vpack.c.b16 %v5294, %v5290
    %v5731 = vpack.c.b16 %v5295, %v5291
    %v5732 = vpack.c.b16 %v5300, %v5296
    %v5733 = vpack.c.b16 %v5301, %v5297
    %v5734 = vpack.c.b16 %v5302, %v5298
    %v5735 = vpack.c.b16 %v5303, %v5299
    %v5736 = vpack.c.b16 %v5308, %v5304
    %v5737 = vpack.c.b16 %v5309, %v5305
    %v5738 = vpack.c.b16 %v5310, %v5306
    %v5739 = vpack.c.b16 %v5311, %v5307
    %v5740 = vpack.c.b16 %v5316, %v5312
    %v5741 = vpack.c.b16 %v5317, %v5313
    %v5742 = vpack.c.b16 %v5318, %v5314
    %v5743 = vpack.c.b16 %v5319, %v5315
    %v5744 = vpack.c.b16 %v5324, %v5320
    %v5745 = vpack.c.b16 %v5325, %v5321
    %v5746 = vpack.c.b16 %v5326, %v5322
    %v5747 = vpack.c.b16 %v5327, %v5323
    %v5748 = vpack.c.b16 %v5332, %v5328
    %v5749 = vpack.c.b16 %v5333, %v5329
    %v5750 = vpack.c.b16 %v5334, %v5330
    %v5751 = vpack.c.b16 %v5335, %v5331
    %v5752 = vpack.c.b16 %v5340, %v5336
    %v5753 = vpack.c.b16 %v5341, %v5337
    %v5754 = vpack.c.b16 %v5342, %v5338
    %v5755 = vpack.c.b16 %v5343, %v5339
    %v5756 = vpack.c.b16 %v5348, %v5344
    %v5757 = vpack.c.b16 %v5349, %v5345
    %v5758 = vpack.c.b16 %v5350, %v5346
    %v5759 = vpack.c.b16 %v5351, %v5347
    %v5760 = vpack.c.b16 %v5356, %v5352
    %v5761 = vpack.c.b16 %v5357, %v5353
    %v5762 = vpack.c.b16 %v5358, %v5354
    %v5763 = vpack.c.b16 %v5359, %v5355
    %v5764 = vpack.c.b16 %v5364, %v5360
    %v5765 = vpack.c.b16 %v5365, %v5361
    %v5766 = vpack.c.b16 %v5366, %v5362
    %v5767 = vpack.c.b16 %v5367, %v5363
    %v5768 = vpack.c.b16 %v5372, %v5368
    %v5769 = vpack.c.b16 %v5373, %v5369
    %v5770 = vpack.c.b16 %v5374, %v5370
    %v5771 = vpack.c.b16 %v5375, %v5371
    %v5772 = vpack.c.b16 %v5380, %v5376
    %v5773 = vpack.c.b16 %v5381, %v5377
    %v5774 = vpack.c.b16 %v5382, %v5378
    %v5775 = vpack.c.b16 %v5383, %v5379
    %v5776 = vpack.c.b16 %v5388, %v5384
    %v5777 = vpack.c.b16 %v5389, %v5385
    %v5778 = vpack.c.b16 %v5390, %v5386
    %v5779 = vpack.c.b16 %v5391, %v5387
    %v5780 = vpack.c.b16 %v5396, %v5392
    %v5781 = vpack.c.b16 %v5397, %v5393
    %v5782 = vpack.c.b16 %v5398, %v5394
    %v5783 = vpack.c.b16 %v5399, %v5395
    %v5784 = vpack.c.b16 %v5404, %v5400
    %v5785 = vpack.c.b16 %v5405, %v5401
    %v5786 = vpack.c.b16 %v5406, %v5402
    %v5787 = vpack.c.b16 %v5407, %v5403
    %v5788 = vpack.c.b16 %v5412, %v5408
    %v5789 = vpack.c.b16 %v5413, %v5409
    %v5790 = vpack.c.b16 %v5414, %v5410
    %v5791 = vpack.c.b16 %v5415, %v5411
    %v5792 = vpack.c.b16 %v5420, %v5416
    %v5793 = vpack.c.b16 %v5421, %v5417
    %v5794 = vpack.c.b16 %v5422, %v5418
    %v5795 = vpack.c.b16 %v5423, %v5419
    %v5796 = vpack.c.b16 %v5428, %v5424
    %v5797 = vpack.c.b16 %v5429, %v5425
    %v5798 = vpack.c.b16 %v5430, %v5426
    %v5799 = vpack.c.b16 %v5431, %v5427
    %v5800 = vpack.c.b16 %v5436, %v5432
    %v5801 = vpack.c.b16 %v5437, %v5433
    %v5802 = vpack.c.b16 %v5438, %v5434
    %v5803 = vpack.c.b16 %v5439, %v5435
    %v5804 = vpack.c.b16 %v5444, %v5440
    %v5805 = vpack.c.b16 %v5445, %v5441
    %v5806 = vpack.c.b16 %v5446, %v5442
    %v5807 = vpack.c.b16 %v5447, %v5443
    %v5808 = vpack.c.b16 %v5452, %v5448
    %v5809 = vpack.c.b16 %v5453, %v5449
    %v5810 = vpack.c.b16 %v5454, %v5450
    %v5811 = vpack.c.b16 %v5455, %v5451
    %v5812 = vpack.c.b16 %v5460, %v5456
    %v5813 = vpack.c.b16 %v5461, %v5457
    %v5814 = vpack.c.b16 %v5462, %v5458
    %v5815 = vpack.c.b16 %v5463, %v5459
    %v5816 = vpack.c.b16 %v5468, %v5464
    %v5817 = vpack.c.b16 %v5469, %v5465
    %v5818 = vpack.c.b16 %v5470, %v5466
    %v5819 = vpack.c.b16 %v5471, %v5467
    %v5820 = vpack.c.b16 %v5476, %v5472
    %v5821 = vpack.c.b16 %v5477, %v5473
    %v5822 = vpack.c.b16 %v5478, %v5474
    %v5823 = vpack.c.b16 %v5479, %v5475
    %v5824 = vpack.c.b16 %v5484, %v5480
    %v5825 = vpack.c.b16 %v5485, %v5481
    %v5826 = vpack.c.b16 %v5486, %v5482
    %v5827 = vpack.c.b16 %v5487, %v5483
    %v5828 = vpack.c.b16 %v5492, %v5488
    %v5829 = vpack.c.b16 %v5493, %v5489
    %v5830 = vpack.c.b16 %v5494, %v5490
    %v5831 = vpack.c.b16 %v5495, %v5491
    %v5832 = vpack.c.b16 %v5500, %v5496
    %v5833 = vpack.c.b16 %v5501, %v5497
    %v5834 = vpack.c.b16 %v5502, %v5498
    %v5835 = vpack.c.b16 %v5503, %v5499
    %v5836 = vpack.c.b16 %v5508, %v5504
    %v5837 = vpack.c.b16 %v5509, %v5505
    %v5838 = vpack.c.b16 %v5510, %v5506
    %v5839 = vpack.c.b16 %v5511, %v5507
    %v5840 = vpack.c.b16 %v5516, %v5512
    %v5841 = vpack.c.b16 %v5517, %v5513
    %v5842 = vpack.c.b16 %v5518, %v5514
    %v5843 = vpack.c.b16 %v5519, %v5515
    %v5844 = vpack.c.b16 %v5524, %v5520
    %v5845 = vpack.c.b16 %v5525, %v5521
    %v5846 = vpack.c.b16 %v5526, %v5522
    %v5847 = vpack.c.b16 %v5527, %v5523
    %v5848 = vpack.c.b16 %v5532, %v5528
    %v5849 = vpack.c.b16 %v5533, %v5529
    %v5850 = vpack.c.b16 %v5534, %v5530
    %v5851 = vpack.c.b16 %v5535, %v5531
    %v5852 = vpack.c.b16 %v5540, %v5536
    %v5853 = vpack.c.b16 %v5541, %v5537
    %v5854 = vpack.c.b16 %v5542, %v5538
    %v5855 = vpack.c.b16 %v5543, %v5539
    %v5856 = vpack.c.b16 %v5548, %v5544
    %v5857 = vpack.c.b16 %v5549, %v5545
    %v5858 = vpack.c.b16 %v5550, %v5546
    %v5859 = vpack.c.b16 %v5551, %v5547
    %v5860 = vpack.c.b16 %v5556, %v5552
    %v5861 = vpack.c.b16 %v5557, %v5553
    %v5862 = vpack.c.b16 %v5558, %v5554
    %v5863 = vpack.c.b16 %v5559, %v5555
    %v5864 = vpack.c.b16 %v5564, %v5560
    %v5865 = vpack.c.b16 %v5565, %v5561
    %v5866 = vpack.c.b16 %v5566, %v5562
    %v5867 = vpack.c.b16 %v5567, %v5563
    %v5868 = vpack.c.b16 %v5572, %v5568
    %v5869 = vpack.c.b16 %v5573, %v5569
    %v5870 = vpack.c.b16 %v5574, %v5570
    %v5871 = vpack.c.b16 %v5575, %v5571
    %v5872 = vpack.c.b16 %v5580, %v5576
    %v5873 = vpack.c.b16 %v5581, %v5577
    %v5874 = vpack.c.b16 %v5582, %v5578
    %v5875 = vpack.c.b16 %v5583, %v5579
    %v5876 = vpack.c.b16 %v5588, %v5584
    %v5877 = vpack.c.b16 %v5589, %v5585
    %v5878 = vpack.c.b16 %v5590, %v5586
    %v5879 = vpack.c.b16 %v5591, %v5587
    %v5880 = vpack.c.b16 %v5596, %v5592
    %v5881 = vpack.c.b16 %v5597, %v5593
    %v5882 = vpack.c.b16 %v5598, %v5594
    %v5883 = vpack.c.b16 %v5599, %v5595
    %v5884 = vpack.c.b16 %v5604, %v5600
    %v5885 = vpack.c.b16 %v5605, %v5601
    %v5886 = vpack.c.b16 %v5606, %v5602
    %v5887 = vpack.c.b16 %v5607, %v5603
    %v5888 = vpack.c.b16 %v5612, %v5608
    %v5889 = vpack.c.b16 %v5613, %v5609
    %v5890 = vpack.c.b16 %v5614, %v5610
    %v5891 = vpack.c.b16 %v5615, %v5611
    %v5892 = vpack.c.b16 %v5620, %v5616
    %v5893 = vpack.c.b16 %v5621, %v5617
    %v5894 = vpack.c.b16 %v5622, %v5618
    %v5895 = vpack.c.b16 %v5623, %v5619
    %v5896 = vpack.c.b16 %v5628, %v5624
    %v5897 = vpack.c.b16 %v5629, %v5625
    %v5898 = vpack.c.b16 %v5630, %v5626
    %v5899 = vpack.c.b16 %v5631, %v5627
    %v5900 = vpack.c.b16 %v5636, %v5632
    %v5901 = vpack.c.b16 %v5637, %v5633
    %v5902 = vpack.c.b16 %v5638, %v5634
    %v5903 = vpack.c.b16 %v5639, %v5635
    %v5904 = vpack.c.b16 %v5644, %v5640
    %v5905 = vpack.c.b16 %v5645, %v5641
    %v5906 = vpack.c.b16 %v5646, %v5642
    %v5907 = vpack.c.b16 %v5647, %v5643
    %v5908 = vpack.c.b16 %v5652, %v5648
    %v5909 = vpack.c.b16 %v5653, %v5649
    %v5910 = vpack.c.b16 %v5654, %v5650
    %v5911 = vpack.c.b16 %v5655, %v5651
    %6168 = vmatpush.bf16.msra.mxu0 %v5684
    %6169 = vmatpush.bf16.msra.mxu0 %v5680
    %6170 = vmatpush.bf16.msra.mxu0 %v5676
    %6171 = vmatpush.bf16.msra.mxu0 %v5672
    %6172 = vmatpush.bf16.msra.mxu0 %v5668
    %6173 = vmatpush.bf16.msra.mxu0 %v5664
    %6174 = vmatpush.bf16.msra.mxu0 %v5660
    %6175 = vmatpush.bf16.msra.mxu0 %v5656
    %6176 = vmatmul.bf16.gmra.mxu0 %v4613
    %v6177 = vpop.f32.mrf.mxu0
    %v6178 = vadd.f32 %v4880, %v6177
    %v6179 = vpop.f32.mrf.mxu0
    %6180 = vdwg.mxu0
    %6181 = vmatpush.bf16.msra.mxu0 %v5716
    %6182 = vmatpush.bf16.msra.mxu0 %v5712
    %6183 = vmatpush.bf16.msra.mxu0 %v5708
    %6184 = vmatpush.bf16.msra.mxu0 %v5704
    %6185 = vmatpush.bf16.msra.mxu0 %v5700
    %6186 = vmatpush.bf16.msra.mxu0 %v5696
    %6187 = vmatpush.bf16.msra.mxu0 %v5692
    %6188 = vmatpush.bf16.msra.mxu0 %v5688
    %6189 = vmatmul.bf16.gmra.mxu0 %v4614
    %v6190 = vpop.f32.mrf.mxu0
    %v6191 = vadd.f32 %v6178, %v6190
    %v6192 = vpop.f32.mrf.mxu0
    %6193 = vdwg.mxu0
    %6194 = vmatpush.bf16.msra.mxu0 %v5748
    %6195 = vmatpush.bf16.msra.mxu0 %v5744
    %6196 = vmatpush.bf16.msra.mxu0 %v5740
    %6197 = vmatpush.bf16.msra.mxu0 %v5736
    %6198 = vmatpush.bf16.msra.mxu0 %v5732
    %6199 = vmatpush.bf16.msra.mxu0 %v5728
    %6200 = vmatpush.bf16.msra.mxu0 %v5724
    %6201 = vmatpush.bf16.msra.mxu0 %v5720
    %6202 = vmatmul.bf16.gmra.mxu0 %v4615
    %v6203 = vpop.f32.mrf.mxu0
    %v6204 = vadd.f32 %v6191, %v6203
    %v6205 = vpop.f32.mrf.mxu0
    %6206 = vdwg.mxu0
    %6207 = vmatpush.bf16.msra.mxu0 %v5780
    %6208 = vmatpush.bf16.msra.mxu0 %v5776
    %6209 = vmatpush.bf16.msra.mxu0 %v5772
    %6210 = vmatpush.bf16.msra.mxu0 %v5768
    %6211 = vmatpush.bf16.msra.mxu0 %v5764
    %6212 = vmatpush.bf16.msra.mxu0 %v5760
    %6213 = vmatpush.bf16.msra.mxu0 %v5756
    %6214 = vmatpush.bf16.msra.mxu0 %v5752
    %6215 = vmatmul.bf16.gmra.mxu0 %v4616
    %v6216 = vpop.f32.mrf.mxu0
    %v6217 = vadd.f32 %v6204, %v6216
    %v6218 = vpop.f32.mrf.mxu0
    %6219 = vdwg.mxu0
    %6220 = vmatpush.bf16.msra.mxu0 %v5812
    %6221 = vmatpush.bf16.msra.mxu0 %v5808
    %6222 = vmatpush.bf16.msra.mxu0 %v5804
    %6223 = vmatpush.bf16.msra.mxu0 %v5800
    %6224 = vmatpush.bf16.msra.mxu0 %v5796
    %6225 = vmatpush.bf16.msra.mxu0 %v5792
    %6226 = vmatpush.bf16.msra.mxu0 %v5788
    %6227 = vmatpush.bf16.msra.mxu0 %v5784
    %6228 = vmatmul.bf16.gmra.mxu0 %v4617
    %v6229 = vpop.f32.mrf.mxu0
    %v6230 = vadd.f32 %v6217, %v6229
    %v6231 = vpop.f32.mrf.mxu0
    %6232 = vdwg.mxu0
    %6233 = vmatpush.bf16.msra.mxu0 %v5844
    %6234 = vmatpush.bf16.msra.mxu0 %v5840
    %6235 = vmatpush.bf16.msra.mxu0 %v5836
    %6236 = vmatpush.bf16.msra.mxu0 %v5832
    %6237 = vmatpush.bf16.msra.mxu0 %v5828
    %6238 = vmatpush.bf16.msra.mxu0 %v5824
    %6239 = vmatpush.bf16.msra.mxu0 %v5820
    %6240 = vmatpush.bf16.msra.mxu0 %v5816
    %6241 = vmatmul.bf16.gmra.mxu0 %v4618
    %v6242 = vpop.f32.mrf.mxu0
    %v6243 = vadd.f32 %v6230, %v6242
    %v6244 = vpop.f32.mrf.mxu0
    %6245 = vdwg.mxu0
    %6246 = vmatpush.bf16.msra.mxu0 %v5876
    %6247 = vmatpush.bf16.msra.mxu0 %v5872
    %6248 = vmatpush.bf16.msra.mxu0 %v5868
    %6249 = vmatpush.bf16.msra.mxu0 %v5864
    %6250 = vmatpush.bf16.msra.mxu0 %v5860
    %6251 = vmatpush.bf16.msra.mxu0 %v5856
    %6252 = vmatpush.bf16.msra.mxu0 %v5852
    %6253 = vmatpush.bf16.msra.mxu0 %v5848
    %6254 = vmatmul.bf16.gmra.mxu0 %v4619
    %v6255 = vpop.f32.mrf.mxu0
    %v6256 = vadd.f32 %v6243, %v6255
    %v6257 = vpop.f32.mrf.mxu0
    %6258 = vdwg.mxu0
    %6259 = vmatpush.bf16.msra.mxu0 %v5908
    %6260 = vmatpush.bf16.msra.mxu0 %v5904
    %6261 = vmatpush.bf16.msra.mxu0 %v5900
    %6262 = vmatpush.bf16.msra.mxu0 %v5896
    %6263 = vmatpush.bf16.msra.mxu0 %v5892
    %6264 = vmatpush.bf16.msra.mxu0 %v5888
    %6265 = vmatpush.bf16.msra.mxu0 %v5884
    %6266 = vmatpush.bf16.msra.mxu0 %v5880
    %6267 = vmatmul.bf16.gmra.mxu0 %v4620
    %v6268 = vpop.f32.mrf.mxu0
    %v6269 = vadd.f32 %v6256, %v6268
    %v6270 = vpop.f32.mrf.mxu0
    %6271 = vdwg.mxu0
    %6272 = vmatpush.bf16.msra.mxu0 %v5685
    %6273 = vmatpush.bf16.msra.mxu0 %v5681
    %6274 = vmatpush.bf16.msra.mxu0 %v5677
    %6275 = vmatpush.bf16.msra.mxu0 %v5673
    %6276 = vmatpush.bf16.msra.mxu0 %v5669
    %6277 = vmatpush.bf16.msra.mxu0 %v5665
    %6278 = vmatpush.bf16.msra.mxu0 %v5661
    %6279 = vmatpush.bf16.msra.mxu0 %v5657
    %6280 = vmatmul.bf16.gmra.mxu0 %v4613
    %v6281 = vpop.f32.mrf.mxu0
    %v6282 = vadd.f32 %v4881, %v6281
    %v6283 = vpop.f32.mrf.mxu0
    %6284 = vdwg.mxu0
    %6285 = vmatpush.bf16.msra.mxu0 %v5717
    %6286 = vmatpush.bf16.msra.mxu0 %v5713
    %6287 = vmatpush.bf16.msra.mxu0 %v5709
    %6288 = vmatpush.bf16.msra.mxu0 %v5705
    %6289 = vmatpush.bf16.msra.mxu0 %v5701
    %6290 = vmatpush.bf16.msra.mxu0 %v5697
    %6291 = vmatpush.bf16.msra.mxu0 %v5693
    %6292 = vmatpush.bf16.msra.mxu0 %v5689
    %6293 = vmatmul.bf16.gmra.mxu0 %v4614
    %v6294 = vpop.f32.mrf.mxu0
    %v6295 = vadd.f32 %v6282, %v6294
    %v6296 = vpop.f32.mrf.mxu0
    %6297 = vdwg.mxu0
    %6298 = vmatpush.bf16.msra.mxu0 %v5749
    %6299 = vmatpush.bf16.msra.mxu0 %v5745
    %6300 = vmatpush.bf16.msra.mxu0 %v5741
    %6301 = vmatpush.bf16.msra.mxu0 %v5737
    %6302 = vmatpush.bf16.msra.mxu0 %v5733
    %6303 = vmatpush.bf16.msra.mxu0 %v5729
    %6304 = vmatpush.bf16.msra.mxu0 %v5725
    %6305 = vmatpush.bf16.msra.mxu0 %v5721
    %6306 = vmatmul.bf16.gmra.mxu0 %v4615
    %v6307 = vpop.f32.mrf.mxu0
    %v6308 = vadd.f32 %v6295, %v6307
    %v6309 = vpop.f32.mrf.mxu0
    %6310 = vdwg.mxu0
    %6311 = vmatpush.bf16.msra.mxu0 %v5781
    %6312 = vmatpush.bf16.msra.mxu0 %v5777
    %6313 = vmatpush.bf16.msra.mxu0 %v5773
    %6314 = vmatpush.bf16.msra.mxu0 %v5769
    %6315 = vmatpush.bf16.msra.mxu0 %v5765
    %6316 = vmatpush.bf16.msra.mxu0 %v5761
    %6317 = vmatpush.bf16.msra.mxu0 %v5757
    %6318 = vmatpush.bf16.msra.mxu0 %v5753
    %6319 = vmatmul.bf16.gmra.mxu0 %v4616
    %v6320 = vpop.f32.mrf.mxu0
    %v6321 = vadd.f32 %v6308, %v6320
    %v6322 = vpop.f32.mrf.mxu0
    %6323 = vdwg.mxu0
    %6324 = vmatpush.bf16.msra.mxu0 %v5813
    %6325 = vmatpush.bf16.msra.mxu0 %v5809
    %6326 = vmatpush.bf16.msra.mxu0 %v5805
    %6327 = vmatpush.bf16.msra.mxu0 %v5801
    %6328 = vmatpush.bf16.msra.mxu0 %v5797
    %6329 = vmatpush.bf16.msra.mxu0 %v5793
    %6330 = vmatpush.bf16.msra.mxu0 %v5789
    %6331 = vmatpush.bf16.msra.mxu0 %v5785
    %6332 = vmatmul.bf16.gmra.mxu0 %v4617
    %v6333 = vpop.f32.mrf.mxu0
    %v6334 = vadd.f32 %v6321, %v6333
    %v6335 = vpop.f32.mrf.mxu0
    %6336 = vdwg.mxu0
    %6337 = vmatpush.bf16.msra.mxu0 %v5845
    %6338 = vmatpush.bf16.msra.mxu0 %v5841
    %6339 = vmatpush.bf16.msra.mxu0 %v5837
    %6340 = vmatpush.bf16.msra.mxu0 %v5833
    %6341 = vmatpush.bf16.msra.mxu0 %v5829
    %6342 = vmatpush.bf16.msra.mxu0 %v5825
    %6343 = vmatpush.bf16.msra.mxu0 %v5821
    %6344 = vmatpush.bf16.msra.mxu0 %v5817
    %6345 = vmatmul.bf16.gmra.mxu0 %v4618
    %v6346 = vpop.f32.mrf.mxu0
    %v6347 = vadd.f32 %v6334, %v6346
    %v6348 = vpop.f32.mrf.mxu0
    %6349 = vdwg.mxu0
    %6350 = vmatpush.bf16.msra.mxu0 %v5877
    %6351 = vmatpush.bf16.msra.mxu0 %v5873
    %6352 = vmatpush.bf16.msra.mxu0 %v5869
    %6353 = vmatpush.bf16.msra.mxu0 %v5865
    %6354 = vmatpush.bf16.msra.mxu0 %v5861
    %6355 = vmatpush.bf16.msra.mxu0 %v5857
    %6356 = vmatpush.bf16.msra.mxu0 %v5853
    %6357 = vmatpush.bf16.msra.mxu0 %v5849
    %6358 = vmatmul.bf16.gmra.mxu0 %v4619
    %v6359 = vpop.f32.mrf.mxu0
    %v6360 = vadd.f32 %v6347, %v6359
    %v6361 = vpop.f32.mrf.mxu0
    %6362 = vdwg.mxu0
    %6363 = vmatpush.bf16.msra.mxu0 %v5909
    %6364 = vmatpush.bf16.msra.mxu0 %v5905
    %6365 = vmatpush.bf16.msra.mxu0 %v5901
    %6366 = vmatpush.bf16.msra.mxu0 %v5897
    %6367 = vmatpush.bf16.msra.mxu0 %v5893
    %6368 = vmatpush.bf16.msra.mxu0 %v5889
    %6369 = vmatpush.bf16.msra.mxu0 %v5885
    %6370 = vmatpush.bf16.msra.mxu0 %v5881
    %6371 = vmatmul.bf16.gmra.mxu0 %v4620
    %v6372 = vpop.f32.mrf.mxu0
    %v6373 = vadd.f32 %v6360, %v6372
    %v6374 = vpop.f32.mrf.mxu0
    %6375 = vdwg.mxu0
    %6376 = vmatpush.bf16.msra.mxu0 %v5686
    %6377 = vmatpush.bf16.msra.mxu0 %v5682
    %6378 = vmatpush.bf16.msra.mxu0 %v5678
    %6379 = vmatpush.bf16.msra.mxu0 %v5674
    %6380 = vmatpush.bf16.msra.mxu0 %v5670
    %6381 = vmatpush.bf16.msra.mxu0 %v5666
    %6382 = vmatpush.bf16.msra.mxu0 %v5662
    %6383 = vmatpush.bf16.msra.mxu0 %v5658
    %6384 = vmatmul.bf16.gmra.mxu0 %v4613
    %v6385 = vpop.f32.mrf.mxu0
    %v6386 = vadd.f32 %v4882, %v6385
    %v6387 = vpop.f32.mrf.mxu0
    %6388 = vdwg.mxu0
    %6389 = vmatpush.bf16.msra.mxu0 %v5718
    %6390 = vmatpush.bf16.msra.mxu0 %v5714
    %6391 = vmatpush.bf16.msra.mxu0 %v5710
    %6392 = vmatpush.bf16.msra.mxu0 %v5706
    %6393 = vmatpush.bf16.msra.mxu0 %v5702
    %6394 = vmatpush.bf16.msra.mxu0 %v5698
    %6395 = vmatpush.bf16.msra.mxu0 %v5694
    %6396 = vmatpush.bf16.msra.mxu0 %v5690
    %6397 = vmatmul.bf16.gmra.mxu0 %v4614
    %v6398 = vpop.f32.mrf.mxu0
    %v6399 = vadd.f32 %v6386, %v6398
    %v6400 = vpop.f32.mrf.mxu0
    %6401 = vdwg.mxu0
    %6402 = vmatpush.bf16.msra.mxu0 %v5750
    %6403 = vmatpush.bf16.msra.mxu0 %v5746
    %6404 = vmatpush.bf16.msra.mxu0 %v5742
    %6405 = vmatpush.bf16.msra.mxu0 %v5738
    %6406 = vmatpush.bf16.msra.mxu0 %v5734
    %6407 = vmatpush.bf16.msra.mxu0 %v5730
    %6408 = vmatpush.bf16.msra.mxu0 %v5726
    %6409 = vmatpush.bf16.msra.mxu0 %v5722
    %6410 = vmatmul.bf16.gmra.mxu0 %v4615
    %v6411 = vpop.f32.mrf.mxu0
    %v6412 = vadd.f32 %v6399, %v6411
    %v6413 = vpop.f32.mrf.mxu0
    %6414 = vdwg.mxu0
    %6415 = vmatpush.bf16.msra.mxu0 %v5782
    %6416 = vmatpush.bf16.msra.mxu0 %v5778
    %6417 = vmatpush.bf16.msra.mxu0 %v5774
    %6418 = vmatpush.bf16.msra.mxu0 %v5770
    %6419 = vmatpush.bf16.msra.mxu0 %v5766
    %6420 = vmatpush.bf16.msra.mxu0 %v5762
    %6421 = vmatpush.bf16.msra.mxu0 %v5758
    %6422 = vmatpush.bf16.msra.mxu0 %v5754
    %6423 = vmatmul.bf16.gmra.mxu0 %v4616
    %v6424 = vpop.f32.mrf.mxu0
    %v6425 = vadd.f32 %v6412, %v6424
    %v6426 = vpop.f32.mrf.mxu0
    %6427 = vdwg.mxu0
    %6428 = vmatpush.bf16.msra.mxu0 %v5814
    %6429 = vmatpush.bf16.msra.mxu0 %v5810
    %6430 = vmatpush.bf16.msra.mxu0 %v5806
    %6431 = vmatpush.bf16.msra.mxu0 %v5802
    %6432 = vmatpush.bf16.msra.mxu0 %v5798
    %6433 = vmatpush.bf16.msra.mxu0 %v5794
    %6434 = vmatpush.bf16.msra.mxu0 %v5790
    %6435 = vmatpush.bf16.msra.mxu0 %v5786
    %6436 = vmatmul.bf16.gmra.mxu0 %v4617
    %v6437 = vpop.f32.mrf.mxu0
    %v6438 = vadd.f32 %v6425, %v6437
    %v6439 = vpop.f32.mrf.mxu0
    %6440 = vdwg.mxu0
    %6441 = vmatpush.bf16.msra.mxu0 %v5846
    %6442 = vmatpush.bf16.msra.mxu0 %v5842
    %6443 = vmatpush.bf16.msra.mxu0 %v5838
    %6444 = vmatpush.bf16.msra.mxu0 %v5834
    %6445 = vmatpush.bf16.msra.mxu0 %v5830
    %6446 = vmatpush.bf16.msra.mxu0 %v5826
    %6447 = vmatpush.bf16.msra.mxu0 %v5822
    %6448 = vmatpush.bf16.msra.mxu0 %v5818
    %6449 = vmatmul.bf16.gmra.mxu0 %v4618
    %v6450 = vpop.f32.mrf.mxu0
    %v6451 = vadd.f32 %v6438, %v6450
    %v6452 = vpop.f32.mrf.mxu0
    %6453 = vdwg.mxu0
    %6454 = vmatpush.bf16.msra.mxu0 %v5878
    %6455 = vmatpush.bf16.msra.mxu0 %v5874
    %6456 = vmatpush.bf16.msra.mxu0 %v5870
    %6457 = vmatpush.bf16.msra.mxu0 %v5866
    %6458 = vmatpush.bf16.msra.mxu0 %v5862
    %6459 = vmatpush.bf16.msra.mxu0 %v5858
    %6460 = vmatpush.bf16.msra.mxu0 %v5854
    %6461 = vmatpush.bf16.msra.mxu0 %v5850
    %6462 = vmatmul.bf16.gmra.mxu0 %v4619
    %v6463 = vpop.f32.mrf.mxu0
    %v6464 = vadd.f32 %v6451, %v6463
    %v6465 = vpop.f32.mrf.mxu0
    %6466 = vdwg.mxu0
    %6467 = vmatpush.bf16.msra.mxu0 %v5910
    %6468 = vmatpush.bf16.msra.mxu0 %v5906
    %6469 = vmatpush.bf16.msra.mxu0 %v5902
    %6470 = vmatpush.bf16.msra.mxu0 %v5898
    %6471 = vmatpush.bf16.msra.mxu0 %v5894
    %6472 = vmatpush.bf16.msra.mxu0 %v5890
    %6473 = vmatpush.bf16.msra.mxu0 %v5886
    %6474 = vmatpush.bf16.msra.mxu0 %v5882
    %6475 = vmatmul.bf16.gmra.mxu0 %v4620
    %v6476 = vpop.f32.mrf.mxu0
    %v6477 = vadd.f32 %v6464, %v6476
    %v6478 = vpop.f32.mrf.mxu0
    %6479 = vdwg.mxu0
    %6480 = vmatpush.bf16.msra.mxu0 %v5687
    %6481 = vmatpush.bf16.msra.mxu0 %v5683
    %6482 = vmatpush.bf16.msra.mxu0 %v5679
    %6483 = vmatpush.bf16.msra.mxu0 %v5675
    %6484 = vmatpush.bf16.msra.mxu0 %v5671
    %6485 = vmatpush.bf16.msra.mxu0 %v5667
    %6486 = vmatpush.bf16.msra.mxu0 %v5663
    %6487 = vmatpush.bf16.msra.mxu0 %v5659
    %6488 = vmatmul.bf16.gmra.mxu0 %v4613
    %v6489 = vpop.f32.mrf.mxu0
    %v6490 = vadd.f32 %v4883, %v6489
    %v6491 = vpop.f32.mrf.mxu0
    %6492 = vdwg.mxu0
    %6493 = vmatpush.bf16.msra.mxu0 %v5719
    %6494 = vmatpush.bf16.msra.mxu0 %v5715
    %6495 = vmatpush.bf16.msra.mxu0 %v5711
    %6496 = vmatpush.bf16.msra.mxu0 %v5707
    %6497 = vmatpush.bf16.msra.mxu0 %v5703
    %6498 = vmatpush.bf16.msra.mxu0 %v5699
    %6499 = vmatpush.bf16.msra.mxu0 %v5695
    %6500 = vmatpush.bf16.msra.mxu0 %v5691
    %6501 = vmatmul.bf16.gmra.mxu0 %v4614
    %v6502 = vpop.f32.mrf.mxu0
    %v6503 = vadd.f32 %v6490, %v6502
    %v6504 = vpop.f32.mrf.mxu0
    %6505 = vdwg.mxu0
    %6506 = vmatpush.bf16.msra.mxu0 %v5751
    %6507 = vmatpush.bf16.msra.mxu0 %v5747
    %6508 = vmatpush.bf16.msra.mxu0 %v5743
    %6509 = vmatpush.bf16.msra.mxu0 %v5739
    %6510 = vmatpush.bf16.msra.mxu0 %v5735
    %6511 = vmatpush.bf16.msra.mxu0 %v5731
    %6512 = vmatpush.bf16.msra.mxu0 %v5727
    %6513 = vmatpush.bf16.msra.mxu0 %v5723
    %6514 = vmatmul.bf16.gmra.mxu0 %v4615
    %v6515 = vpop.f32.mrf.mxu0
    %v6516 = vadd.f32 %v6503, %v6515
    %v6517 = vpop.f32.mrf.mxu0
    %6518 = vdwg.mxu0
    %6519 = vmatpush.bf16.msra.mxu0 %v5783
    %6520 = vmatpush.bf16.msra.mxu0 %v5779
    %6521 = vmatpush.bf16.msra.mxu0 %v5775
    %6522 = vmatpush.bf16.msra.mxu0 %v5771
    %6523 = vmatpush.bf16.msra.mxu0 %v5767
    %6524 = vmatpush.bf16.msra.mxu0 %v5763
    %6525 = vmatpush.bf16.msra.mxu0 %v5759
    %6526 = vmatpush.bf16.msra.mxu0 %v5755
    %6527 = vmatmul.bf16.gmra.mxu0 %v4616
    %v6528 = vpop.f32.mrf.mxu0
    %v6529 = vadd.f32 %v6516, %v6528
    %v6530 = vpop.f32.mrf.mxu0
    %6531 = vdwg.mxu0
    %6532 = vmatpush.bf16.msra.mxu0 %v5815
    %6533 = vmatpush.bf16.msra.mxu0 %v5811
    %6534 = vmatpush.bf16.msra.mxu0 %v5807
    %6535 = vmatpush.bf16.msra.mxu0 %v5803
    %6536 = vmatpush.bf16.msra.mxu0 %v5799
    %6537 = vmatpush.bf16.msra.mxu0 %v5795
    %6538 = vmatpush.bf16.msra.mxu0 %v5791
    %6539 = vmatpush.bf16.msra.mxu0 %v5787
    %6540 = vmatmul.bf16.gmra.mxu0 %v4617
    %v6541 = vpop.f32.mrf.mxu0
    %v6542 = vadd.f32 %v6529, %v6541
    %v6543 = vpop.f32.mrf.mxu0
    %6544 = vdwg.mxu0
    %6545 = vmatpush.bf16.msra.mxu0 %v5847
    %6546 = vmatpush.bf16.msra.mxu0 %v5843
    %6547 = vmatpush.bf16.msra.mxu0 %v5839
    %6548 = vmatpush.bf16.msra.mxu0 %v5835
    %6549 = vmatpush.bf16.msra.mxu0 %v5831
    %6550 = vmatpush.bf16.msra.mxu0 %v5827
    %6551 = vmatpush.bf16.msra.mxu0 %v5823
    %6552 = vmatpush.bf16.msra.mxu0 %v5819
    %6553 = vmatmul.bf16.gmra.mxu0 %v4618
    %v6554 = vpop.f32.mrf.mxu0
    %v6555 = vadd.f32 %v6542, %v6554
    %v6556 = vpop.f32.mrf.mxu0
    %6557 = vdwg.mxu0
    %6558 = vmatpush.bf16.msra.mxu0 %v5879
    %6559 = vmatpush.bf16.msra.mxu0 %v5875
    %6560 = vmatpush.bf16.msra.mxu0 %v5871
    %6561 = vmatpush.bf16.msra.mxu0 %v5867
    %6562 = vmatpush.bf16.msra.mxu0 %v5863
    %6563 = vmatpush.bf16.msra.mxu0 %v5859
    %6564 = vmatpush.bf16.msra.mxu0 %v5855
    %6565 = vmatpush.bf16.msra.mxu0 %v5851
    %6566 = vmatmul.bf16.gmra.mxu0 %v4619
    %v6567 = vpop.f32.mrf.mxu0
    %v6568 = vadd.f32 %v6555, %v6567
    %v6569 = vpop.f32.mrf.mxu0
    %6570 = vdwg.mxu0
    %6571 = vmatpush.bf16.msra.mxu0 %v5911
    %6572 = vmatpush.bf16.msra.mxu0 %v5907
    %6573 = vmatpush.bf16.msra.mxu0 %v5903
    %6574 = vmatpush.bf16.msra.mxu0 %v5899
    %6575 = vmatpush.bf16.msra.mxu0 %v5895
    %6576 = vmatpush.bf16.msra.mxu0 %v5891
    %6577 = vmatpush.bf16.msra.mxu0 %v5887
    %6578 = vmatpush.bf16.msra.mxu0 %v5883
    %6579 = vmatmul.bf16.gmra.mxu0 %v4620
    %v6580 = vpop.f32.mrf.mxu0
    %v6581 = vadd.f32 %v6568, %v6580
    %v6582 = vpop.f32.mrf.mxu0
    %6583 = vdwg.mxu0
    %v6584 = vmax.f32 %v6269, 0.0
    %v6585 = vmax.f32 %v6373, 0.0
    %v6586 = vmax.f32 %v6477, 0.0
    %v6587 = vmax.f32 %v6581, 0.0
    %v6588 = vpack.c.bf16 %v6584, %v6584
    %v6589 = vpack.c.bf16 %v6585, %v6585
    %v6590 = vpack.c.bf16 %v6586, %v6586
    %v6591 = vpack.c.bf16 %v6587, %v6587
    %v6592 = vld [vmem:[#allocation10] sm:$0xff]
    %v6593 = vld [vmem:[#allocation10 + $0x8] sm:$0xff]
    %v6594 = vld [vmem:[#allocation10 + $0x10] sm:$0xff]
    %v6595 = vld [vmem:[#allocation10 + $0x18] sm:$0xff]
    %v6596 = vld [vmem:[#allocation10 + $0x20] sm:$0xff]
    %v6597 = vld [vmem:[#allocation10 + $0x28] sm:$0xff]
    %v6598 = vld [vmem:[#allocation10 + $0x30] sm:$0xff]
    %v6599 = vld [vmem:[#allocation10 + $0x38] sm:$0xff]
    %v6600 = vld [vmem:[#allocation10 + $0x40] sm:$0xff]
    %v6601 = vld [vmem:[#allocation10 + $0x48] sm:$0xff]
    %v6602 = vld [vmem:[#allocation10 + $0x50] sm:$0xff]
    %v6603 = vld [vmem:[#allocation10 + $0x58] sm:$0xff]
    %v6604 = vld [vmem:[#allocation10 + $0x60] sm:$0xff]
    %v6605 = vld [vmem:[#allocation10 + $0x68] sm:$0xff]
    %v6606 = vld [vmem:[#allocation10 + $0x70] sm:$0xff]
    %v6607 = vld [vmem:[#allocation10 + $0x78] sm:$0xff]
    %v6608 = vld [vmem:[#allocation10 + $0x80] sm:$0xff]
    %v6609 = vld [vmem:[#allocation10 + $0x88] sm:$0xff]
    %v6610 = vld [vmem:[#allocation10 + $0x90] sm:$0xff]
    %v6611 = vld [vmem:[#allocation10 + $0x98] sm:$0xff]
    %v6612 = vld [vmem:[#allocation10 + $0xa0] sm:$0xff]
    %v6613 = vld [vmem:[#allocation10 + $0xa8] sm:$0xff]
    %v6614 = vld [vmem:[#allocation10 + $0xb0] sm:$0xff]
    %v6615 = vld [vmem:[#allocation10 + $0xb8] sm:$0xff]
    %v6616 = vld [vmem:[#allocation10 + $0xc0] sm:$0xff]
    %v6617 = vld [vmem:[#allocation10 + $0xc8] sm:$0xff]
    %v6618 = vld [vmem:[#allocation10 + $0xd0] sm:$0xff]
    %v6619 = vld [vmem:[#allocation10 + $0xd8] sm:$0xff]
    %v6620 = vld [vmem:[#allocation10 + $0xe0] sm:$0xff]
    %v6621 = vld [vmem:[#allocation10 + $0xe8] sm:$0xff]
    %v6622 = vld [vmem:[#allocation10 + $0xf0] sm:$0xff]
    %v6623 = vld [vmem:[#allocation10 + $0xf8] sm:$0xff]
    %v6624 = vld [vmem:[#allocation10 + $0x100] sm:$0xff]
    %v6625 = vld [vmem:[#allocation10 + $0x108] sm:$0xff]
    %v6626 = vld [vmem:[#allocation10 + $0x110] sm:$0xff]
    %v6627 = vld [vmem:[#allocation10 + $0x118] sm:$0xff]
    %v6628 = vld [vmem:[#allocation10 + $0x120] sm:$0xff]
    %v6629 = vld [vmem:[#allocation10 + $0x128] sm:$0xff]
    %v6630 = vld [vmem:[#allocation10 + $0x130] sm:$0xff]
    %v6631 = vld [vmem:[#allocation10 + $0x138] sm:$0xff]
    %v6632 = vld [vmem:[#allocation10 + $0x140] sm:$0xff]
    %v6633 = vld [vmem:[#allocation10 + $0x148] sm:$0xff]
    %v6634 = vld [vmem:[#allocation10 + $0x150] sm:$0xff]
    %v6635 = vld [vmem:[#allocation10 + $0x158] sm:$0xff]
    %v6636 = vld [vmem:[#allocation10 + $0x160] sm:$0xff]
    %v6637 = vld [vmem:[#allocation10 + $0x168] sm:$0xff]
    %v6638 = vld [vmem:[#allocation10 + $0x170] sm:$0xff]
    %v6639 = vld [vmem:[#allocation10 + $0x178] sm:$0xff]
    %v6640 = vld [vmem:[#allocation10 + $0x180] sm:$0xff]
    %v6641 = vld [vmem:[#allocation10 + $0x188] sm:$0xff]
    %v6642 = vld [vmem:[#allocation10 + $0x190] sm:$0xff]
    %v6643 = vld [vmem:[#allocation10 + $0x198] sm:$0xff]
    %v6644 = vld [vmem:[#allocation10 + $0x1a0] sm:$0xff]
    %v6645 = vld [vmem:[#allocation10 + $0x1a8] sm:$0xff]
    %v6646 = vld [vmem:[#allocation10 + $0x1b0] sm:$0xff]
    %v6647 = vld [vmem:[#allocation10 + $0x1b8] sm:$0xff]
    %v6648 = vld [vmem:[#allocation10 + $0x1c0] sm:$0xff]
    %v6649 = vld [vmem:[#allocation10 + $0x1c8] sm:$0xff]
    %v6650 = vld [vmem:[#allocation10 + $0x1d0] sm:$0xff]
    %v6651 = vld [vmem:[#allocation10 + $0x1d8] sm:$0xff]
    %v6652 = vld [vmem:[#allocation10 + $0x1e0] sm:$0xff]
    %v6653 = vld [vmem:[#allocation10 + $0x1e8] sm:$0xff]
    %v6654 = vld [vmem:[#allocation10 + $0x1f0] sm:$0xff]
    %v6655 = vld [vmem:[#allocation10 + $0x1f8] sm:$0xff]
    %s6656 = scalar_lea.vmem [#allocation14], 3
    %v6657 = vld [vmem:[%s6656] ss:$8 sm:$0x3]
    %v6659 = vperm.slane %v6657, 0
    %v6660 = vperm.slane %v6657, 1
    %v6727 = vunpack.c.l.b16 %v6592
    %v6728 = vunpack.c.h.b16 %v6592
    %v6729 = vunpack.c.l.b16 %v6593
    %v6730 = vunpack.c.h.b16 %v6593
    %v6731 = vunpack.c.l.b16 %v6594
    %v6732 = vunpack.c.h.b16 %v6594
    %v6733 = vunpack.c.l.b16 %v6595
    %v6734 = vunpack.c.h.b16 %v6595
    %v6735 = vunpack.c.l.b16 %v6596
    %v6736 = vunpack.c.h.b16 %v6596
    %v6737 = vunpack.c.l.b16 %v6597
    %v6738 = vunpack.c.h.b16 %v6597
    %v6739 = vunpack.c.l.b16 %v6598
    %v6740 = vunpack.c.h.b16 %v6598
    %v6741 = vunpack.c.l.b16 %v6599
    %v6742 = vunpack.c.h.b16 %v6599
    %v6743 = vunpack.c.l.b16 %v6600
    %v6744 = vunpack.c.h.b16 %v6600
    %v6745 = vunpack.c.l.b16 %v6601
    %v6746 = vunpack.c.h.b16 %v6601
    %v6747 = vunpack.c.l.b16 %v6602
    %v6748 = vunpack.c.h.b16 %v6602
    %v6749 = vunpack.c.l.b16 %v6603
    %v6750 = vunpack.c.h.b16 %v6603
    %v6751 = vunpack.c.l.b16 %v6604
    %v6752 = vunpack.c.h.b16 %v6604
    %v6753 = vunpack.c.l.b16 %v6605
    %v6754 = vunpack.c.h.b16 %v6605
    %v6755 = vunpack.c.l.b16 %v6606
    %v6756 = vunpack.c.h.b16 %v6606
    %v6757 = vunpack.c.l.b16 %v6607
    %v6758 = vunpack.c.h.b16 %v6607
    %v6759 = vunpack.c.l.b16 %v6608
    %v6760 = vunpack.c.h.b16 %v6608
    %v6761 = vunpack.c.l.b16 %v6609
    %v6762 = vunpack.c.h.b16 %v6609
    %v6763 = vunpack.c.l.b16 %v6610
    %v6764 = vunpack.c.h.b16 %v6610
    %v6765 = vunpack.c.l.b16 %v6611
    %v6766 = vunpack.c.h.b16 %v6611
    %v6767 = vunpack.c.l.b16 %v6612
    %v6768 = vunpack.c.h.b16 %v6612
    %v6769 = vunpack.c.l.b16 %v6613
    %v6770 = vunpack.c.h.b16 %v6613
    %v6771 = vunpack.c.l.b16 %v6614
    %v6772 = vunpack.c.h.b16 %v6614
    %v6773 = vunpack.c.l.b16 %v6615
    %v6774 = vunpack.c.h.b16 %v6615
    %v6775 = vunpack.c.l.b16 %v6616
    %v6776 = vunpack.c.h.b16 %v6616
    %v6777 = vunpack.c.l.b16 %v6617
    %v6778 = vunpack.c.h.b16 %v6617
    %v6779 = vunpack.c.l.b16 %v6618
    %v6780 = vunpack.c.h.b16 %v6618
    %v6781 = vunpack.c.l.b16 %v6619
    %v6782 = vunpack.c.h.b16 %v6619
    %v6783 = vunpack.c.l.b16 %v6620
    %v6784 = vunpack.c.h.b16 %v6620
    %v6785 = vunpack.c.l.b16 %v6621
    %v6786 = vunpack.c.h.b16 %v6621
    %v6787 = vunpack.c.l.b16 %v6622
    %v6788 = vunpack.c.h.b16 %v6622
    %v6789 = vunpack.c.l.b16 %v6623
    %v6790 = vunpack.c.h.b16 %v6623
    %v6791 = vunpack.c.l.b16 %v6624
    %v6792 = vunpack.c.h.b16 %v6624
    %v6793 = vunpack.c.l.b16 %v6625
    %v6794 = vunpack.c.h.b16 %v6625
    %v6795 = vunpack.c.l.b16 %v6626
    %v6796 = vunpack.c.h.b16 %v6626
    %v6797 = vunpack.c.l.b16 %v6627
    %v6798 = vunpack.c.h.b16 %v6627
    %v6799 = vunpack.c.l.b16 %v6628
    %v6800 = vunpack.c.h.b16 %v6628
    %v6801 = vunpack.c.l.b16 %v6629
    %v6802 = vunpack.c.h.b16 %v6629
    %v6803 = vunpack.c.l.b16 %v6630
    %v6804 = vunpack.c.h.b16 %v6630
    %v6805 = vunpack.c.l.b16 %v6631
    %v6806 = vunpack.c.h.b16 %v6631
    %v6807 = vunpack.c.l.b16 %v6632
    %v6808 = vunpack.c.h.b16 %v6632
    %v6809 = vunpack.c.l.b16 %v6633
    %v6810 = vunpack.c.h.b16 %v6633
    %v6811 = vunpack.c.l.b16 %v6634
    %v6812 = vunpack.c.h.b16 %v6634
    %v6813 = vunpack.c.l.b16 %v6635
    %v6814 = vunpack.c.h.b16 %v6635
    %v6815 = vunpack.c.l.b16 %v6636
    %v6816 = vunpack.c.h.b16 %v6636
    %v6817 = vunpack.c.l.b16 %v6637
    %v6818 = vunpack.c.h.b16 %v6637
    %v6819 = vunpack.c.l.b16 %v6638
    %v6820 = vunpack.c.h.b16 %v6638
    %v6821 = vunpack.c.l.b16 %v6639
    %v6822 = vunpack.c.h.b16 %v6639
    %v6823 = vunpack.c.l.b16 %v6640
    %v6824 = vunpack.c.h.b16 %v6640
    %v6825 = vunpack.c.l.b16 %v6641
    %v6826 = vunpack.c.h.b16 %v6641
    %v6827 = vunpack.c.l.b16 %v6642
    %v6828 = vunpack.c.h.b16 %v6642
    %v6829 = vunpack.c.l.b16 %v6643
    %v6830 = vunpack.c.h.b16 %v6643
    %v6831 = vunpack.c.l.b16 %v6644
    %v6832 = vunpack.c.h.b16 %v6644
    %v6833 = vunpack.c.l.b16 %v6645
    %v6834 = vunpack.c.h.b16 %v6645
    %v6835 = vunpack.c.l.b16 %v6646
    %v6836 = vunpack.c.h.b16 %v6646
    %v6837 = vunpack.c.l.b16 %v6647
    %v6838 = vunpack.c.h.b16 %v6647
    %v6839 = vunpack.c.l.b16 %v6648
    %v6840 = vunpack.c.h.b16 %v6648
    %v6841 = vunpack.c.l.b16 %v6649
    %v6842 = vunpack.c.h.b16 %v6649
    %v6843 = vunpack.c.l.b16 %v6650
    %v6844 = vunpack.c.h.b16 %v6650
    %v6845 = vunpack.c.l.b16 %v6651
    %v6846 = vunpack.c.h.b16 %v6651
    %v6847 = vunpack.c.l.b16 %v6652
    %v6848 = vunpack.c.h.b16 %v6652
    %v6849 = vunpack.c.l.b16 %v6653
    %v6850 = vunpack.c.h.b16 %v6653
    %v6851 = vunpack.c.l.b16 %v6654
    %v6852 = vunpack.c.h.b16 %v6654
    %v6853 = vunpack.c.l.b16 %v6655
    %v6854 = vunpack.c.h.b16 %v6655
    %v6855 = vpack.c.b16 %v6729, %v6727
    %v6856 = vpack.c.b16 %v6730, %v6728
    %v6857 = vpack.c.b16 %v6733, %v6731
    %v6858 = vpack.c.b16 %v6734, %v6732
    %v6859 = vpack.c.b16 %v6737, %v6735
    %v6860 = vpack.c.b16 %v6738, %v6736
    %v6861 = vpack.c.b16 %v6741, %v6739
    %v6862 = vpack.c.b16 %v6742, %v6740
    %v6863 = vpack.c.b16 %v6745, %v6743
    %v6864 = vpack.c.b16 %v6746, %v6744
    %v6865 = vpack.c.b16 %v6749, %v6747
    %v6866 = vpack.c.b16 %v6750, %v6748
    %v6867 = vpack.c.b16 %v6753, %v6751
    %v6868 = vpack.c.b16 %v6754, %v6752
    %v6869 = vpack.c.b16 %v6757, %v6755
    %v6870 = vpack.c.b16 %v6758, %v6756
    %v6871 = vpack.c.b16 %v6761, %v6759
    %v6872 = vpack.c.b16 %v6762, %v6760
    %v6873 = vpack.c.b16 %v6765, %v6763
    %v6874 = vpack.c.b16 %v6766, %v6764
    %v6875 = vpack.c.b16 %v6769, %v6767
    %v6876 = vpack.c.b16 %v6770, %v6768
    %v6877 = vpack.c.b16 %v6773, %v6771
    %v6878 = vpack.c.b16 %v6774, %v6772
    %v6879 = vpack.c.b16 %v6777, %v6775
    %v6880 = vpack.c.b16 %v6778, %v6776
    %v6881 = vpack.c.b16 %v6781, %v6779
    %v6882 = vpack.c.b16 %v6782, %v6780
    %v6883 = vpack.c.b16 %v6785, %v6783
    %v6884 = vpack.c.b16 %v6786, %v6784
    %v6885 = vpack.c.b16 %v6789, %v6787
    %v6886 = vpack.c.b16 %v6790, %v6788
    %v6887 = vpack.c.b16 %v6793, %v6791
    %v6888 = vpack.c.b16 %v6794, %v6792
    %v6889 = vpack.c.b16 %v6797, %v6795
    %v6890 = vpack.c.b16 %v6798, %v6796
    %v6891 = vpack.c.b16 %v6801, %v6799
    %v6892 = vpack.c.b16 %v6802, %v6800
    %v6893 = vpack.c.b16 %v6805, %v6803
    %v6894 = vpack.c.b16 %v6806, %v6804
    %v6895 = vpack.c.b16 %v6809, %v6807
    %v6896 = vpack.c.b16 %v6810, %v6808
    %v6897 = vpack.c.b16 %v6813, %v6811
    %v6898 = vpack.c.b16 %v6814, %v6812
    %v6899 = vpack.c.b16 %v6817, %v6815
    %v6900 = vpack.c.b16 %v6818, %v6816
    %v6901 = vpack.c.b16 %v6821, %v6819
    %v6902 = vpack.c.b16 %v6822, %v6820
    %v6903 = vpack.c.b16 %v6825, %v6823
    %v6904 = vpack.c.b16 %v6826, %v6824
    %v6905 = vpack.c.b16 %v6829, %v6827
    %v6906 = vpack.c.b16 %v6830, %v6828
    %v6907 = vpack.c.b16 %v6833, %v6831
    %v6908 = vpack.c.b16 %v6834, %v6832
    %v6909 = vpack.c.b16 %v6837, %v6835
    %v6910 = vpack.c.b16 %v6838, %v6836
    %v6911 = vpack.c.b16 %v6841, %v6839
    %v6912 = vpack.c.b16 %v6842, %v6840
    %v6913 = vpack.c.b16 %v6845, %v6843
    %v6914 = vpack.c.b16 %v6846, %v6844
    %v6915 = vpack.c.b16 %v6849, %v6847
    %v6916 = vpack.c.b16 %v6850, %v6848
    %v6917 = vpack.c.b16 %v6853, %v6851
    %v6918 = vpack.c.b16 %v6854, %v6852
    %6983 = vmatpush.bf16.msra.mxu0 %v6869
    %6984 = vmatpush.bf16.msra.mxu0 %v6867
    %6985 = vmatpush.bf16.msra.mxu0 %v6865
    %6986 = vmatpush.bf16.msra.mxu0 %v6863
    %6987 = vmatpush.bf16.msra.mxu0 %v6861
    %6988 = vmatpush.bf16.msra.mxu0 %v6859
    %6989 = vmatpush.bf16.msra.mxu0 %v6857
    %6990 = vmatpush.bf16.msra.mxu0 %v6855
    %6991 = vmatmul.bf16.gmra.mxu0 %v6588
    %v6992 = vpop.f32.mrf.mxu0
    %v6993 = vadd.f32 %v6659, %v6992
    %v6994 = vpop.f32.mrf.mxu0
    %6995 = vdwg.mxu0
    %6996 = vmatpush.bf16.msra.mxu0 %v6885
    %6997 = vmatpush.bf16.msra.mxu0 %v6883
    %6998 = vmatpush.bf16.msra.mxu0 %v6881
    %6999 = vmatpush.bf16.msra.mxu0 %v6879
    %7000 = vmatpush.bf16.msra.mxu0 %v6877
    %7001 = vmatpush.bf16.msra.mxu0 %v6875
    %7002 = vmatpush.bf16.msra.mxu0 %v6873
    %7003 = vmatpush.bf16.msra.mxu0 %v6871
    %7004 = vmatmul.bf16.gmra.mxu0 %v6589
    %v7005 = vpop.f32.mrf.mxu0
    %v7006 = vadd.f32 %v6993, %v7005
    %v7007 = vpop.f32.mrf.mxu0
    %7008 = vdwg.mxu0
    %7009 = vmatpush.bf16.msra.mxu0 %v6901
    %7010 = vmatpush.bf16.msra.mxu0 %v6899
    %7011 = vmatpush.bf16.msra.mxu0 %v6897
    %7012 = vmatpush.bf16.msra.mxu0 %v6895
    %7013 = vmatpush.bf16.msra.mxu0 %v6893
    %7014 = vmatpush.bf16.msra.mxu0 %v6891
    %7015 = vmatpush.bf16.msra.mxu0 %v6889
    %7016 = vmatpush.bf16.msra.mxu0 %v6887
    %7017 = vmatmul.bf16.gmra.mxu0 %v6590
    %v7018 = vpop.f32.mrf.mxu0
    %v7019 = vadd.f32 %v7006, %v7018
    %v7020 = vpop.f32.mrf.mxu0
    %7021 = vdwg.mxu0
    %7022 = vmatpush.bf16.msra.mxu0 %v6917
    %7023 = vmatpush.bf16.msra.mxu0 %v6915
    %7024 = vmatpush.bf16.msra.mxu0 %v6913
    %7025 = vmatpush.bf16.msra.mxu0 %v6911
    %7026 = vmatpush.bf16.msra.mxu0 %v6909
    %7027 = vmatpush.bf16.msra.mxu0 %v6907
    %7028 = vmatpush.bf16.msra.mxu0 %v6905
    %7029 = vmatpush.bf16.msra.mxu0 %v6903
    %7030 = vmatmul.bf16.gmra.mxu0 %v6591
    %v7031 = vpop.f32.mrf.mxu0
    %v7032 = vadd.f32 %v7019, %v7031
    %v7033 = vpop.f32.mrf.mxu0
    %7034 = vdwg.mxu0
    %7035 = vmatpush.bf16.msra.mxu0 %v6870
    %7036 = vmatpush.bf16.msra.mxu0 %v6868
    %7037 = vmatpush.bf16.msra.mxu0 %v6866
    %7038 = vmatpush.bf16.msra.mxu0 %v6864
    %7039 = vmatpush.bf16.msra.mxu0 %v6862
    %7040 = vmatpush.bf16.msra.mxu0 %v6860
    %7041 = vmatpush.bf16.msra.mxu0 %v6858
    %7042 = vmatpush.bf16.msra.mxu0 %v6856
    %7043 = vmatmul.bf16.gmra.mxu0 %v6588
    %v7044 = vpop.f32.mrf.mxu0
    %v7045 = vadd.f32 %v6660, %v7044
    %v7046 = vpop.f32.mrf.mxu0
    %7047 = vdwg.mxu0
    %7048 = vmatpush.bf16.msra.mxu0 %v6886
    %7049 = vmatpush.bf16.msra.mxu0 %v6884
    %7050 = vmatpush.bf16.msra.mxu0 %v6882
    %7051 = vmatpush.bf16.msra.mxu0 %v6880
    %7052 = vmatpush.bf16.msra.mxu0 %v6878
    %7053 = vmatpush.bf16.msra.mxu0 %v6876
    %7054 = vmatpush.bf16.msra.mxu0 %v6874
    %7055 = vmatpush.bf16.msra.mxu0 %v6872
    %7056 = vmatmul.bf16.gmra.mxu0 %v6589
    %v7057 = vpop.f32.mrf.mxu0
    %v7058 = vadd.f32 %v7045, %v7057
    %v7059 = vpop.f32.mrf.mxu0
    %7060 = vdwg.mxu0
    %7061 = vmatpush.bf16.msra.mxu0 %v6902
    %7062 = vmatpush.bf16.msra.mxu0 %v6900
    %7063 = vmatpush.bf16.msra.mxu0 %v6898
    %7064 = vmatpush.bf16.msra.mxu0 %v6896
    %7065 = vmatpush.bf16.msra.mxu0 %v6894
    %7066 = vmatpush.bf16.msra.mxu0 %v6892
    %7067 = vmatpush.bf16.msra.mxu0 %v6890
    %7068 = vmatpush.bf16.msra.mxu0 %v6888
    %7069 = vmatmul.bf16.gmra.mxu0 %v6590
    %v7070 = vpop.f32.mrf.mxu0
    %v7071 = vadd.f32 %v7058, %v7070
    %v7072 = vpop.f32.mrf.mxu0
    %7073 = vdwg.mxu0
    %7074 = vmatpush.bf16.msra.mxu0 %v6918
    %7075 = vmatpush.bf16.msra.mxu0 %v6916
    %7076 = vmatpush.bf16.msra.mxu0 %v6914
    %7077 = vmatpush.bf16.msra.mxu0 %v6912
    %7078 = vmatpush.bf16.msra.mxu0 %v6910
    %7079 = vmatpush.bf16.msra.mxu0 %v6908
    %7080 = vmatpush.bf16.msra.mxu0 %v6906
    %7081 = vmatpush.bf16.msra.mxu0 %v6904
    %7082 = vmatmul.bf16.gmra.mxu0 %v6591
    %v7083 = vpop.f32.mrf.mxu0
    %v7084 = vadd.f32 %v7071, %v7083
    %v7085 = vpop.f32.mrf.mxu0
    %7086 = vdwg.mxu0
    %v7087 = vmax.f32 %v7032, 0.0
    %v7088 = vmax.f32 %v7084, 0.0
    %v7089 = vpack.c.bf16 %v7087, %v7087
    %v7090 = vpack.c.bf16 %v7088, %v7088
    %v7091 = vld [vmem:[#allocation11] sm:$0xf]
    %v7092 = vld [vmem:[#allocation11 + $0x4] sm:$0xf]
    %v7093 = vld [vmem:[#allocation11 + $0x8] sm:$0xf]
    %v7094 = vld [vmem:[#allocation11 + $0xc] sm:$0xf]
    %v7095 = vld [vmem:[#allocation11 + $0x10] sm:$0xf]
    %v7096 = vld [vmem:[#allocation11 + $0x14] sm:$0xf]
    %v7097 = vld [vmem:[#allocation11 + $0x18] sm:$0xf]
    %v7098 = vld [vmem:[#allocation11 + $0x1c] sm:$0xf]
    %v7099 = vld [vmem:[#allocation11 + $0x20] sm:$0xf]
    %v7100 = vld [vmem:[#allocation11 + $0x24] sm:$0xf]
    %v7101 = vld [vmem:[#allocation11 + $0x28] sm:$0xf]
    %v7102 = vld [vmem:[#allocation11 + $0x2c] sm:$0xf]
    %v7103 = vld [vmem:[#allocation11 + $0x30] sm:$0xf]
    %v7104 = vld [vmem:[#allocation11 + $0x34] sm:$0xf]
    %v7105 = vld [vmem:[#allocation11 + $0x38] sm:$0xf]
    %v7106 = vld [vmem:[#allocation11 + $0x3c] sm:$0xf]
    %v7107 = vld [vmem:[#allocation11 + $0x40] sm:$0xf]
    %v7108 = vld [vmem:[#allocation11 + $0x44] sm:$0xf]
    %v7109 = vld [vmem:[#allocation11 + $0x48] sm:$0xf]
    %v7110 = vld [vmem:[#allocation11 + $0x4c] sm:$0xf]
    %v7111 = vld [vmem:[#allocation11 + $0x50] sm:$0xf]
    %v7112 = vld [vmem:[#allocation11 + $0x54] sm:$0xf]
    %v7113 = vld [vmem:[#allocation11 + $0x58] sm:$0xf]
    %v7114 = vld [vmem:[#allocation11 + $0x5c] sm:$0xf]
    %v7115 = vld [vmem:[#allocation11 + $0x60] sm:$0xf]
    %v7116 = vld [vmem:[#allocation11 + $0x64] sm:$0xf]
    %v7117 = vld [vmem:[#allocation11 + $0x68] sm:$0xf]
    %v7118 = vld [vmem:[#allocation11 + $0x6c] sm:$0xf]
    %v7119 = vld [vmem:[#allocation11 + $0x70] sm:$0xf]
    %v7120 = vld [vmem:[#allocation11 + $0x74] sm:$0xf]
    %v7121 = vld [vmem:[#allocation11 + $0x78] sm:$0xf]
    %v7122 = vld [vmem:[#allocation11 + $0x7c] sm:$0xf]
    %v7123 = vld [vmem:[#allocation14 + $0x4] ss:$0 sm:$0xff]
    %v7156 = vunpack.c.l.b16 %v7091
    %v7157 = vunpack.c.l.b16 %v7092
    %v7158 = vunpack.c.l.b16 %v7093
    %v7159 = vunpack.c.l.b16 %v7094
    %v7160 = vunpack.c.l.b16 %v7095
    %v7161 = vunpack.c.l.b16 %v7096
    %v7162 = vunpack.c.l.b16 %v7097
    %v7163 = vunpack.c.l.b16 %v7098
    %v7164 = vunpack.c.l.b16 %v7099
    %v7165 = vunpack.c.l.b16 %v7100
    %v7166 = vunpack.c.l.b16 %v7101
    %v7167 = vunpack.c.l.b16 %v7102
    %v7168 = vunpack.c.l.b16 %v7103
    %v7169 = vunpack.c.l.b16 %v7104
    %v7170 = vunpack.c.l.b16 %v7105
    %v7171 = vunpack.c.l.b16 %v7106
    %v7172 = vunpack.c.l.b16 %v7107
    %v7173 = vunpack.c.l.b16 %v7108
    %v7174 = vunpack.c.l.b16 %v7109
    %v7175 = vunpack.c.l.b16 %v7110
    %v7176 = vunpack.c.l.b16 %v7111
    %v7177 = vunpack.c.l.b16 %v7112
    %v7178 = vunpack.c.l.b16 %v7113
    %v7179 = vunpack.c.l.b16 %v7114
    %v7180 = vunpack.c.l.b16 %v7115
    %v7181 = vunpack.c.l.b16 %v7116
    %v7182 = vunpack.c.l.b16 %v7117
    %v7183 = vunpack.c.l.b16 %v7118
    %v7184 = vunpack.c.l.b16 %v7119
    %v7185 = vunpack.c.l.b16 %v7120
    %v7186 = vunpack.c.l.b16 %v7121
    %v7187 = vunpack.c.l.b16 %v7122
    %v7188 = vpack.c.b16 %v7157, %v7156
    %v7189 = vpack.c.b16 %v7159, %v7158
    %v7190 = vpack.c.b16 %v7161, %v7160
    %v7191 = vpack.c.b16 %v7163, %v7162
    %v7192 = vpack.c.b16 %v7165, %v7164
    %v7193 = vpack.c.b16 %v7167, %v7166
    %v7194 = vpack.c.b16 %v7169, %v7168
    %v7195 = vpack.c.b16 %v7171, %v7170
    %v7196 = vpack.c.b16 %v7173, %v7172
    %v7197 = vpack.c.b16 %v7175, %v7174
    %v7198 = vpack.c.b16 %v7177, %v7176
    %v7199 = vpack.c.b16 %v7179, %v7178
    %v7200 = vpack.c.b16 %v7181, %v7180
    %v7201 = vpack.c.b16 %v7183, %v7182
    %v7202 = vpack.c.b16 %v7185, %v7184
    %v7203 = vpack.c.b16 %v7187, %v7186
    %7220 = vmatpush.bf16.msra.mxu0 %v7195
    %7221 = vmatpush.bf16.msra.mxu0 %v7194
    %7222 = vmatpush.bf16.msra.mxu0 %v7193
    %7223 = vmatpush.bf16.msra.mxu0 %v7192
    %7224 = vmatpush.bf16.msra.mxu0 %v7191
    %7225 = vmatpush.bf16.msra.mxu0 %v7190
    %7226 = vmatpush.bf16.msra.mxu0 %v7189
    %7227 = vmatpush.bf16.msra.mxu0 %v7188
    %7228 = vmatmul.bf16.gmra.mxu0 %v7089
    %v7229 = vpop.f32.mrf.mxu0
    %v7230 = vadd.f32 %v7123, %v7229
    %v7231 = vpop.f32.mrf.mxu0
    %7232 = vdwg.mxu0
    %7233 = vmatpush.bf16.msra.mxu0 %v7203
    %7234 = vmatpush.bf16.msra.mxu0 %v7202
    %7235 = vmatpush.bf16.msra.mxu0 %v7201
    %7236 = vmatpush.bf16.msra.mxu0 %v7200
    %7237 = vmatpush.bf16.msra.mxu0 %v7199
    %7238 = vmatpush.bf16.msra.mxu0 %v7198
    %7239 = vmatpush.bf16.msra.mxu0 %v7197
    %7240 = vmatpush.bf16.msra.mxu0 %v7196
    %7241 = vmatmul.bf16.gmra.mxu0 %v7090
    %v7242 = vpop.f32.mrf.mxu0
    %v7243 = vadd.f32 %v7230, %v7242
    %v7244 = vpop.f32.mrf.mxu0
    %7245 = vdwg.mxu0
    %v7246 = vmax.f32 %v7243, 0.0
    %v7247 = vpack.c.bf16 %v7246, %v7246
    %v7248 = vld [vmem:[%s6] sm:$0xf]
    %v7249 = vld [vmem:[%s6 + $0x4] sm:$0xf]
    %v7250 = vld [vmem:[%s6 + $0x8] sm:$0xf]
    %v7251 = vld [vmem:[%s6 + $0xc] sm:$0xf]
    %v7252 = vld [vmem:[%s6 + $0x10] sm:$0xf]
    %v7253 = vld [vmem:[%s6 + $0x14] sm:$0xf]
    %v7254 = vld [vmem:[%s6 + $0x18] sm:$0xf]
    %v7255 = vld [vmem:[%s6 + $0x1c] sm:$0xf]
    %v7256 = vld [vmem:[%s6 + $0x20] sm:$0xf]
    %v7257 = vld [vmem:[%s6 + $0x24] sm:$0xf]
    %v7258 = vld [vmem:[%s6 + $0x28] sm:$0xf]
    %v7259 = vld [vmem:[%s6 + $0x2c] sm:$0xf]
    %v7260 = vld [vmem:[%s6 + $0x30] sm:$0xf]
    %v7261 = vld [vmem:[%s6 + $0x34] sm:$0xf]
    %v7262 = vld [vmem:[%s6 + $0x38] sm:$0xf]
    %v7263 = vld [vmem:[%s6 + $0x3c] sm:$0xf]
    %v7264 = vld [vmem:[#allocation14 + $0x5] ss:$0 sm:$0xff]
    %v7281 = vunpack.c.l.b16 %v7248
    %v7282 = vunpack.c.l.b16 %v7249
    %v7283 = vunpack.c.l.b16 %v7250
    %v7284 = vunpack.c.l.b16 %v7251
    %v7285 = vunpack.c.l.b16 %v7252
    %v7286 = vunpack.c.l.b16 %v7253
    %v7287 = vunpack.c.l.b16 %v7254
    %v7288 = vunpack.c.l.b16 %v7255
    %v7289 = vunpack.c.l.b16 %v7256
    %v7290 = vunpack.c.l.b16 %v7257
    %v7291 = vunpack.c.l.b16 %v7258
    %v7292 = vunpack.c.l.b16 %v7259
    %v7293 = vunpack.c.l.b16 %v7260
    %v7294 = vunpack.c.l.b16 %v7261
    %v7295 = vunpack.c.l.b16 %v7262
    %v7296 = vunpack.c.l.b16 %v7263
    %v7297 = vpack.c.b16 %v7282, %v7281
    %v7298 = vpack.c.b16 %v7284, %v7283
    %v7299 = vpack.c.b16 %v7286, %v7285
    %v7300 = vpack.c.b16 %v7288, %v7287
    %v7301 = vpack.c.b16 %v7290, %v7289
    %v7302 = vpack.c.b16 %v7292, %v7291
    %v7303 = vpack.c.b16 %v7294, %v7293
    %v7304 = vpack.c.b16 %v7296, %v7295
    %7313 = vmatpush.bf16.msra.mxu0 %v7304
    %7314 = vmatpush.bf16.msra.mxu0 %v7303
    %7315 = vmatpush.bf16.msra.mxu0 %v7302
    %7316 = vmatpush.bf16.msra.mxu0 %v7301
    %7317 = vmatpush.bf16.msra.mxu0 %v7300
    %7318 = vmatpush.bf16.msra.mxu0 %v7299
    %7319 = vmatpush.bf16.msra.mxu0 %v7298
    %7320 = vmatpush.bf16.msra.mxu0 %v7297
    %7321 = vmatmul.bf16.gmra.mxu0 %v7247
    %v7322 = vpop.f32.mrf.mxu0
    %v7323 = vadd.f32 %v7264, %v7322
    %v7324 = vpop.f32.mrf.mxu0
    %7325 = vdwg.mxu0
    %v7326 = vmax.f32 %v7323, 0.0
    %v7327 = vpack.c.bf16 %v7326, %v7326
    %v7328 = vld [vmem:[#allocation13] sm:$0xf]
    %v7329 = vld [vmem:[#allocation13 + $0x4] sm:$0xf]
    %v7330 = vld [vmem:[#allocation13 + $0x8] sm:$0xf]
    %v7331 = vld [vmem:[#allocation13 + $0xc] sm:$0xf]
    %v7332 = vld [vmem:[#allocation13 + $0x10] sm:$0xf]
    %v7333 = vld [vmem:[#allocation13 + $0x14] sm:$0xf]
    %v7334 = vld [vmem:[#allocation13 + $0x18] sm:$0xf]
    %v7335 = vld [vmem:[#allocation13 + $0x1c] sm:$0xf]
    %v7336 = vld [vmem:[#allocation14 + $0x6] ss:$0 sm:$0xff]
    %v7345 = vunpack.c.l.b16 %v7328
    %v7346 = vunpack.c.l.b16 %v7329
    %v7347 = vunpack.c.l.b16 %v7330
    %v7348 = vunpack.c.l.b16 %v7331
    %v7349 = vunpack.c.l.b16 %v7332
    %v7350 = vunpack.c.l.b16 %v7333
    %v7351 = vunpack.c.l.b16 %v7334
    %v7352 = vunpack.c.l.b16 %v7335
    %v7353 = vpack.c.b16 %v7346, %v7345
    %v7354 = vpack.c.b16 %v7348, %v7347
    %v7355 = vpack.c.b16 %v7350, %v7349
    %v7356 = vpack.c.b16 %v7352, %v7351
    %vm7361 = vcmask 523264
    %v7363 = vsel %vm7361, %v7327, 0
    %7365 = vmatpush.bf16.msra.mxu0 0
    %7366 = vmatpush.bf16.msra.mxu0 0
    %7367 = vmatpush.bf16.msra.mxu0 0
    %7368 = vmatpush.bf16.msra.mxu0 0
    %7369 = vmatpush.bf16.msra.mxu0 %v7356
    %7370 = vmatpush.bf16.msra.mxu0 %v7355
    %7371 = vmatpush.bf16.msra.mxu0 %v7354
    %7372 = vmatpush.bf16.msra.mxu0 %v7353
    %7373 = vmatmul.bf16.gmra.mxu0 %v7363
    %v7374 = vpop.f32.mrf.mxu0
    %v7375 = vadd.f32 %v7336, %v7374
    %v7376 = vpop.f32.mrf.mxu0
    %7377 = vdwg.mxu0
    %7378 = vst [vmem:[#allocation16] sm:$0xff] %v7375
    // Predicated region
    $region70: #{tpu_custom_call.1} parent=1 // pred_check
      _
    $region71: #{tpu_custom_call.1} parent=1 // pred_check_branch
      %7380 = sbr.rel (0) target = $region73
    $region72: #{tpu_custom_call.1} parent=1 // pred_region
      %7382 = vsyncadd [#allocation4], 0
      %s7384 = sshll.u32 [#allocation16], 4
      %s7385 = int_to_ptr.vmem [resolvable:$true] %s7384
      %s7386 = sshll.u32 %s9, 4
      %s7387 = int_to_ptr.hbm [resolvable:$true] %s7386
      %7389 = dma.vmem_to_hbm [thread:$0]  %s7385, 128, %s7387, [#allocation4]
    $region73: #{tpu_custom_call.1} parent=1 // pred_fallthru
      _
    // Predicated region
    $region74: #{tpu_custom_call.1} parent=1 // pred_check
      _
    $region75: #{tpu_custom_call.1} parent=1 // pred_check_branch
      %7391 = sbr.rel (0) target = $region77
    $region76: #{tpu_custom_call.1} parent=1 // pred_region
      %7393 = dma.done [#allocation4], 128
    $region77: #{tpu_custom_call.1} parent=1 // pred_fallthru
      _
    %7394 = vsyncpa [#allocation3], 1
    %7395 = vsyncpa [#allocation6], 1
    %7396 = vsyncpa [#allocation9], 1
    %7397 = vsyncpa [#allocation12], 1
    %7398 = vsyncpa [#allocation15], 1
    %7399 = vsyncpa [#allocation4], 1

</llo_original>
